<compile_context>
chip_gen: v6e
topology: v6e:2x2x1
jax: 0.10.0
libtpu: 0.0.40
codegen_flags: <defaults>
</compile_context>

<pallas_src>
import functools

import numpy as np
import jax
import jax.numpy as jnp
from jax.experimental import pallas as pl
from jax.experimental.pallas import tpu as pltpu


F_OUT = 32      # encoder_d output channels (stand-in)
H_T = 64        # encoder_t output channels (stand-in)
K_STK = 32      # stacked-concat scratch rows (19 real + pad)
BJ_OUT = 128    # per-channel output column padding (lane-dense stores)


def _generator_kernel(xc_ref, mc_ref, wexp0_ref, b0_ref, wexp1_ref, b1_ref,
                      wet_ref, bet_ref, wdt_ref, bdt_ref, wsel_ref, res_ref,
                      out_ref, stk_ref):
    """Whole Generator.forward, fused.  Lane axis m = (b*J + j)*32 + f."""
    f32 = jnp.float32

    # encoder_d0 (1x1 conv 3->32 + ReLU): compact frames x pre-folded
    # (coord-weight (x) f-expansion) matrix -> one MXU dot.
    top = jnp.dot(xc_ref[...], wexp0_ref[...], preferred_element_type=f32)
    top = jnp.maximum(top + b0_ref[...], 0.0)                      # (10, M)

    # encoder_d1 on the motion stream (frame diff precomputed on the compact
    # tensor in the wrapper).
    bot = jnp.dot(mc_ref[...], wexp1_ref[...], preferred_element_type=f32)
    bot = jnp.maximum(bot + b1_ref[...], 0.0)                      # (9, M)

    # Implicit channel concat: stage both streams into one (32, M) scratch
    # (gap rows stay zero; the matching weight columns are zero too), then a
    # single merged-K dot for encoder_t.
    stk_ref[...] = jnp.zeros_like(stk_ref)
    stk_ref[pl.ds(0, top.shape[0]), :] = top
    stk_ref[pl.ds(16, bot.shape[0]), :] = bot
    ht = jnp.dot(wet_ref[...], stk_ref[...], preferred_element_type=f32)
    ht = jnp.maximum(ht + bet_ref[...], 0.0)                       # (64, M)

    # decoder_t: 64 -> time on the MXU.
    od = jnp.dot(wdt_ref[...], ht, preferred_element_type=f32) + bdt_ref[...]

    # decoder_d (32 -> 3) + bias + residual folded into one selector matmul
    # whose columns are already the lane-dense (c*128 + bj) output layout.
    out_ref[...] = (jnp.dot(od, wsel_ref[...], preferred_element_type=f32)
                    + res_ref[...])                                # (time, 384)


def init_params(key, time):
    ks = jax.random.split(key, 10)

    def w(k, shape, fan_in):
        return jax.random.normal(k, shape, jnp.float32) / jnp.sqrt(float(fan_in))

    p = {}
    # encoder_d0 stand-in: 3 -> 32 (weights stored transposed: (in, out))
    p["w_e0_t"] = w(ks[0], (3, F_OUT), 3)
    p["b_e0"] = w(ks[1], (1, F_OUT), 3)
    # encoder_d1 stand-in: 3 -> 32
    p["w_e1_t"] = w(ks[2], (3, F_OUT), 3)
    p["b_e1"] = w(ks[3], (1, F_OUT), 3)
    # encoder_t (UNet1) stand-in: 19 -> 64
    p["w_et_t"] = w(ks[4], (19, H_T), 19)
    p["b_et"] = w(ks[5], (1, H_T), 19)
    # decoder_t: Conv2d(64, time, 1)
    p["w_dt_t"] = w(ks[6], (H_T, time), H_T)
    p["b_dt"] = w(ks[7], (1, time), H_T)
    # decoder_d: Conv2d(32, 3, 1)
    p["w_dd_t"] = w(ks[8], (F_OUT, 3), F_OUT)
    p["b_dd"] = w(ks[9], (1, 3), F_OUT)
    return p


def prepare_generator(params, B, J):
    """One-time host-side prep of every params-dependent kernel operand."""
    C, F = 3, F_OUT
    BJ = B * J
    bj_pad = -(-BJ // 4) * 4               # F=32 -> M = bj_pad*32 multiple of 128
    M = bj_pad * F
    K_in = C * bj_pad
    time = int(np.asarray(params["w_dt_t"]).shape[1])
    OC = C * BJ_OUT

    w_e0 = np.asarray(params["w_e0_t"], np.float32)   # (3, 32)
    w_e1 = np.asarray(params["w_e1_t"], np.float32)
    b_e0 = np.asarray(params["b_e0"], np.float32)     # (1, 32)
    b_e1 = np.asarray(params["b_e1"], np.float32)
    w_et = np.asarray(params["w_et_t"], np.float32)   # (19, 64)
    b_et = np.asarray(params["b_et"], np.float32)     # (1, 64)
    w_dt = np.asarray(params["w_dt_t"], np.float32)   # (64, time)
    b_dt = np.asarray(params["b_dt"], np.float32)     # (1, time)
    w_dd = np.asarray(params["w_dd_t"], np.float32)   # (32, 3)
    b_dd = np.asarray(params["b_dd"], np.float32)     # (1, 3)

    # encoder_d 1x1-conv weights folded with the f-expansion:
    #   wexp[c*bj_pad + bj, bj*F + f] = W[c, f]
    wexp0 = np.zeros((K_in, M), np.float32)
    wexp1 = np.zeros((K_in, M), np.float32)
    for c in range(C):
        for bj in range(BJ):
            wexp0[c * bj_pad + bj, bj * F:(bj + 1) * F] = w_e0[c]
            wexp1[c * bj_pad + bj, bj * F:(bj + 1) * F] = w_e1[c]
    b0r = np.tile(b_e0, (1, bj_pad))                  # (1, M)
    b1r = np.tile(b_e1, (1, bj_pad))                  # (1, M)

    # encoder_t weight for the stacked (32, M) scratch: columns 0..9 <- frames
    # of encoder_d0, columns 16..24 <- frames of encoder_d1, pad columns zero.
    wet = np.zeros((H_T, K_STK), np.float32)
    wet[:, 0:10] = w_et[0:10].T
    wet[:, 16:25] = w_et[10:19].T
    bet = b_et.T                                      # (64, 1)

    wdt = w_dt.T                                      # (time, 64)
    bdt = b_dt.T                                      # (time, 1)

    # decoder_d folded into a single selector:
    #   wsel[bj*F + f, c*BJ_OUT + bj] = w_dd[f, c]
    wsel = np.zeros((M, OC), np.float32)
    for bj in range(BJ):
        for c in range(C):
            wsel[bj * F:(bj + 1) * F, c * BJ_OUT + bj] = w_dd[:, c]

    # decoder_d bias pre-arranged in the output-column layout.
    bddr = np.zeros((1, OC), np.float32)
    for c in range(C):
        bddr[0, c * BJ_OUT:(c + 1) * BJ_OUT] = b_dd[0, c]

    consts = tuple(jnp.asarray(a) for a in
                   (wexp0, b0r, wexp1, b1r, wet, bet, wdt, bdt, wsel, bddr))
    dims = dict(C=C, F=F, BJ=BJ, bj_pad=bj_pad, M=M, K_in=K_in,
                time=time, OC=OC)
    return consts, dims


def _forward_impl(inputs, consts, *, dims):
    (wexp0, b0r, wexp1, b1r, wet, bet, wdt, bdt, wsel, bddr) = consts
    B, T, J, C = inputs.shape
    assert T == 10 and C == 3, "Generator.forward implies 10 frames, 3 coords"
    BJ, bj_pad, M = dims["BJ"], dims["bj_pad"], dims["M"]
    time, OC = dims["time"], dims["OC"]

    # Per-call prep: only a few KB of transpose / pad / diff — all heavy
    # layout work lives in the precomputed constants.
    xcb = jnp.transpose(inputs, (3, 1, 0, 2)).reshape(C, T, BJ)
    xcb = jnp.pad(xcb, ((0, 0), (0, 0), (0, bj_pad - BJ)))          # (3,10,bj_pad)
    mcb = xcb[:, 1:, :] - xcb[:, :-1, :]                            # (3, 9,bj_pad)
    xc = jnp.transpose(xcb, (1, 0, 2)).reshape(T, C * bj_pad)       # (10, 156)
    mc = jnp.transpose(mcb, (1, 0, 2)).reshape(T - 1, C * bj_pad)   # (9, 156)

    last = jnp.transpose(inputs[:, T - 1], (2, 0, 1)).reshape(C, BJ)
    lastp = jnp.pad(last, ((0, 0), (0, BJ_OUT - BJ))).reshape(1, OC)
    res = lastp + bddr                                              # (1, OC)

    flops = 2 * (T * xc.shape[1] * M + (T - 1) * mc.shape[1] * M
                 + H_T * K_STK * M + time * H_T * M + time * M * OC)
    bytes_accessed = 4 * (int(xc.size) + int(mc.size) + int(res.size)
                          + time * OC
                          + sum(int(np.prod(c.shape)) for c in consts))

    vmem = pl.BlockSpec(memory_space=pltpu.MemorySpace.VMEM)
    out = pl.pallas_call(
        _generator_kernel,
        out_shape=jax.ShapeDtypeStruct((time, OC), jnp.float32),
        in_specs=[vmem] * 12,
        out_specs=vmem,
        scratch_shapes=[pltpu.VMEM((K_STK, M), jnp.float32)],
        cost_estimate=pl.CostEstimate(flops=flops, transcendentals=0,
                                      bytes_accessed=bytes_accessed),
    )(xc, mc, wexp0, b0r, wexp1, b1r, wet, bet, wdt, bdt, wsel, res)

    # (time, 3*128) -> (B, time, J, 3)
    out = out.reshape(time, C, BJ_OUT)[:, :, :BJ].reshape(time, C, B, J)
    return jnp.transpose(out, (2, 0, 3, 1))


def build_generator_forward(params, B, J):
    """Returns a jitted inputs->(B,time,J,3) forward with consts prebuilt."""
    consts, dims = prepare_generator(params, B, J)
    fwd = jax.jit(functools.partial(_forward_impl, dims=dims))
    return lambda inputs: fwd(inputs, consts)


def reference_forward(inputs, p, time):
    """Pure-jnp reference mirroring the PyTorch semantics (regression gate)."""
    B, T, J, C = inputs.shape
    last_input = jnp.broadcast_to(inputs[:, 9][:, None], (B, time, J, C))
    h0 = jax.nn.relu(jnp.einsum("btjc,cn->btjn", inputs, p["w_e0_t"]) + p["b_e0"][0])
    motion = inputs[:, 1:] - inputs[:, :-1]
    h1 = jax.nn.relu(jnp.einsum("btjc,cn->btjn", motion, p["w_e1_t"]) + p["b_e1"][0])
    out1 = jnp.concatenate([h0, h1], axis=1)                          # (B, 19, J, 32)
    h_t = jax.nn.relu(jnp.einsum("bkjf,ko->bojf", out1, p["w_et_t"])
                      + p["b_et"][0][None, :, None, None])            # (B, 64, J, 32)
    od = (jnp.einsum("bojf,ot->btjf", h_t, p["w_dt_t"])
          + p["b_dt"][0][None, :, None, None])                        # (B, time, J, 32)
    outd = jnp.einsum("btjf,fc->btjc", od, p["w_dd_t"]) + p["b_dd"][0]
    return outd + last_input


if __name__ == "__main__":
    key = jax.random.PRNGKey(0)
    k_in, k_par = jax.random.split(key)

    B, T, J, C = 2, 10, 25, 3          # (batch, frames, joints, coords)
    ch_out = 8                          # Generator(..., ch_out) -> self.time
    inputs = jax.random.normal(k_in, (B, T, J, C), jnp.float32)
    params = init_params(k_par, ch_out)

    fwd = build_generator_forward(params, B, J)
    out = jax.block_until_ready(fwd(inputs))

    ref = reference_forward(inputs, params, ch_out)
    assert out.shape == (B, ch_out, J, C)
    assert jnp.max(jnp.abs(out - ref)) < 1e-3, "Pallas kernel mismatch vs reference"

    print("KERNEL_OK")
</pallas_src>

<mosaic_0001>
module attributes {stable_mosaic.version = 11 : i64} {
  func.func @_generator_kernel(%arg0: memref<10x156xf32, #tpu.memory_space<vmem>>, %arg1: memref<9x156xf32, #tpu.memory_space<vmem>>, %arg2: memref<156x1664xf32, #tpu.memory_space<vmem>>, %arg3: memref<1x1664xf32, #tpu.memory_space<vmem>>, %arg4: memref<156x1664xf32, #tpu.memory_space<vmem>>, %arg5: memref<1x1664xf32, #tpu.memory_space<vmem>>, %arg6: memref<64x32xf32, #tpu.memory_space<vmem>>, %arg7: memref<64x1xf32, #tpu.memory_space<vmem>>, %arg8: memref<8x64xf32, #tpu.memory_space<vmem>>, %arg9: memref<8x1xf32, #tpu.memory_space<vmem>>, %arg10: memref<1664x384xf32, #tpu.memory_space<vmem>>, %arg11: memref<1x384xf32, #tpu.memory_space<vmem>>, %arg12: memref<8x384xf32, #tpu.memory_space<vmem>>, %arg13: memref<32x1664xf32, #tpu.memory_space<vmem>>) attributes {dimension_semantics = [], scalar_prefetch = 0 : i64, scratch_operands = 1 : i64, tpu.core_type = #tpu.core_type<tc>} {
    %c0 = arith.constant 0 : index
    %c0_0 = arith.constant 0 : index
    %0 = vector.load %arg0[%c0, %c0_0] : memref<10x156xf32, #tpu.memory_space<vmem>>, vector<10x156xf32>
    %c0_1 = arith.constant 0 : index
    %c0_2 = arith.constant 0 : index
    %1 = vector.load %arg2[%c0_1, %c0_2] : memref<156x1664xf32, #tpu.memory_space<vmem>>, vector<156x1664xf32>
    %cst = arith.constant dense<0.000000e+00> : vector<10x1664xf32>
    %2 = tpu.matmul %0, %1, %cst {dimension_numbers = #tpu.dot_dimension_numbers<[1], [0], [0], [1], [0, 0, 1, 1], [], []>} : vector<10x156xf32>, vector<156x1664xf32>, vector<10x1664xf32> -> vector<10x1664xf32>
    %c0_3 = arith.constant 0 : index
    %c0_4 = arith.constant 0 : index
    %3 = vector.load %arg3[%c0_3, %c0_4] : memref<1x1664xf32, #tpu.memory_space<vmem>>, vector<1x1664xf32>
    %4 = vector.broadcast %3 : vector<1x1664xf32> to vector<10x1664xf32>
    %5 = arith.addf %2, %4 : vector<10x1664xf32>
    %cst_5 = arith.constant 0.000000e+00 : f32
    %6 = vector.broadcast %cst_5 : f32 to vector<10x1664xf32>
    %7 = arith.maximumf %5, %6 : vector<10x1664xf32>
    %c0_6 = arith.constant 0 : index
    %c0_7 = arith.constant 0 : index
    %8 = vector.load %arg1[%c0_6, %c0_7] : memref<9x156xf32, #tpu.memory_space<vmem>>, vector<9x156xf32>
    %c0_8 = arith.constant 0 : index
    %c0_9 = arith.constant 0 : index
    %9 = vector.load %arg4[%c0_8, %c0_9] : memref<156x1664xf32, #tpu.memory_space<vmem>>, vector<156x1664xf32>
    %cst_10 = arith.constant dense<0.000000e+00> : vector<9x1664xf32>
    %10 = tpu.matmul %8, %9, %cst_10 {dimension_numbers = #tpu.dot_dimension_numbers<[1], [0], [0], [1], [0, 0, 1, 1], [], []>} : vector<9x156xf32>, vector<156x1664xf32>, vector<9x1664xf32> -> vector<9x1664xf32>
    %c0_11 = arith.constant 0 : index
    %c0_12 = arith.constant 0 : index
    %11 = vector.load %arg5[%c0_11, %c0_12] : memref<1x1664xf32, #tpu.memory_space<vmem>>, vector<1x1664xf32>
    %12 = vector.broadcast %11 : vector<1x1664xf32> to vector<9x1664xf32>
    %13 = arith.addf %10, %12 : vector<9x1664xf32>
    %cst_13 = arith.constant 0.000000e+00 : f32
    %14 = vector.broadcast %cst_13 : f32 to vector<9x1664xf32>
    %15 = arith.maximumf %13, %14 : vector<9x1664xf32>
    %cst_14 = arith.constant 0.000000e+00 : f32
    %16 = vector.broadcast %cst_14 : f32 to vector<32x1664xf32>
    %c0_15 = arith.constant 0 : index
    %c0_16 = arith.constant 0 : index
    %17 = vector.load %arg13[%c0_15, %c0_16] : memref<32x1664xf32, #tpu.memory_space<vmem>>, vector<32x1664xf32>
    tpu.vector_store %arg13[%c0_15, %c0_16], %16 {strides = array<i32>} : memref<32x1664xf32, #tpu.memory_space<vmem>>, vector<32x1664xf32>,
    %c0_17 = arith.constant 0 : index
    %c0_18 = arith.constant 0 : index
    %18 = vector.load %arg13[%c0_17, %c0_18] : memref<32x1664xf32, #tpu.memory_space<vmem>>, vector<10x1664xf32>
    tpu.vector_store %arg13[%c0_17, %c0_18], %7 {strides = array<i32>} : memref<32x1664xf32, #tpu.memory_space<vmem>>, vector<10x1664xf32>,
    %c16 = arith.constant 16 : index
    %c0_19 = arith.constant 0 : index
    %19 = vector.load %arg13[%c16, %c0_19] : memref<32x1664xf32, #tpu.memory_space<vmem>>, vector<9x1664xf32>
    tpu.vector_store %arg13[%c16, %c0_19], %15 {strides = array<i32>} : memref<32x1664xf32, #tpu.memory_space<vmem>>, vector<9x1664xf32>,
    %c0_20 = arith.constant 0 : index
    %c0_21 = arith.constant 0 : index
    %20 = vector.load %arg6[%c0_20, %c0_21] : memref<64x32xf32, #tpu.memory_space<vmem>>, vector<64x32xf32>
    %c0_22 = arith.constant 0 : index
    %c0_23 = arith.constant 0 : index
    %21 = vector.load %arg13[%c0_22, %c0_23] : memref<32x1664xf32, #tpu.memory_space<vmem>>, vector<32x1664xf32>
    %cst_24 = arith.constant dense<0.000000e+00> : vector<64x1664xf32>
    %22 = tpu.matmul %20, %21, %cst_24 {dimension_numbers = #tpu.dot_dimension_numbers<[1], [0], [0], [1], [0, 0, 1, 1], [], []>} : vector<64x32xf32>, vector<32x1664xf32>, vector<64x1664xf32> -> vector<64x1664xf32>
    %c0_25 = arith.constant 0 : index
    %c0_26 = arith.constant 0 : index
    %23 = vector.load %arg7[%c0_25, %c0_26] : memref<64x1xf32, #tpu.memory_space<vmem>>, vector<64x1xf32>
    %24 = vector.broadcast %23 : vector<64x1xf32> to vector<64x1664xf32>
    %25 = arith.addf %22, %24 : vector<64x1664xf32>
    %cst_27 = arith.constant 0.000000e+00 : f32
    %26 = vector.broadcast %cst_27 : f32 to vector<64x1664xf32>
    %27 = arith.maximumf %25, %26 : vector<64x1664xf32>
    %c0_28 = arith.constant 0 : index
    %c0_29 = arith.constant 0 : index
    %28 = vector.load %arg8[%c0_28, %c0_29] : memref<8x64xf32, #tpu.memory_space<vmem>>, vector<8x64xf32>
    %cst_30 = arith.constant dense<0.000000e+00> : vector<8x1664xf32>
    %29 = tpu.matmul %28, %27, %cst_30 {dimension_numbers = #tpu.dot_dimension_numbers<[1], [0], [0], [1], [0, 0, 1, 1], [], []>} : vector<8x64xf32>, vector<64x1664xf32>, vector<8x1664xf32> -> vector<8x1664xf32>
    %c0_31 = arith.constant 0 : index
    %c0_32 = arith.constant 0 : index
    %30 = vector.load %arg9[%c0_31, %c0_32] : memref<8x1xf32, #tpu.memory_space<vmem>>, vector<8x1xf32>
    %31 = vector.broadcast %30 : vector<8x1xf32> to vector<8x1664xf32>
    %32 = arith.addf %29, %31 : vector<8x1664xf32>
    %c0_33 = arith.constant 0 : index
    %c0_34 = arith.constant 0 : index
    %33 = vector.load %arg10[%c0_33, %c0_34] : memref<1664x384xf32, #tpu.memory_space<vmem>>, vector<1664x384xf32>
    %cst_35 = arith.constant dense<0.000000e+00> : vector<8x384xf32>
    %34 = tpu.matmul %32, %33, %cst_35 {dimension_numbers = #tpu.dot_dimension_numbers<[1], [0], [0], [1], [0, 0, 1, 1], [], []>} : vector<8x1664xf32>, vector<1664x384xf32>, vector<8x384xf32> -> vector<8x384xf32>
    %c0_36 = arith.constant 0 : index
    %c0_37 = arith.constant 0 : index
    %35 = vector.load %arg11[%c0_36, %c0_37] : memref<1x384xf32, #tpu.memory_space<vmem>>, vector<1x384xf32>
    %36 = vector.broadcast %35 : vector<1x384xf32> to vector<8x384xf32>
    %37 = arith.addf %34, %36 : vector<8x384xf32>
    %c0_38 = arith.constant 0 : index
    %c0_39 = arith.constant 0 : index
    %38 = vector.load %arg12[%c0_38, %c0_39] : memref<8x384xf32, #tpu.memory_space<vmem>>, vector<8x384xf32>
    tpu.vector_store %arg12[%c0_38, %c0_39], %37 {strides = array<i32>} : memref<8x384xf32, #tpu.memory_space<vmem>>, vector<8x384xf32>,
    return
  }
}

</mosaic_0001>

<llo_original>
// kernel: _forward_impl.1
$region0: #{_forward_impl.1}
  #allocation0 [shape = 'u32[]', space=smem, size = 0x4, offset = 0x4, fixed_abs, tag = 'smem constant byte address 0x4 - core index']
  #allocation1 [shape = 'u32[144,128]{1,0:T(1,128)}', space=vmem, size = 0x12000, scoped, tag = 'internal scratch']
  #allocation2 [shape = 'f32[32,1664]{1,0:T(8,128)}', space=vmem, size = 0x34000, scoped, tag = 'scratch operand']
  %s0 = inlined_call_operand.vmem [shape: f32[10,156], index: 0, kind: input, shape index: {}]
  %s1 = inlined_call_operand.vmem [shape: f32[9,156], index: 1, kind: input, shape index: {}]
  %s2 = inlined_call_operand.hbm [shape: f32[156,1664], index: 2, kind: input, shape index: {}]
  %s3 = inlined_call_operand.hbm [shape: f32[1,1664], index: 3, kind: input, shape index: {}]
  %s4 = inlined_call_operand.hbm [shape: f32[156,1664], index: 4, kind: input, shape index: {}]
  %s5 = inlined_call_operand.hbm [shape: f32[1,1664], index: 5, kind: input, shape index: {}]
  %s6 = inlined_call_operand.vmem [shape: f32[64,32], index: 6, kind: input, shape index: {}]
  %s7 = inlined_call_operand.vmem [shape: f32[64,1], index: 7, kind: input, shape index: {}]
  %s8 = inlined_call_operand.hbm [shape: f32[8,64], index: 8, kind: input, shape index: {}]
  %s9 = inlined_call_operand.vmem [shape: f32[8,1], index: 9, kind: input, shape index: {}]
  %s10 = inlined_call_operand.hbm [shape: f32[1664,384], index: 10, kind: input, shape index: {}]
  %s11 = inlined_call_operand.vmem [shape: f32[1,384], index: 11, kind: input, shape index: {}]
  %s12 = inlined_call_operand.vmem [shape: f32[8,384], index: 12, kind: output, shape index: {}]
  %s13 = sld [smem:[#allocation0]]
  $region82: #{_forward_impl.1} parent=0
    _
  %s15 = ssub.s32 1, %s13
  %s16 = scalar_select 0, %s15, %s13
  $region1: #{_forward_impl.1} parent=0
    #allocation3 [shape = 'u8[1064960]{0}', space=vmem, size = 0x104000, scoped, tag = 'input window, operand 2, single buffered']
    #allocation4 [shape = 's32[1]{0}', space=sflag, size = 0x4, scoped, tag = 'scoped memory for _forward_impl.1']
    #allocation5 [shape = 'u8[6656]{0}', space=vmem, size = 0x1c00, scoped, tag = 'input window, operand 3, single buffered']
    #allocation6 [shape = 's32[1]{0}', space=sflag, size = 0x4, scoped, tag = 'scoped memory for _forward_impl.1']
    #allocation7 [shape = 'u8[1064960]{0}', space=vmem, size = 0x104000, scoped, tag = 'input window, operand 4, single buffered']
    #allocation8 [shape = 'u8[6656]{0}', space=vmem, size = 0x1c00, scoped, tag = 'input window, operand 5, single buffered']
    #allocation9 [shape = 's32[1]{0}', space=sflag, size = 0x4, scoped, tag = 'scoped memory for _forward_impl.1']
    #allocation10 [shape = 'u8[4096]{0}', space=vmem, size = 0x1000, scoped, tag = 'input window, operand 8, single buffered']
    #allocation11 [shape = 'u8[2555904]{0}', space=vmem, size = 0x270000, scoped, tag = 'input window, operand 10, single buffered']
    #allocation12 [shape = 's32[1]{0}', space=sflag, size = 0x4, scoped, tag = 'scoped memory for _forward_impl.1']
    %17 = vsyncpa [#allocation4], 0
    %18 = vsyncpa [#allocation6], 0
    %19 = vsyncpa [#allocation9], 0
    %20 = vsyncpa [#allocation12], 0
    // Predicated region
    $region2: #{_forward_impl.1} parent=1 // pred_check
      _
    $region3: #{_forward_impl.1} parent=1 // pred_check_branch
      %22 = sbr.rel (0) target = $region5
    $region4: #{_forward_impl.1} parent=1 // pred_region
      _
    $region5: #{_forward_impl.1} parent=1 // pred_fallthru
      _
    // Predicated region
    $region6: #{_forward_impl.1} parent=1 // pred_check
      _
    $region7: #{_forward_impl.1} parent=1 // pred_check_branch
      %24 = sbr.rel (0) target = $region9
    $region8: #{_forward_impl.1} parent=1 // pred_region
      _
    $region9: #{_forward_impl.1} parent=1 // pred_fallthru
      _
    // Predicated region
    $region10: #{_forward_impl.1} parent=1 // pred_check
      _
    $region11: #{_forward_impl.1} parent=1 // pred_check_branch
      %26 = sbr.rel (0) target = $region13
    $region12: #{_forward_impl.1} parent=1 // pred_region
      %s28 = ssub.s32 33280, 33280
      %29 = vsyncadd [#allocation4], %s28
      %s30 = sshll.u32 [#allocation3], 4
      %s31 = int_to_ptr.vmem [resolvable:$true] %s30
      %36 = dma.hbm_to_vmem [thread:$0]  %s2, 33280, %s31, [#allocation4], 1664, 1664, 104
    $region13: #{_forward_impl.1} parent=1 // pred_fallthru
      _
    // Predicated region
    $region14: #{_forward_impl.1} parent=1 // pred_check
      _
    $region15: #{_forward_impl.1} parent=1 // pred_check_branch
      %38 = sbr.rel (0) target = $region17
    $region16: #{_forward_impl.1} parent=1 // pred_region
      %s40 = ssub.s32 208, 208
      %41 = vsyncadd [#allocation6], %s40
      %s43 = sshll.u32 [#allocation5], 4
      %s44 = int_to_ptr.vmem [resolvable:$true] %s43
      %46 = dma.hbm_to_vmem [thread:$0]  %s3, 208, %s44, [#allocation6]
    $region17: #{_forward_impl.1} parent=1 // pred_fallthru
      _
    // Predicated region
    $region18: #{_forward_impl.1} parent=1 // pred_check
      _
    $region19: #{_forward_impl.1} parent=1 // pred_check_branch
      %48 = sbr.rel (0) target = $region21
    $region20: #{_forward_impl.1} parent=1 // pred_region
      %s50 = ssub.s32 33280, 33280
      %51 = vsyncadd [#allocation6], %s50
      %s52 = sshll.u32 [#allocation7], 4
      %s53 = int_to_ptr.vmem [resolvable:$true] %s52
      %58 = dma.hbm_to_vmem [thread:$0]  %s4, 33280, %s53, [#allocation6], 1664, 1664, 104
    $region21: #{_forward_impl.1} parent=1 // pred_fallthru
      _
    // Predicated region
    $region22: #{_forward_impl.1} parent=1 // pred_check
      _
    $region23: #{_forward_impl.1} parent=1 // pred_check_branch
      %60 = sbr.rel (0) target = $region25
    $region24: #{_forward_impl.1} parent=1 // pred_region
      %s62 = ssub.s32 208, 208
      %63 = vsyncadd [#allocation9], %s62
      %s65 = sshll.u32 [#allocation8], 4
      %s66 = int_to_ptr.vmem [resolvable:$true] %s65
      %68 = dma.hbm_to_vmem [thread:$0]  %s5, 208, %s66, [#allocation9]
    $region25: #{_forward_impl.1} parent=1 // pred_fallthru
      _
    // Predicated region
    $region26: #{_forward_impl.1} parent=1 // pred_check
      _
    $region27: #{_forward_impl.1} parent=1 // pred_check_branch
      %70 = sbr.rel (0) target = $region29
    $region28: #{_forward_impl.1} parent=1 // pred_region
      _
    $region29: #{_forward_impl.1} parent=1 // pred_fallthru
      _
    // Predicated region
    $region30: #{_forward_impl.1} parent=1 // pred_check
      _
    $region31: #{_forward_impl.1} parent=1 // pred_check_branch
      %72 = sbr.rel (0) target = $region33
    $region32: #{_forward_impl.1} parent=1 // pred_region
      _
    $region33: #{_forward_impl.1} parent=1 // pred_fallthru
      _
    // Predicated region
    $region34: #{_forward_impl.1} parent=1 // pred_check
      _
    $region35: #{_forward_impl.1} parent=1 // pred_check_branch
      %74 = sbr.rel (0) target = $region37
    $region36: #{_forward_impl.1} parent=1 // pred_region
      %s76 = ssub.s32 128, 128
      %77 = vsyncadd [#allocation9], %s76
      %s79 = sshll.u32 [#allocation10], 4
      %s80 = int_to_ptr.vmem [resolvable:$true] %s79
      %82 = dma.hbm_to_vmem [thread:$0]  %s8, 128, %s80, [#allocation9]
    $region37: #{_forward_impl.1} parent=1 // pred_fallthru
      _
    // Predicated region
    $region38: #{_forward_impl.1} parent=1 // pred_check
      _
    $region39: #{_forward_impl.1} parent=1 // pred_check_branch
      %84 = sbr.rel (0) target = $region41
    $region40: #{_forward_impl.1} parent=1 // pred_region
      _
    $region41: #{_forward_impl.1} parent=1 // pred_fallthru
      _
    // Predicated region
    $region42: #{_forward_impl.1} parent=1 // pred_check
      _
    $region43: #{_forward_impl.1} parent=1 // pred_check_branch
      %86 = sbr.rel (0) target = $region45
    $region44: #{_forward_impl.1} parent=1 // pred_region
      %s88 = ssub.s32 79872, 79872
      %89 = vsyncadd [#allocation12], %s88
      %s90 = sshll.u32 [#allocation11], 4
      %s91 = int_to_ptr.vmem [resolvable:$true] %s90
      %96 = dma.hbm_to_vmem [thread:$0]  %s10, 79872, %s91, [#allocation12], 384, 384, 24
    $region45: #{_forward_impl.1} parent=1 // pred_fallthru
      _
    // Predicated region
    $region46: #{_forward_impl.1} parent=1 // pred_check
      _
    $region47: #{_forward_impl.1} parent=1 // pred_check_branch
      %98 = sbr.rel (0) target = $region49
    $region48: #{_forward_impl.1} parent=1 // pred_region
      _
    $region49: #{_forward_impl.1} parent=1 // pred_fallthru
      _
    // Predicated region
    $region50: #{_forward_impl.1} parent=1 // pred_check
      _
    $region51: #{_forward_impl.1} parent=1 // pred_check_branch
      %100 = sbr.rel (0) target = $region53
    $region52: #{_forward_impl.1} parent=1 // pred_region
      %101 = dma.done [#allocation4], 33280
    $region53: #{_forward_impl.1} parent=1 // pred_fallthru
      _
    // Predicated region
    $region54: #{_forward_impl.1} parent=1 // pred_check
      _
    $region55: #{_forward_impl.1} parent=1 // pred_check_branch
      %103 = sbr.rel (0) target = $region57
    $region56: #{_forward_impl.1} parent=1 // pred_region
      %104 = dma.done [#allocation6], 208
    $region57: #{_forward_impl.1} parent=1 // pred_fallthru
      _
    // Predicated region
    $region58: #{_forward_impl.1} parent=1 // pred_check
      _
    $region59: #{_forward_impl.1} parent=1 // pred_check_branch
      %106 = sbr.rel (0) target = $region61
    $region60: #{_forward_impl.1} parent=1 // pred_region
      %107 = dma.done [#allocation6], 33280
    $region61: #{_forward_impl.1} parent=1 // pred_fallthru
      _
    // Predicated region
    $region62: #{_forward_impl.1} parent=1 // pred_check
      _
    $region63: #{_forward_impl.1} parent=1 // pred_check_branch
      %109 = sbr.rel (0) target = $region65
    $region64: #{_forward_impl.1} parent=1 // pred_region
      %110 = dma.done [#allocation9], 208
    $region65: #{_forward_impl.1} parent=1 // pred_fallthru
      _
    // Predicated region
    $region66: #{_forward_impl.1} parent=1 // pred_check
      _
    $region67: #{_forward_impl.1} parent=1 // pred_check_branch
      %112 = sbr.rel (0) target = $region69
    $region68: #{_forward_impl.1} parent=1 // pred_region
      %113 = dma.done [#allocation9], 128
    $region69: #{_forward_impl.1} parent=1 // pred_fallthru
      _
    // Predicated region
    $region70: #{_forward_impl.1} parent=1 // pred_check
      _
    $region71: #{_forward_impl.1} parent=1 // pred_check_branch
      %115 = sbr.rel (0) target = $region73
    $region72: #{_forward_impl.1} parent=1 // pred_region
      %116 = dma.done [#allocation12], 79872
    $region73: #{_forward_impl.1} parent=1 // pred_fallthru
      _
    %v117 = vld [vmem:[%s0] sm:$0xff]
    %v118 = vld [vmem:[%s0 + $0x8] sm:$0xff]
    %v119 = vld [vmem:[%s0 + $0x10] sm:$0x3]
    %v120 = vld [vmem:[%s0 + $0x18] sm:$0x3]
    %v121 = vld [vmem:[#allocation3] sm:$0xff]
    %v122 = vld [vmem:[#allocation3 + $0x8] sm:$0xff]
    %v123 = vld [vmem:[#allocation3 + $0x10] sm:$0xff]
    %v124 = vld [vmem:[#allocation3 + $0x18] sm:$0xff]
    %v125 = vld [vmem:[#allocation3 + $0x20] sm:$0xff]
    %v126 = vld [vmem:[#allocation3 + $0x28] sm:$0xff]
    %v127 = vld [vmem:[#allocation3 + $0x30] sm:$0xff]
    %v128 = vld [vmem:[#allocation3 + $0x38] sm:$0xff]
    %v129 = vld [vmem:[#allocation3 + $0x40] sm:$0xff]
    %v130 = vld [vmem:[#allocation3 + $0x48] sm:$0xff]
    %v131 = vld [vmem:[#allocation3 + $0x50] sm:$0xff]
    %v132 = vld [vmem:[#allocation3 + $0x58] sm:$0xff]
    %v133 = vld [vmem:[#allocation3 + $0x60] sm:$0xff]
    %v134 = vld [vmem:[#allocation3 + $0x68] sm:$0xff]
    %v135 = vld [vmem:[#allocation3 + $0x70] sm:$0xff]
    %v136 = vld [vmem:[#allocation3 + $0x78] sm:$0xff]
    %v137 = vld [vmem:[#allocation3 + $0x80] sm:$0xff]
    %v138 = vld [vmem:[#allocation3 + $0x88] sm:$0xff]
    %v139 = vld [vmem:[#allocation3 + $0x90] sm:$0xff]
    %v140 = vld [vmem:[#allocation3 + $0x98] sm:$0xff]
    %v141 = vld [vmem:[#allocation3 + $0xa0] sm:$0xff]
    %v142 = vld [vmem:[#allocation3 + $0xa8] sm:$0xff]
    %v143 = vld [vmem:[#allocation3 + $0xb0] sm:$0xff]
    %v144 = vld [vmem:[#allocation3 + $0xb8] sm:$0xff]
    %v145 = vld [vmem:[#allocation3 + $0xc0] sm:$0xff]
    %v146 = vld [vmem:[#allocation3 + $0xc8] sm:$0xff]
    %v147 = vld [vmem:[#allocation3 + $0xd0] sm:$0xff]
    %v148 = vld [vmem:[#allocation3 + $0xd8] sm:$0xff]
    %v149 = vld [vmem:[#allocation3 + $0xe0] sm:$0xff]
    %v150 = vld [vmem:[#allocation3 + $0xe8] sm:$0xff]
    %v151 = vld [vmem:[#allocation3 + $0xf0] sm:$0xff]
    %v152 = vld [vmem:[#allocation3 + $0xf8] sm:$0xff]
    %v153 = vld [vmem:[#allocation3 + $0x100] sm:$0xff]
    %v154 = vld [vmem:[#allocation3 + $0x108] sm:$0xff]
    %v155 = vld [vmem:[#allocation3 + $0x110] sm:$0xff]
    %v156 = vld [vmem:[#allocation3 + $0x118] sm:$0xff]
    %v157 = vld [vmem:[#allocation3 + $0x120] sm:$0xff]
    %v158 = vld [vmem:[#allocation3 + $0x128] sm:$0xff]
    %v159 = vld [vmem:[#allocation3 + $0x130] sm:$0xff]
    %v160 = vld [vmem:[#allocation3 + $0x138] sm:$0xff]
    %v161 = vld [vmem:[#allocation3 + $0x140] sm:$0xff]
    %v162 = vld [vmem:[#allocation3 + $0x148] sm:$0xff]
    %v163 = vld [vmem:[#allocation3 + $0x150] sm:$0xff]
    %v164 = vld [vmem:[#allocation3 + $0x158] sm:$0xff]
    %v165 = vld [vmem:[#allocation3 + $0x160] sm:$0xff]
    %v166 = vld [vmem:[#allocation3 + $0x168] sm:$0xff]
    %v167 = vld [vmem:[#allocation3 + $0x170] sm:$0xff]
    %v168 = vld [vmem:[#allocation3 + $0x178] sm:$0xff]
    %v169 = vld [vmem:[#allocation3 + $0x180] sm:$0xff]
    %v170 = vld [vmem:[#allocation3 + $0x188] sm:$0xff]
    %v171 = vld [vmem:[#allocation3 + $0x190] sm:$0xff]
    %v172 = vld [vmem:[#allocation3 + $0x198] sm:$0xff]
    %v173 = vld [vmem:[#allocation3 + $0x1a0] sm:$0xff]
    %v174 = vld [vmem:[#allocation3 + $0x1a8] sm:$0xff]
    %v175 = vld [vmem:[#allocation3 + $0x1b0] sm:$0xff]
    %v176 = vld [vmem:[#allocation3 + $0x1b8] sm:$0xff]
    %v177 = vld [vmem:[#allocation3 + $0x1c0] sm:$0xff]
    %v178 = vld [vmem:[#allocation3 + $0x1c8] sm:$0xff]
    %v179 = vld [vmem:[#allocation3 + $0x1d0] sm:$0xff]
    %v180 = vld [vmem:[#allocation3 + $0x1d8] sm:$0xff]
    %v181 = vld [vmem:[#allocation3 + $0x1e0] sm:$0xff]
    %v182 = vld [vmem:[#allocation3 + $0x1e8] sm:$0xff]
    %v183 = vld [vmem:[#allocation3 + $0x1f0] sm:$0xff]
    %v184 = vld [vmem:[#allocation3 + $0x1f8] sm:$0xff]
    %v185 = vld [vmem:[#allocation3 + $0x200] sm:$0xff]
    %v186 = vld [vmem:[#allocation3 + $0x208] sm:$0xff]
    %v187 = vld [vmem:[#allocation3 + $0x210] sm:$0xff]
    %v188 = vld [vmem:[#allocation3 + $0x218] sm:$0xff]
    %v189 = vld [vmem:[#allocation3 + $0x220] sm:$0xff]
    %v190 = vld [vmem:[#allocation3 + $0x228] sm:$0xff]
    %v191 = vld [vmem:[#allocation3 + $0x230] sm:$0xff]
    %v192 = vld [vmem:[#allocation3 + $0x238] sm:$0xff]
    %v193 = vld [vmem:[#allocation3 + $0x240] sm:$0xff]
    %v194 = vld [vmem:[#allocation3 + $0x248] sm:$0xff]
    %v195 = vld [vmem:[#allocation3 + $0x250] sm:$0xff]
    %v196 = vld [vmem:[#allocation3 + $0x258] sm:$0xff]
    %v197 = vld [vmem:[#allocation3 + $0x260] sm:$0xff]
    %v198 = vld [vmem:[#allocation3 + $0x268] sm:$0xff]
    %v199 = vld [vmem:[#allocation3 + $0x270] sm:$0xff]
    %v200 = vld [vmem:[#allocation3 + $0x278] sm:$0xff]
    %v201 = vld [vmem:[#allocation3 + $0x280] sm:$0xff]
    %v202 = vld [vmem:[#allocation3 + $0x288] sm:$0xff]
    %v203 = vld [vmem:[#allocation3 + $0x290] sm:$0xff]
    %v204 = vld [vmem:[#allocation3 + $0x298] sm:$0xff]
    %v205 = vld [vmem:[#allocation3 + $0x2a0] sm:$0xff]
    %v206 = vld [vmem:[#allocation3 + $0x2a8] sm:$0xff]
    %v207 = vld [vmem:[#allocation3 + $0x2b0] sm:$0xff]
    %v208 = vld [vmem:[#allocation3 + $0x2b8] sm:$0xff]
    %v209 = vld [vmem:[#allocation3 + $0x2c0] sm:$0xff]
    %v210 = vld [vmem:[#allocation3 + $0x2c8] sm:$0xff]
    %v211 = vld [vmem:[#allocation3 + $0x2d0] sm:$0xff]
    %v212 = vld [vmem:[#allocation3 + $0x2d8] sm:$0xff]
    %v213 = vld [vmem:[#allocation3 + $0x2e0] sm:$0xff]
    %v214 = vld [vmem:[#allocation3 + $0x2e8] sm:$0xff]
    %v215 = vld [vmem:[#allocation3 + $0x2f0] sm:$0xff]
    %v216 = vld [vmem:[#allocation3 + $0x2f8] sm:$0xff]
    %v217 = vld [vmem:[#allocation3 + $0x300] sm:$0xff]
    %v218 = vld [vmem:[#allocation3 + $0x308] sm:$0xff]
    %v219 = vld [vmem:[#allocation3 + $0x310] sm:$0xff]
    %v220 = vld [vmem:[#allocation3 + $0x318] sm:$0xff]
    %v221 = vld [vmem:[#allocation3 + $0x320] sm:$0xff]
    %v222 = vld [vmem:[#allocation3 + $0x328] sm:$0xff]
    %v223 = vld [vmem:[#allocation3 + $0x330] sm:$0xff]
    %v224 = vld [vmem:[#allocation3 + $0x338] sm:$0xff]
    %v225 = vld [vmem:[#allocation3 + $0x340] sm:$0xff]
    %v226 = vld [vmem:[#allocation3 + $0x348] sm:$0xff]
    %v227 = vld [vmem:[#allocation3 + $0x350] sm:$0xff]
    %v228 = vld [vmem:[#allocation3 + $0x358] sm:$0xff]
    %v229 = vld [vmem:[#allocation3 + $0x360] sm:$0xff]
    %v230 = vld [vmem:[#allocation3 + $0x368] sm:$0xff]
    %v231 = vld [vmem:[#allocation3 + $0x370] sm:$0xff]
    %v232 = vld [vmem:[#allocation3 + $0x378] sm:$0xff]
    %v233 = vld [vmem:[#allocation3 + $0x380] sm:$0xff]
    %v234 = vld [vmem:[#allocation3 + $0x388] sm:$0xff]
    %v235 = vld [vmem:[#allocation3 + $0x390] sm:$0xff]
    %v236 = vld [vmem:[#allocation3 + $0x398] sm:$0xff]
    %v237 = vld [vmem:[#allocation3 + $0x3a0] sm:$0xff]
    %v238 = vld [vmem:[#allocation3 + $0x3a8] sm:$0xff]
    %v239 = vld [vmem:[#allocation3 + $0x3b0] sm:$0xff]
    %v240 = vld [vmem:[#allocation3 + $0x3b8] sm:$0xff]
    %v241 = vld [vmem:[#allocation3 + $0x3c0] sm:$0xff]
    %v242 = vld [vmem:[#allocation3 + $0x3c8] sm:$0xff]
    %v243 = vld [vmem:[#allocation3 + $0x3d0] sm:$0xff]
    %v244 = vld [vmem:[#allocation3 + $0x3d8] sm:$0xff]
    %v245 = vld [vmem:[#allocation3 + $0x3e0] sm:$0xff]
    %v246 = vld [vmem:[#allocation3 + $0x3e8] sm:$0xff]
    %v247 = vld [vmem:[#allocation3 + $0x3f0] sm:$0xff]
    %v248 = vld [vmem:[#allocation3 + $0x3f8] sm:$0xff]
    %v249 = vld [vmem:[#allocation3 + $0x400] sm:$0xff]
    %v250 = vld [vmem:[#allocation3 + $0x408] sm:$0xff]
    %v251 = vld [vmem:[#allocation3 + $0x410] sm:$0xff]
    %v252 = vld [vmem:[#allocation3 + $0x418] sm:$0xff]
    %v253 = vld [vmem:[#allocation3 + $0x420] sm:$0xff]
    %v254 = vld [vmem:[#allocation3 + $0x428] sm:$0xff]
    %v255 = vld [vmem:[#allocation3 + $0x430] sm:$0xff]
    %v256 = vld [vmem:[#allocation3 + $0x438] sm:$0xff]
    %v257 = vld [vmem:[#allocation3 + $0x440] sm:$0xff]
    %v258 = vld [vmem:[#allocation3 + $0x448] sm:$0xff]
    %v259 = vld [vmem:[#allocation3 + $0x450] sm:$0xff]
    %v260 = vld [vmem:[#allocation3 + $0x458] sm:$0xff]
    %v261 = vld [vmem:[#allocation3 + $0x460] sm:$0xff]
    %v262 = vld [vmem:[#allocation3 + $0x468] sm:$0xff]
    %v263 = vld [vmem:[#allocation3 + $0x470] sm:$0xff]
    %v264 = vld [vmem:[#allocation3 + $0x478] sm:$0xff]
    %v265 = vld [vmem:[#allocation3 + $0x480] sm:$0xff]
    %v266 = vld [vmem:[#allocation3 + $0x488] sm:$0xff]
    %v267 = vld [vmem:[#allocation3 + $0x490] sm:$0xff]
    %v268 = vld [vmem:[#allocation3 + $0x498] sm:$0xff]
    %v269 = vld [vmem:[#allocation3 + $0x4a0] sm:$0xff]
    %v270 = vld [vmem:[#allocation3 + $0x4a8] sm:$0xff]
    %v271 = vld [vmem:[#allocation3 + $0x4b0] sm:$0xff]
    %v272 = vld [vmem:[#allocation3 + $0x4b8] sm:$0xff]
    %v273 = vld [vmem:[#allocation3 + $0x4c0] sm:$0xff]
    %v274 = vld [vmem:[#allocation3 + $0x4c8] sm:$0xff]
    %v275 = vld [vmem:[#allocation3 + $0x4d0] sm:$0xff]
    %v276 = vld [vmem:[#allocation3 + $0x4d8] sm:$0xff]
    %v277 = vld [vmem:[#allocation3 + $0x4e0] sm:$0xff]
    %v278 = vld [vmem:[#allocation3 + $0x4e8] sm:$0xff]
    %v279 = vld [vmem:[#allocation3 + $0x4f0] sm:$0xff]
    %v280 = vld [vmem:[#allocation3 + $0x4f8] sm:$0xff]
    %v281 = vld [vmem:[#allocation3 + $0x500] sm:$0xff]
    %v282 = vld [vmem:[#allocation3 + $0x508] sm:$0xff]
    %v283 = vld [vmem:[#allocation3 + $0x510] sm:$0xff]
    %v284 = vld [vmem:[#allocation3 + $0x518] sm:$0xff]
    %v285 = vld [vmem:[#allocation3 + $0x520] sm:$0xff]
    %v286 = vld [vmem:[#allocation3 + $0x528] sm:$0xff]
    %v287 = vld [vmem:[#allocation3 + $0x530] sm:$0xff]
    %v288 = vld [vmem:[#allocation3 + $0x538] sm:$0xff]
    %v289 = vld [vmem:[#allocation3 + $0x540] sm:$0xff]
    %v290 = vld [vmem:[#allocation3 + $0x548] sm:$0xff]
    %v291 = vld [vmem:[#allocation3 + $0x550] sm:$0xff]
    %v292 = vld [vmem:[#allocation3 + $0x558] sm:$0xff]
    %v293 = vld [vmem:[#allocation3 + $0x560] sm:$0xff]
    %v294 = vld [vmem:[#allocation3 + $0x568] sm:$0xff]
    %v295 = vld [vmem:[#allocation3 + $0x570] sm:$0xff]
    %v296 = vld [vmem:[#allocation3 + $0x578] sm:$0xff]
    %v297 = vld [vmem:[#allocation3 + $0x580] sm:$0xff]
    %v298 = vld [vmem:[#allocation3 + $0x588] sm:$0xff]
    %v299 = vld [vmem:[#allocation3 + $0x590] sm:$0xff]
    %v300 = vld [vmem:[#allocation3 + $0x598] sm:$0xff]
    %v301 = vld [vmem:[#allocation3 + $0x5a0] sm:$0xff]
    %v302 = vld [vmem:[#allocation3 + $0x5a8] sm:$0xff]
    %v303 = vld [vmem:[#allocation3 + $0x5b0] sm:$0xff]
    %v304 = vld [vmem:[#allocation3 + $0x5b8] sm:$0xff]
    %v305 = vld [vmem:[#allocation3 + $0x5c0] sm:$0xff]
    %v306 = vld [vmem:[#allocation3 + $0x5c8] sm:$0xff]
    %v307 = vld [vmem:[#allocation3 + $0x5d0] sm:$0xff]
    %v308 = vld [vmem:[#allocation3 + $0x5d8] sm:$0xff]
    %v309 = vld [vmem:[#allocation3 + $0x5e0] sm:$0xff]
    %v310 = vld [vmem:[#allocation3 + $0x5e8] sm:$0xff]
    %v311 = vld [vmem:[#allocation3 + $0x5f0] sm:$0xff]
    %v312 = vld [vmem:[#allocation3 + $0x5f8] sm:$0xff]
    %v313 = vld [vmem:[#allocation3 + $0x600] sm:$0xff]
    %v314 = vld [vmem:[#allocation3 + $0x608] sm:$0xff]
    %v315 = vld [vmem:[#allocation3 + $0x610] sm:$0xff]
    %v316 = vld [vmem:[#allocation3 + $0x618] sm:$0xff]
    %v317 = vld [vmem:[#allocation3 + $0x620] sm:$0xff]
    %v318 = vld [vmem:[#allocation3 + $0x628] sm:$0xff]
    %v319 = vld [vmem:[#allocation3 + $0x630] sm:$0xff]
    %v320 = vld [vmem:[#allocation3 + $0x638] sm:$0xff]
    %v321 = vld [vmem:[#allocation3 + $0x640] sm:$0xff]
    %v322 = vld [vmem:[#allocation3 + $0x648] sm:$0xff]
    %v323 = vld [vmem:[#allocation3 + $0x650] sm:$0xff]
    %v324 = vld [vmem:[#allocation3 + $0x658] sm:$0xff]
    %v325 = vld [vmem:[#allocation3 + $0x660] sm:$0xff]
    %v326 = vld [vmem:[#allocation3 + $0x668] sm:$0xff]
    %v327 = vld [vmem:[#allocation3 + $0x670] sm:$0xff]
    %v328 = vld [vmem:[#allocation3 + $0x678] sm:$0xff]
    %v329 = vld [vmem:[#allocation3 + $0x680] sm:$0xff]
    %v330 = vld [vmem:[#allocation3 + $0x688] sm:$0xff]
    %v331 = vld [vmem:[#allocation3 + $0x690] sm:$0xff]
    %v332 = vld [vmem:[#allocation3 + $0x698] sm:$0xff]
    %v333 = vld [vmem:[#allocation3 + $0x6a0] sm:$0xff]
    %v334 = vld [vmem:[#allocation3 + $0x6a8] sm:$0xff]
    %v335 = vld [vmem:[#allocation3 + $0x6b0] sm:$0xff]
    %v336 = vld [vmem:[#allocation3 + $0x6b8] sm:$0xff]
    %v337 = vld [vmem:[#allocation3 + $0x6c0] sm:$0xff]
    %v338 = vld [vmem:[#allocation3 + $0x6c8] sm:$0xff]
    %v339 = vld [vmem:[#allocation3 + $0x6d0] sm:$0xff]
    %v340 = vld [vmem:[#allocation3 + $0x6d8] sm:$0xff]
    %v341 = vld [vmem:[#allocation3 + $0x6e0] sm:$0xff]
    %v342 = vld [vmem:[#allocation3 + $0x6e8] sm:$0xff]
    %v343 = vld [vmem:[#allocation3 + $0x6f0] sm:$0xff]
    %v344 = vld [vmem:[#allocation3 + $0x6f8] sm:$0xff]
    %v345 = vld [vmem:[#allocation3 + $0x700] sm:$0xff]
    %v346 = vld [vmem:[#allocation3 + $0x708] sm:$0xff]
    %v347 = vld [vmem:[#allocation3 + $0x710] sm:$0xff]
    %v348 = vld [vmem:[#allocation3 + $0x718] sm:$0xff]
    %v349 = vld [vmem:[#allocation3 + $0x720] sm:$0xff]
    %v350 = vld [vmem:[#allocation3 + $0x728] sm:$0xff]
    %v351 = vld [vmem:[#allocation3 + $0x730] sm:$0xff]
    %v352 = vld [vmem:[#allocation3 + $0x738] sm:$0xff]
    %v353 = vld [vmem:[#allocation3 + $0x740] sm:$0xff]
    %v354 = vld [vmem:[#allocation3 + $0x748] sm:$0xff]
    %v355 = vld [vmem:[#allocation3 + $0x750] sm:$0xff]
    %v356 = vld [vmem:[#allocation3 + $0x758] sm:$0xff]
    %v357 = vld [vmem:[#allocation3 + $0x760] sm:$0xff]
    %v358 = vld [vmem:[#allocation3 + $0x768] sm:$0xff]
    %v359 = vld [vmem:[#allocation3 + $0x770] sm:$0xff]
    %v360 = vld [vmem:[#allocation3 + $0x778] sm:$0xff]
    %v361 = vld [vmem:[#allocation3 + $0x780] sm:$0xff]
    %v362 = vld [vmem:[#allocation3 + $0x788] sm:$0xff]
    %v363 = vld [vmem:[#allocation3 + $0x790] sm:$0xff]
    %v364 = vld [vmem:[#allocation3 + $0x798] sm:$0xff]
    %v365 = vld [vmem:[#allocation3 + $0x7a0] sm:$0xff]
    %v366 = vld [vmem:[#allocation3 + $0x7a8] sm:$0xff]
    %v367 = vld [vmem:[#allocation3 + $0x7b0] sm:$0xff]
    %v368 = vld [vmem:[#allocation3 + $0x7b8] sm:$0xf]
    %v369 = vld [vmem:[#allocation3 + $0x7c0] sm:$0xf]
    %v370 = vld [vmem:[#allocation3 + $0x7c8] sm:$0xf]
    %v371 = vld [vmem:[#allocation3 + $0x7d0] sm:$0xf]
    %v372 = vld [vmem:[#allocation3 + $0x7d8] sm:$0xf]
    %v373 = vld [vmem:[#allocation3 + $0x7e0] sm:$0xf]
    %v374 = vld [vmem:[#allocation3 + $0x7e8] sm:$0xf]
    %v375 = vld [vmem:[#allocation3 + $0x7f0] sm:$0xf]
    %v376 = vld [vmem:[#allocation3 + $0x7f8] sm:$0xf]
    %v377 = vld [vmem:[#allocation3 + $0x800] sm:$0xf]
    %v378 = vld [vmem:[#allocation3 + $0x808] sm:$0xf]
    %v379 = vld [vmem:[#allocation3 + $0x810] sm:$0xf]
    %v380 = vld [vmem:[#allocation3 + $0x818] sm:$0xf]
    %v381 = vld [vmem:[#allocation5] sm:$0xff]
    %v382 = vld [vmem:[#allocation5 + $0x8] sm:$0x1f]
    %v385 = vlaneseq
    %v386 = vshrl.u32 %v385, 7
    %v387 = vsub.s32 0, %v386
    %v388 = vrot.slane %v381, %v387
    %v389 = vlaneseq
    %v390 = vshrl.u32 %v389, 7
    %v391 = vsub.s32 1, %v390
    %v392 = vrot.slane %v381, %v391
    %v393 = vlaneseq
    %v394 = vshrl.u32 %v393, 7
    %v395 = vsub.s32 2, %v394
    %v396 = vrot.slane %v381, %v395
    %v397 = vlaneseq
    %v398 = vshrl.u32 %v397, 7
    %v399 = vsub.s32 3, %v398
    %v400 = vrot.slane %v381, %v399
    %v401 = vlaneseq
    %v402 = vshrl.u32 %v401, 7
    %v403 = vsub.s32 4, %v402
    %v404 = vrot.slane %v381, %v403
    %v405 = vlaneseq
    %v406 = vshrl.u32 %v405, 7
    %v407 = vsub.s32 5, %v406
    %v408 = vrot.slane %v381, %v407
    %v409 = vlaneseq
    %v410 = vshrl.u32 %v409, 7
    %v411 = vsub.s32 6, %v410
    %v412 = vrot.slane %v381, %v411
    %v413 = vlaneseq
    %v414 = vshrl.u32 %v413, 7
    %v415 = vsub.s32 7, %v414
    %v416 = vrot.slane %v381, %v415
    %v417 = vlaneseq
    %v418 = vshrl.u32 %v417, 7
    %v419 = vsub.s32 0, %v418
    %v420 = vrot.slane %v382, %v419
    %v421 = vlaneseq
    %v422 = vshrl.u32 %v421, 7
    %v423 = vsub.s32 1, %v422
    %v424 = vrot.slane %v382, %v423
    %v425 = vlaneseq
    %v426 = vshrl.u32 %v425, 7
    %v427 = vsub.s32 2, %v426
    %v428 = vrot.slane %v382, %v427
    %v429 = vlaneseq
    %v430 = vshrl.u32 %v429, 7
    %v431 = vsub.s32 3, %v430
    %v432 = vrot.slane %v382, %v431
    %v433 = vlaneseq
    %v434 = vshrl.u32 %v433, 7
    %v435 = vsub.s32 4, %v434
    %v436 = vrot.slane %v382, %v435
    %vm450 = vcmask 228352
    %v452 = vsel %vm450, %v118, 0
    %v455 = vsel %vm450, %v120, 0
    %vm457 = vcmask 1043456
    %v459 = vsel %vm457, %v368, 0
    %v462 = vsel %vm457, %v369, 0
    %v465 = vsel %vm457, %v370, 0
    %v468 = vsel %vm457, %v371, 0
    %v471 = vsel %vm457, %v372, 0
    %v474 = vsel %vm457, %v373, 0
    %v477 = vsel %vm457, %v374, 0
    %v480 = vsel %vm457, %v375, 0
    %v483 = vsel %vm457, %v376, 0
    %v486 = vsel %vm457, %v377, 0
    %v489 = vsel %vm457, %v378, 0
    %v492 = vsel %vm457, %v379, 0
    %v495 = vsel %vm457, %v380, 0
    %497 = vmatprep.subr.mxu0 %v317
    %498 = vmatpush1.msra.mxu0 %v316
    %499 = vmatprep.subr.mxu0 %v304
    %500 = vmatpush1.msra.mxu0 %v303
    %501 = vmatprep.subr.mxu0 %v291
    %502 = vmatpush1.msra.mxu0 %v290
    %503 = vmatprep.subr.mxu0 %v278
    %504 = vmatpush1.msra.mxu0 %v277
    %505 = vmatprep.subr.mxu0 %v265
    %506 = vmatpush1.msra.mxu0 %v264
    %507 = vmatprep.subr.mxu0 %v252
    %508 = vmatpush1.msra.mxu0 %v251
    %509 = vmatprep.subr.mxu0 %v239
    %510 = vmatpush1.msra.mxu0 %v238
    %511 = vmatprep.subr.mxu0 %v226
    %512 = vmatpush1.msra.mxu0 %v225
    %513 = vmatprep.subr.mxu0 %v213
    %514 = vmatpush1.msra.mxu0 %v212
    %515 = vmatprep.subr.mxu0 %v200
    %516 = vmatpush1.msra.mxu0 %v199
    %517 = vmatprep.subr.mxu0 %v187
    %518 = vmatpush1.msra.mxu0 %v186
    %519 = vmatprep.subr.mxu0 %v174
    %520 = vmatpush1.msra.mxu0 %v173
    %521 = vmatprep.subr.mxu0 %v161
    %522 = vmatpush1.msra.mxu0 %v160
    %523 = vmatprep.subr.mxu0 %v148
    %524 = vmatpush1.msra.mxu0 %v147
    %525 = vmatprep.subr.mxu0 %v135
    %526 = vmatpush1.msra.mxu0 %v134
    %527 = vmatprep.subr.mxu0 %v122
    %528 = vmatpush1.msra.mxu0 %v121
    %529 = vmatprep.subr.mxu0 0.0
    %530 = vmatpush2.msra.mxu0 0.0
    %531 = vmatprep.subr.mxu0 0.0
    %532 = vmatpush2.msra.mxu0 0.0
    %533 = vmatprep.subr.mxu0 0.0
    %534 = vmatpush2.msra.mxu0 0.0
    %535 = vmatprep.subr.mxu0 0.0
    %536 = vmatpush2.msra.mxu0 0.0
    %537 = vmatprep.subr.mxu0 0.0
    %538 = vmatpush2.msra.mxu0 0.0
    %539 = vmatprep.subr.mxu0 0.0
    %540 = vmatpush2.msra.mxu0 0.0
    %541 = vmatprep.subr.mxu0 0.0
    %542 = vmatpush2.msra.mxu0 0.0
    %543 = vmatprep.subr.mxu0 0.0
    %544 = vmatpush2.msra.mxu0 0.0
    %545 = vmatprep.subr.mxu0 0.0
    %546 = vmatpush2.msra.mxu0 0.0
    %547 = vmatprep.subr.mxu0 0.0
    %548 = vmatpush2.msra.mxu0 0.0
    %549 = vmatprep.subr.mxu0 0.0
    %550 = vmatpush2.msra.mxu0 0.0
    %551 = vmatprep.subr.mxu0 0.0
    %552 = vmatpush2.msra.mxu0 0.0
    %553 = vmatprep.subr.mxu0 %v462
    %554 = vmatpush2.msra.mxu0 %v459
    %555 = vmatprep.subr.mxu0 %v356
    %556 = vmatpush2.msra.mxu0 %v355
    %557 = vmatprep.subr.mxu0 %v343
    %558 = vmatpush2.msra.mxu0 %v342
    %559 = vmatprep.subr.mxu0 %v330
    %560 = vmatpush2.msra.mxu0 %v329
    %561 = vmatprep.mubr.f32.mxu0 %v452
    %562 = vmatmul.mubr.f32.gmra.mxu0 %v117
    %v563 = vpop.f32.mrf.mxu0
    %v564 = vadd.f32 %v388, %v563
    %v565 = vpop.f32.mrf.mxu0
    %v566 = vadd.f32 %v392, %v565
    %567 = vmatprep.mubr.f32.mxu0 %v455
    %568 = vmatmul.mubr.f32.gmra.mxu0 %v119
    %v569 = vpop.f32.mrf.mxu0
    %v570 = vadd.f32 %v388, %v569
    %v571 = vpop.f32.mrf.mxu0
    %v572 = vadd.f32 %v392, %v571
    %573 = vdwg.mxu0
    %574 = vmatprep.subr.mxu0 %v319
    %575 = vmatpush1.msra.mxu0 %v318
    %576 = vmatprep.subr.mxu0 %v306
    %577 = vmatpush1.msra.mxu0 %v305
    %578 = vmatprep.subr.mxu0 %v293
    %579 = vmatpush1.msra.mxu0 %v292
    %580 = vmatprep.subr.mxu0 %v280
    %581 = vmatpush1.msra.mxu0 %v279
    %582 = vmatprep.subr.mxu0 %v267
    %583 = vmatpush1.msra.mxu0 %v266
    %584 = vmatprep.subr.mxu0 %v254
    %585 = vmatpush1.msra.mxu0 %v253
    %586 = vmatprep.subr.mxu0 %v241
    %587 = vmatpush1.msra.mxu0 %v240
    %588 = vmatprep.subr.mxu0 %v228
    %589 = vmatpush1.msra.mxu0 %v227
    %590 = vmatprep.subr.mxu0 %v215
    %591 = vmatpush1.msra.mxu0 %v214
    %592 = vmatprep.subr.mxu0 %v202
    %593 = vmatpush1.msra.mxu0 %v201
    %594 = vmatprep.subr.mxu0 %v189
    %595 = vmatpush1.msra.mxu0 %v188
    %596 = vmatprep.subr.mxu0 %v176
    %597 = vmatpush1.msra.mxu0 %v175
    %598 = vmatprep.subr.mxu0 %v163
    %599 = vmatpush1.msra.mxu0 %v162
    %600 = vmatprep.subr.mxu0 %v150
    %601 = vmatpush1.msra.mxu0 %v149
    %602 = vmatprep.subr.mxu0 %v137
    %603 = vmatpush1.msra.mxu0 %v136
    %604 = vmatprep.subr.mxu0 %v124
    %605 = vmatpush1.msra.mxu0 %v123
    %606 = vmatprep.subr.mxu0 0.0
    %607 = vmatpush2.msra.mxu0 0.0
    %608 = vmatprep.subr.mxu0 0.0
    %609 = vmatpush2.msra.mxu0 0.0
    %610 = vmatprep.subr.mxu0 0.0
    %611 = vmatpush2.msra.mxu0 0.0
    %612 = vmatprep.subr.mxu0 0.0
    %613 = vmatpush2.msra.mxu0 0.0
    %614 = vmatprep.subr.mxu0 0.0
    %615 = vmatpush2.msra.mxu0 0.0
    %616 = vmatprep.subr.mxu0 0.0
    %617 = vmatpush2.msra.mxu0 0.0
    %618 = vmatprep.subr.mxu0 0.0
    %619 = vmatpush2.msra.mxu0 0.0
    %620 = vmatprep.subr.mxu0 0.0
    %621 = vmatpush2.msra.mxu0 0.0
    %622 = vmatprep.subr.mxu0 0.0
    %623 = vmatpush2.msra.mxu0 0.0
    %624 = vmatprep.subr.mxu0 0.0
    %625 = vmatpush2.msra.mxu0 0.0
    %626 = vmatprep.subr.mxu0 0.0
    %627 = vmatpush2.msra.mxu0 0.0
    %628 = vmatprep.subr.mxu0 0.0
    %629 = vmatpush2.msra.mxu0 0.0
    %630 = vmatprep.subr.mxu0 %v468
    %631 = vmatpush2.msra.mxu0 %v465
    %632 = vmatprep.subr.mxu0 %v358
    %633 = vmatpush2.msra.mxu0 %v357
    %634 = vmatprep.subr.mxu0 %v345
    %635 = vmatpush2.msra.mxu0 %v344
    %636 = vmatprep.subr.mxu0 %v332
    %637 = vmatpush2.msra.mxu0 %v331
    %638 = vmatprep.mubr.f32.mxu0 %v452
    %639 = vmatmul.mubr.f32.gmra.mxu0 %v117
    %v640 = vpop.f32.mrf.mxu0
    %v641 = vadd.f32 %v396, %v640
    %v642 = vpop.f32.mrf.mxu0
    %v643 = vadd.f32 %v400, %v642
    %644 = vmatprep.mubr.f32.mxu0 %v455
    %645 = vmatmul.mubr.f32.gmra.mxu0 %v119
    %v646 = vpop.f32.mrf.mxu0
    %v647 = vadd.f32 %v396, %v646
    %v648 = vpop.f32.mrf.mxu0
    %v649 = vadd.f32 %v400, %v648
    %650 = vdwg.mxu0
    %651 = vmatprep.subr.mxu0 %v321
    %652 = vmatpush1.msra.mxu0 %v320
    %653 = vmatprep.subr.mxu0 %v308
    %654 = vmatpush1.msra.mxu0 %v307
    %655 = vmatprep.subr.mxu0 %v295
    %656 = vmatpush1.msra.mxu0 %v294
    %657 = vmatprep.subr.mxu0 %v282
    %658 = vmatpush1.msra.mxu0 %v281
    %659 = vmatprep.subr.mxu0 %v269
    %660 = vmatpush1.msra.mxu0 %v268
    %661 = vmatprep.subr.mxu0 %v256
    %662 = vmatpush1.msra.mxu0 %v255
    %663 = vmatprep.subr.mxu0 %v243
    %664 = vmatpush1.msra.mxu0 %v242
    %665 = vmatprep.subr.mxu0 %v230
    %666 = vmatpush1.msra.mxu0 %v229
    %667 = vmatprep.subr.mxu0 %v217
    %668 = vmatpush1.msra.mxu0 %v216
    %669 = vmatprep.subr.mxu0 %v204
    %670 = vmatpush1.msra.mxu0 %v203
    %671 = vmatprep.subr.mxu0 %v191
    %672 = vmatpush1.msra.mxu0 %v190
    %673 = vmatprep.subr.mxu0 %v178
    %674 = vmatpush1.msra.mxu0 %v177
    %675 = vmatprep.subr.mxu0 %v165
    %676 = vmatpush1.msra.mxu0 %v164
    %677 = vmatprep.subr.mxu0 %v152
    %678 = vmatpush1.msra.mxu0 %v151
    %679 = vmatprep.subr.mxu0 %v139
    %680 = vmatpush1.msra.mxu0 %v138
    %681 = vmatprep.subr.mxu0 %v126
    %682 = vmatpush1.msra.mxu0 %v125
    %683 = vmatprep.subr.mxu0 0.0
    %684 = vmatpush2.msra.mxu0 0.0
    %685 = vmatprep.subr.mxu0 0.0
    %686 = vmatpush2.msra.mxu0 0.0
    %687 = vmatprep.subr.mxu0 0.0
    %688 = vmatpush2.msra.mxu0 0.0
    %689 = vmatprep.subr.mxu0 0.0
    %690 = vmatpush2.msra.mxu0 0.0
    %691 = vmatprep.subr.mxu0 0.0
    %692 = vmatpush2.msra.mxu0 0.0
    %693 = vmatprep.subr.mxu0 0.0
    %694 = vmatpush2.msra.mxu0 0.0
    %695 = vmatprep.subr.mxu0 0.0
    %696 = vmatpush2.msra.mxu0 0.0
    %697 = vmatprep.subr.mxu0 0.0
    %698 = vmatpush2.msra.mxu0 0.0
    %699 = vmatprep.subr.mxu0 0.0
    %700 = vmatpush2.msra.mxu0 0.0
    %701 = vmatprep.subr.mxu0 0.0
    %702 = vmatpush2.msra.mxu0 0.0
    %703 = vmatprep.subr.mxu0 0.0
    %704 = vmatpush2.msra.mxu0 0.0
    %705 = vmatprep.subr.mxu0 0.0
    %706 = vmatpush2.msra.mxu0 0.0
    %707 = vmatprep.subr.mxu0 %v474
    %708 = vmatpush2.msra.mxu0 %v471
    %709 = vmatprep.subr.mxu0 %v360
    %710 = vmatpush2.msra.mxu0 %v359
    %711 = vmatprep.subr.mxu0 %v347
    %712 = vmatpush2.msra.mxu0 %v346
    %713 = vmatprep.subr.mxu0 %v334
    %714 = vmatpush2.msra.mxu0 %v333
    %715 = vmatprep.mubr.f32.mxu0 %v452
    %716 = vmatmul.mubr.f32.gmra.mxu0 %v117
    %v717 = vpop.f32.mrf.mxu0
    %v718 = vadd.f32 %v404, %v717
    %v719 = vpop.f32.mrf.mxu0
    %v720 = vadd.f32 %v408, %v719
    %721 = vmatprep.mubr.f32.mxu0 %v455
    %722 = vmatmul.mubr.f32.gmra.mxu0 %v119
    %v723 = vpop.f32.mrf.mxu0
    %v724 = vadd.f32 %v404, %v723
    %v725 = vpop.f32.mrf.mxu0
    %v726 = vadd.f32 %v408, %v725
    %727 = vdwg.mxu0
    %728 = vmatprep.subr.mxu0 %v323
    %729 = vmatpush1.msra.mxu0 %v322
    %730 = vmatprep.subr.mxu0 %v310
    %731 = vmatpush1.msra.mxu0 %v309
    %732 = vmatprep.subr.mxu0 %v297
    %733 = vmatpush1.msra.mxu0 %v296
    %734 = vmatprep.subr.mxu0 %v284
    %735 = vmatpush1.msra.mxu0 %v283
    %736 = vmatprep.subr.mxu0 %v271
    %737 = vmatpush1.msra.mxu0 %v270
    %738 = vmatprep.subr.mxu0 %v258
    %739 = vmatpush1.msra.mxu0 %v257
    %740 = vmatprep.subr.mxu0 %v245
    %741 = vmatpush1.msra.mxu0 %v244
    %742 = vmatprep.subr.mxu0 %v232
    %743 = vmatpush1.msra.mxu0 %v231
    %744 = vmatprep.subr.mxu0 %v219
    %745 = vmatpush1.msra.mxu0 %v218
    %746 = vmatprep.subr.mxu0 %v206
    %747 = vmatpush1.msra.mxu0 %v205
    %748 = vmatprep.subr.mxu0 %v193
    %749 = vmatpush1.msra.mxu0 %v192
    %750 = vmatprep.subr.mxu0 %v180
    %751 = vmatpush1.msra.mxu0 %v179
    %752 = vmatprep.subr.mxu0 %v167
    %753 = vmatpush1.msra.mxu0 %v166
    %754 = vmatprep.subr.mxu0 %v154
    %755 = vmatpush1.msra.mxu0 %v153
    %756 = vmatprep.subr.mxu0 %v141
    %757 = vmatpush1.msra.mxu0 %v140
    %758 = vmatprep.subr.mxu0 %v128
    %759 = vmatpush1.msra.mxu0 %v127
    %760 = vmatprep.subr.mxu0 0.0
    %761 = vmatpush2.msra.mxu0 0.0
    %762 = vmatprep.subr.mxu0 0.0
    %763 = vmatpush2.msra.mxu0 0.0
    %764 = vmatprep.subr.mxu0 0.0
    %765 = vmatpush2.msra.mxu0 0.0
    %766 = vmatprep.subr.mxu0 0.0
    %767 = vmatpush2.msra.mxu0 0.0
    %768 = vmatprep.subr.mxu0 0.0
    %769 = vmatpush2.msra.mxu0 0.0
    %770 = vmatprep.subr.mxu0 0.0
    %771 = vmatpush2.msra.mxu0 0.0
    %772 = vmatprep.subr.mxu0 0.0
    %773 = vmatpush2.msra.mxu0 0.0
    %774 = vmatprep.subr.mxu0 0.0
    %775 = vmatpush2.msra.mxu0 0.0
    %776 = vmatprep.subr.mxu0 0.0
    %777 = vmatpush2.msra.mxu0 0.0
    %778 = vmatprep.subr.mxu0 0.0
    %779 = vmatpush2.msra.mxu0 0.0
    %780 = vmatprep.subr.mxu0 0.0
    %781 = vmatpush2.msra.mxu0 0.0
    %782 = vmatprep.subr.mxu0 0.0
    %783 = vmatpush2.msra.mxu0 0.0
    %784 = vmatprep.subr.mxu0 %v480
    %785 = vmatpush2.msra.mxu0 %v477
    %786 = vmatprep.subr.mxu0 %v362
    %787 = vmatpush2.msra.mxu0 %v361
    %788 = vmatprep.subr.mxu0 %v349
    %789 = vmatpush2.msra.mxu0 %v348
    %790 = vmatprep.subr.mxu0 %v336
    %791 = vmatpush2.msra.mxu0 %v335
    %792 = vmatprep.mubr.f32.mxu0 %v452
    %793 = vmatmul.mubr.f32.gmra.mxu0 %v117
    %v794 = vpop.f32.mrf.mxu0
    %v795 = vadd.f32 %v412, %v794
    %v796 = vpop.f32.mrf.mxu0
    %v797 = vadd.f32 %v416, %v796
    %798 = vmatprep.mubr.f32.mxu0 %v455
    %799 = vmatmul.mubr.f32.gmra.mxu0 %v119
    %v800 = vpop.f32.mrf.mxu0
    %v801 = vadd.f32 %v412, %v800
    %v802 = vpop.f32.mrf.mxu0
    %v803 = vadd.f32 %v416, %v802
    %804 = vdwg.mxu0
    %805 = vmatprep.subr.mxu0 %v325
    %806 = vmatpush1.msra.mxu0 %v324
    %807 = vmatprep.subr.mxu0 %v312
    %808 = vmatpush1.msra.mxu0 %v311
    %809 = vmatprep.subr.mxu0 %v299
    %810 = vmatpush1.msra.mxu0 %v298
    %811 = vmatprep.subr.mxu0 %v286
    %812 = vmatpush1.msra.mxu0 %v285
    %813 = vmatprep.subr.mxu0 %v273
    %814 = vmatpush1.msra.mxu0 %v272
    %815 = vmatprep.subr.mxu0 %v260
    %816 = vmatpush1.msra.mxu0 %v259
    %817 = vmatprep.subr.mxu0 %v247
    %818 = vmatpush1.msra.mxu0 %v246
    %819 = vmatprep.subr.mxu0 %v234
    %820 = vmatpush1.msra.mxu0 %v233
    %821 = vmatprep.subr.mxu0 %v221
    %822 = vmatpush1.msra.mxu0 %v220
    %823 = vmatprep.subr.mxu0 %v208
    %824 = vmatpush1.msra.mxu0 %v207
    %825 = vmatprep.subr.mxu0 %v195
    %826 = vmatpush1.msra.mxu0 %v194
    %827 = vmatprep.subr.mxu0 %v182
    %828 = vmatpush1.msra.mxu0 %v181
    %829 = vmatprep.subr.mxu0 %v169
    %830 = vmatpush1.msra.mxu0 %v168
    %831 = vmatprep.subr.mxu0 %v156
    %832 = vmatpush1.msra.mxu0 %v155
    %833 = vmatprep.subr.mxu0 %v143
    %834 = vmatpush1.msra.mxu0 %v142
    %835 = vmatprep.subr.mxu0 %v130
    %836 = vmatpush1.msra.mxu0 %v129
    %837 = vmatprep.subr.mxu0 0.0
    %838 = vmatpush2.msra.mxu0 0.0
    %839 = vmatprep.subr.mxu0 0.0
    %840 = vmatpush2.msra.mxu0 0.0
    %841 = vmatprep.subr.mxu0 0.0
    %842 = vmatpush2.msra.mxu0 0.0
    %843 = vmatprep.subr.mxu0 0.0
    %844 = vmatpush2.msra.mxu0 0.0
    %845 = vmatprep.subr.mxu0 0.0
    %846 = vmatpush2.msra.mxu0 0.0
    %847 = vmatprep.subr.mxu0 0.0
    %848 = vmatpush2.msra.mxu0 0.0
    %849 = vmatprep.subr.mxu0 0.0
    %850 = vmatpush2.msra.mxu0 0.0
    %851 = vmatprep.subr.mxu0 0.0
    %852 = vmatpush2.msra.mxu0 0.0
    %853 = vmatprep.subr.mxu0 0.0
    %854 = vmatpush2.msra.mxu0 0.0
    %855 = vmatprep.subr.mxu0 0.0
    %856 = vmatpush2.msra.mxu0 0.0
    %857 = vmatprep.subr.mxu0 0.0
    %858 = vmatpush2.msra.mxu0 0.0
    %859 = vmatprep.subr.mxu0 0.0
    %860 = vmatpush2.msra.mxu0 0.0
    %861 = vmatprep.subr.mxu0 %v486
    %862 = vmatpush2.msra.mxu0 %v483
    %863 = vmatprep.subr.mxu0 %v364
    %864 = vmatpush2.msra.mxu0 %v363
    %865 = vmatprep.subr.mxu0 %v351
    %866 = vmatpush2.msra.mxu0 %v350
    %867 = vmatprep.subr.mxu0 %v338
    %868 = vmatpush2.msra.mxu0 %v337
    %869 = vmatprep.mubr.f32.mxu0 %v452
    %870 = vmatmul.mubr.f32.gmra.mxu0 %v117
    %v871 = vpop.f32.mrf.mxu0
    %v872 = vadd.f32 %v420, %v871
    %v873 = vpop.f32.mrf.mxu0
    %v874 = vadd.f32 %v424, %v873
    %875 = vmatprep.mubr.f32.mxu0 %v455
    %876 = vmatmul.mubr.f32.gmra.mxu0 %v119
    %v877 = vpop.f32.mrf.mxu0
    %v878 = vadd.f32 %v420, %v877
    %v879 = vpop.f32.mrf.mxu0
    %v880 = vadd.f32 %v424, %v879
    %881 = vdwg.mxu0
    %882 = vmatprep.subr.mxu0 %v327
    %883 = vmatpush1.msra.mxu0 %v326
    %884 = vmatprep.subr.mxu0 %v314
    %885 = vmatpush1.msra.mxu0 %v313
    %886 = vmatprep.subr.mxu0 %v301
    %887 = vmatpush1.msra.mxu0 %v300
    %888 = vmatprep.subr.mxu0 %v288
    %889 = vmatpush1.msra.mxu0 %v287
    %890 = vmatprep.subr.mxu0 %v275
    %891 = vmatpush1.msra.mxu0 %v274
    %892 = vmatprep.subr.mxu0 %v262
    %893 = vmatpush1.msra.mxu0 %v261
    %894 = vmatprep.subr.mxu0 %v249
    %895 = vmatpush1.msra.mxu0 %v248
    %896 = vmatprep.subr.mxu0 %v236
    %897 = vmatpush1.msra.mxu0 %v235
    %898 = vmatprep.subr.mxu0 %v223
    %899 = vmatpush1.msra.mxu0 %v222
    %900 = vmatprep.subr.mxu0 %v210
    %901 = vmatpush1.msra.mxu0 %v209
    %902 = vmatprep.subr.mxu0 %v197
    %903 = vmatpush1.msra.mxu0 %v196
    %904 = vmatprep.subr.mxu0 %v184
    %905 = vmatpush1.msra.mxu0 %v183
    %906 = vmatprep.subr.mxu0 %v171
    %907 = vmatpush1.msra.mxu0 %v170
    %908 = vmatprep.subr.mxu0 %v158
    %909 = vmatpush1.msra.mxu0 %v157
    %910 = vmatprep.subr.mxu0 %v145
    %911 = vmatpush1.msra.mxu0 %v144
    %912 = vmatprep.subr.mxu0 %v132
    %913 = vmatpush1.msra.mxu0 %v131
    %914 = vmatprep.subr.mxu0 0.0
    %915 = vmatpush2.msra.mxu0 0.0
    %916 = vmatprep.subr.mxu0 0.0
    %917 = vmatpush2.msra.mxu0 0.0
    %918 = vmatprep.subr.mxu0 0.0
    %919 = vmatpush2.msra.mxu0 0.0
    %920 = vmatprep.subr.mxu0 0.0
    %921 = vmatpush2.msra.mxu0 0.0
    %922 = vmatprep.subr.mxu0 0.0
    %923 = vmatpush2.msra.mxu0 0.0
    %924 = vmatprep.subr.mxu0 0.0
    %925 = vmatpush2.msra.mxu0 0.0
    %926 = vmatprep.subr.mxu0 0.0
    %927 = vmatpush2.msra.mxu0 0.0
    %928 = vmatprep.subr.mxu0 0.0
    %929 = vmatpush2.msra.mxu0 0.0
    %930 = vmatprep.subr.mxu0 0.0
    %931 = vmatpush2.msra.mxu0 0.0
    %932 = vmatprep.subr.mxu0 0.0
    %933 = vmatpush2.msra.mxu0 0.0
    %934 = vmatprep.subr.mxu0 0.0
    %935 = vmatpush2.msra.mxu0 0.0
    %936 = vmatprep.subr.mxu0 0.0
    %937 = vmatpush2.msra.mxu0 0.0
    %938 = vmatprep.subr.mxu0 %v492
    %939 = vmatpush2.msra.mxu0 %v489
    %940 = vmatprep.subr.mxu0 %v366
    %941 = vmatpush2.msra.mxu0 %v365
    %942 = vmatprep.subr.mxu0 %v353
    %943 = vmatpush2.msra.mxu0 %v352
    %944 = vmatprep.subr.mxu0 %v340
    %945 = vmatpush2.msra.mxu0 %v339
    %946 = vmatprep.mubr.f32.mxu0 %v452
    %947 = vmatmul.mubr.f32.gmra.mxu0 %v117
    %v948 = vpop.f32.mrf.mxu0
    %v949 = vadd.f32 %v428, %v948
    %v950 = vpop.f32.mrf.mxu0
    %v951 = vadd.f32 %v432, %v950
    %952 = vmatprep.mubr.f32.mxu0 %v455
    %953 = vmatmul.mubr.f32.gmra.mxu0 %v119
    %v954 = vpop.f32.mrf.mxu0
    %v955 = vadd.f32 %v428, %v954
    %v956 = vpop.f32.mrf.mxu0
    %v957 = vadd.f32 %v432, %v956
    %958 = vdwg.mxu0
    %959 = vmatprep.subr.mxu0 0.0
    %960 = vmatpush1.msra.mxu0 %v328
    %961 = vmatprep.subr.mxu0 0.0
    %962 = vmatpush1.msra.mxu0 %v315
    %963 = vmatprep.subr.mxu0 0.0
    %964 = vmatpush1.msra.mxu0 %v302
    %965 = vmatprep.subr.mxu0 0.0
    %966 = vmatpush1.msra.mxu0 %v289
    %967 = vmatprep.subr.mxu0 0.0
    %968 = vmatpush1.msra.mxu0 %v276
    %969 = vmatprep.subr.mxu0 0.0
    %970 = vmatpush1.msra.mxu0 %v263
    %971 = vmatprep.subr.mxu0 0.0
    %972 = vmatpush1.msra.mxu0 %v250
    %973 = vmatprep.subr.mxu0 0.0
    %974 = vmatpush1.msra.mxu0 %v237
    %975 = vmatprep.subr.mxu0 0.0
    %976 = vmatpush1.msra.mxu0 %v224
    %977 = vmatprep.subr.mxu0 0.0
    %978 = vmatpush1.msra.mxu0 %v211
    %979 = vmatprep.subr.mxu0 0.0
    %980 = vmatpush1.msra.mxu0 %v198
    %981 = vmatprep.subr.mxu0 0.0
    %982 = vmatpush1.msra.mxu0 %v185
    %983 = vmatprep.subr.mxu0 0.0
    %984 = vmatpush1.msra.mxu0 %v172
    %985 = vmatprep.subr.mxu0 0.0
    %986 = vmatpush1.msra.mxu0 %v159
    %987 = vmatprep.subr.mxu0 0.0
    %988 = vmatpush1.msra.mxu0 %v146
    %989 = vmatprep.subr.mxu0 0.0
    %990 = vmatpush1.msra.mxu0 %v133
    %991 = vmatprep.subr.mxu0 0.0
    %992 = vmatpush2.msra.mxu0 0.0
    %993 = vmatprep.subr.mxu0 0.0
    %994 = vmatpush2.msra.mxu0 0.0
    %995 = vmatprep.subr.mxu0 0.0
    %996 = vmatpush2.msra.mxu0 0.0
    %997 = vmatprep.subr.mxu0 0.0
    %998 = vmatpush2.msra.mxu0 0.0
    %999 = vmatprep.subr.mxu0 0.0
    %1000 = vmatpush2.msra.mxu0 0.0
    %1001 = vmatprep.subr.mxu0 0.0
    %1002 = vmatpush2.msra.mxu0 0.0
    %1003 = vmatprep.subr.mxu0 0.0
    %1004 = vmatpush2.msra.mxu0 0.0
    %1005 = vmatprep.subr.mxu0 0.0
    %1006 = vmatpush2.msra.mxu0 0.0
    %1007 = vmatprep.subr.mxu0 0.0
    %1008 = vmatpush2.msra.mxu0 0.0
    %1009 = vmatprep.subr.mxu0 0.0
    %1010 = vmatpush2.msra.mxu0 0.0
    %1011 = vmatprep.subr.mxu0 0.0
    %1012 = vmatpush2.msra.mxu0 0.0
    %1013 = vmatprep.subr.mxu0 0.0
    %1014 = vmatpush2.msra.mxu0 0.0
    %1015 = vmatprep.subr.mxu0 0.0
    %1016 = vmatpush2.msra.mxu0 %v495
    %1017 = vmatprep.subr.mxu0 0.0
    %1018 = vmatpush2.msra.mxu0 %v367
    %1019 = vmatprep.subr.mxu0 0.0
    %1020 = vmatpush2.msra.mxu0 %v354
    %1021 = vmatprep.subr.mxu0 0.0
    %1022 = vmatpush2.msra.mxu0 %v341
    %1023 = vmatprep.mubr.f32.mxu0 %v452
    %1024 = vmatmul.mubr.f32.gmra.mxu0 %v117
    %v1025 = vpop.f32.mrf.mxu0
    %v1026 = vadd.f32 %v436, %v1025
    %v1027 = vpop.f32.mrf.mxu0
    %1028 = vmatprep.mubr.f32.mxu0 %v455
    %1029 = vmatmul.mubr.f32.gmra.mxu0 %v119
    %v1030 = vpop.f32.mrf.mxu0
    %v1031 = vadd.f32 %v436, %v1030
    %v1032 = vpop.f32.mrf.mxu0
    %1033 = vdwg.mxu0
    %v1034 = vmax.f32 %v564, 0.0
    %v1035 = vmax.f32 %v566, 0.0
    %v1036 = vmax.f32 %v641, 0.0
    %v1037 = vmax.f32 %v643, 0.0
    %v1038 = vmax.f32 %v718, 0.0
    %v1039 = vmax.f32 %v720, 0.0
    %v1040 = vmax.f32 %v795, 0.0
    %v1041 = vmax.f32 %v797, 0.0
    %v1042 = vmax.f32 %v872, 0.0
    %v1043 = vmax.f32 %v874, 0.0
    %v1044 = vmax.f32 %v949, 0.0
    %v1045 = vmax.f32 %v951, 0.0
    %v1046 = vmax.f32 %v1026, 0.0
    %v1047 = vmax.f32 %v570, 0.0
    %v1048 = vmax.f32 %v572, 0.0
    %v1049 = vmax.f32 %v647, 0.0
    %v1050 = vmax.f32 %v649, 0.0
    %v1051 = vmax.f32 %v724, 0.0
    %v1052 = vmax.f32 %v726, 0.0
    %v1053 = vmax.f32 %v801, 0.0
    %v1054 = vmax.f32 %v803, 0.0
    %v1055 = vmax.f32 %v878, 0.0
    %v1056 = vmax.f32 %v880, 0.0
    %v1057 = vmax.f32 %v955, 0.0
    %v1058 = vmax.f32 %v957, 0.0
    %v1059 = vmax.f32 %v1031, 0.0
    %v1060 = vld [vmem:[%s1] sm:$0xff]
    %v1061 = vld [vmem:[%s1 + $0x8] sm:$0xff]
    %v1062 = vld [vmem:[%s1 + $0x10] sm:$0x1]
    %v1063 = vld [vmem:[%s1 + $0x18] sm:$0x1]
    %v1064 = vld [vmem:[#allocation7] sm:$0xff]
    %v1065 = vld [vmem:[#allocation7 + $0x8] sm:$0xff]
    %v1066 = vld [vmem:[#allocation7 + $0x10] sm:$0xff]
    %v1067 = vld [vmem:[#allocation7 + $0x18] sm:$0xff]
    %v1068 = vld [vmem:[#allocation7 + $0x20] sm:$0xff]
    %v1069 = vld [vmem:[#allocation7 + $0x28] sm:$0xff]
    %v1070 = vld [vmem:[#allocation7 + $0x30] sm:$0xff]
    %v1071 = vld [vmem:[#allocation7 + $0x38] sm:$0xff]
    %v1072 = vld [vmem:[#allocation7 + $0x40] sm:$0xff]
    %v1073 = vld [vmem:[#allocation7 + $0x48] sm:$0xff]
    %v1074 = vld [vmem:[#allocation7 + $0x50] sm:$0xff]
    %v1075 = vld [vmem:[#allocation7 + $0x58] sm:$0xff]
    %v1076 = vld [vmem:[#allocation7 + $0x60] sm:$0xff]
    %v1077 = vld [vmem:[#allocation7 + $0x68] sm:$0xff]
    %v1078 = vld [vmem:[#allocation7 + $0x70] sm:$0xff]
    %v1079 = vld [vmem:[#allocation7 + $0x78] sm:$0xff]
    %v1080 = vld [vmem:[#allocation7 + $0x80] sm:$0xff]
    %v1081 = vld [vmem:[#allocation7 + $0x88] sm:$0xff]
    %v1082 = vld [vmem:[#allocation7 + $0x90] sm:$0xff]
    %v1083 = vld [vmem:[#allocation7 + $0x98] sm:$0xff]
    %v1084 = vld [vmem:[#allocation7 + $0xa0] sm:$0xff]
    %v1085 = vld [vmem:[#allocation7 + $0xa8] sm:$0xff]
    %v1086 = vld [vmem:[#allocation7 + $0xb0] sm:$0xff]
    %v1087 = vld [vmem:[#allocation7 + $0xb8] sm:$0xff]
    %v1088 = vld [vmem:[#allocation7 + $0xc0] sm:$0xff]
    %v1089 = vld [vmem:[#allocation7 + $0xc8] sm:$0xff]
    %v1090 = vld [vmem:[#allocation7 + $0xd0] sm:$0xff]
    %v1091 = vld [vmem:[#allocation7 + $0xd8] sm:$0xff]
    %v1092 = vld [vmem:[#allocation7 + $0xe0] sm:$0xff]
    %v1093 = vld [vmem:[#allocation7 + $0xe8] sm:$0xff]
    %v1094 = vld [vmem:[#allocation7 + $0xf0] sm:$0xff]
    %v1095 = vld [vmem:[#allocation7 + $0xf8] sm:$0xff]
    %v1096 = vld [vmem:[#allocation7 + $0x100] sm:$0xff]
    %v1097 = vld [vmem:[#allocation7 + $0x108] sm:$0xff]
    %v1098 = vld [vmem:[#allocation7 + $0x110] sm:$0xff]
    %v1099 = vld [vmem:[#allocation7 + $0x118] sm:$0xff]
    %v1100 = vld [vmem:[#allocation7 + $0x120] sm:$0xff]
    %v1101 = vld [vmem:[#allocation7 + $0x128] sm:$0xff]
    %v1102 = vld [vmem:[#allocation7 + $0x130] sm:$0xff]
    %v1103 = vld [vmem:[#allocation7 + $0x138] sm:$0xff]
    %v1104 = vld [vmem:[#allocation7 + $0x140] sm:$0xff]
    %v1105 = vld [vmem:[#allocation7 + $0x148] sm:$0xff]
    %v1106 = vld [vmem:[#allocation7 + $0x150] sm:$0xff]
    %v1107 = vld [vmem:[#allocation7 + $0x158] sm:$0xff]
    %v1108 = vld [vmem:[#allocation7 + $0x160] sm:$0xff]
    %v1109 = vld [vmem:[#allocation7 + $0x168] sm:$0xff]
    %v1110 = vld [vmem:[#allocation7 + $0x170] sm:$0xff]
    %v1111 = vld [vmem:[#allocation7 + $0x178] sm:$0xff]
    %v1112 = vld [vmem:[#allocation7 + $0x180] sm:$0xff]
    %v1113 = vld [vmem:[#allocation7 + $0x188] sm:$0xff]
    %v1114 = vld [vmem:[#allocation7 + $0x190] sm:$0xff]
    %v1115 = vld [vmem:[#allocation7 + $0x198] sm:$0xff]
    %v1116 = vld [vmem:[#allocation7 + $0x1a0] sm:$0xff]
    %v1117 = vld [vmem:[#allocation7 + $0x1a8] sm:$0xff]
    %v1118 = vld [vmem:[#allocation7 + $0x1b0] sm:$0xff]
    %v1119 = vld [vmem:[#allocation7 + $0x1b8] sm:$0xff]
    %v1120 = vld [vmem:[#allocation7 + $0x1c0] sm:$0xff]
    %v1121 = vld [vmem:[#allocation7 + $0x1c8] sm:$0xff]
    %v1122 = vld [vmem:[#allocation7 + $0x1d0] sm:$0xff]
    %v1123 = vld [vmem:[#allocation7 + $0x1d8] sm:$0xff]
    %v1124 = vld [vmem:[#allocation7 + $0x1e0] sm:$0xff]
    %v1125 = vld [vmem:[#allocation7 + $0x1e8] sm:$0xff]
    %v1126 = vld [vmem:[#allocation7 + $0x1f0] sm:$0xff]
    %v1127 = vld [vmem:[#allocation7 + $0x1f8] sm:$0xff]
    %v1128 = vld [vmem:[#allocation7 + $0x200] sm:$0xff]
    %v1129 = vld [vmem:[#allocation7 + $0x208] sm:$0xff]
    %v1130 = vld [vmem:[#allocation7 + $0x210] sm:$0xff]
    %v1131 = vld [vmem:[#allocation7 + $0x218] sm:$0xff]
    %v1132 = vld [vmem:[#allocation7 + $0x220] sm:$0xff]
    %v1133 = vld [vmem:[#allocation7 + $0x228] sm:$0xff]
    %v1134 = vld [vmem:[#allocation7 + $0x230] sm:$0xff]
    %v1135 = vld [vmem:[#allocation7 + $0x238] sm:$0xff]
    %v1136 = vld [vmem:[#allocation7 + $0x240] sm:$0xff]
    %v1137 = vld [vmem:[#allocation7 + $0x248] sm:$0xff]
    %v1138 = vld [vmem:[#allocation7 + $0x250] sm:$0xff]
    %v1139 = vld [vmem:[#allocation7 + $0x258] sm:$0xff]
    %v1140 = vld [vmem:[#allocation7 + $0x260] sm:$0xff]
    %v1141 = vld [vmem:[#allocation7 + $0x268] sm:$0xff]
    %v1142 = vld [vmem:[#allocation7 + $0x270] sm:$0xff]
    %v1143 = vld [vmem:[#allocation7 + $0x278] sm:$0xff]
    %v1144 = vld [vmem:[#allocation7 + $0x280] sm:$0xff]
    %v1145 = vld [vmem:[#allocation7 + $0x288] sm:$0xff]
    %v1146 = vld [vmem:[#allocation7 + $0x290] sm:$0xff]
    %v1147 = vld [vmem:[#allocation7 + $0x298] sm:$0xff]
    %v1148 = vld [vmem:[#allocation7 + $0x2a0] sm:$0xff]
    %v1149 = vld [vmem:[#allocation7 + $0x2a8] sm:$0xff]
    %v1150 = vld [vmem:[#allocation7 + $0x2b0] sm:$0xff]
    %v1151 = vld [vmem:[#allocation7 + $0x2b8] sm:$0xff]
    %v1152 = vld [vmem:[#allocation7 + $0x2c0] sm:$0xff]
    %v1153 = vld [vmem:[#allocation7 + $0x2c8] sm:$0xff]
    %v1154 = vld [vmem:[#allocation7 + $0x2d0] sm:$0xff]
    %v1155 = vld [vmem:[#allocation7 + $0x2d8] sm:$0xff]
    %v1156 = vld [vmem:[#allocation7 + $0x2e0] sm:$0xff]
    %v1157 = vld [vmem:[#allocation7 + $0x2e8] sm:$0xff]
    %v1158 = vld [vmem:[#allocation7 + $0x2f0] sm:$0xff]
    %v1159 = vld [vmem:[#allocation7 + $0x2f8] sm:$0xff]
    %v1160 = vld [vmem:[#allocation7 + $0x300] sm:$0xff]
    %v1161 = vld [vmem:[#allocation7 + $0x308] sm:$0xff]
    %v1162 = vld [vmem:[#allocation7 + $0x310] sm:$0xff]
    %v1163 = vld [vmem:[#allocation7 + $0x318] sm:$0xff]
    %v1164 = vld [vmem:[#allocation7 + $0x320] sm:$0xff]
    %v1165 = vld [vmem:[#allocation7 + $0x328] sm:$0xff]
    %v1166 = vld [vmem:[#allocation7 + $0x330] sm:$0xff]
    %v1167 = vld [vmem:[#allocation7 + $0x338] sm:$0xff]
    %v1168 = vld [vmem:[#allocation7 + $0x340] sm:$0xff]
    %v1169 = vld [vmem:[#allocation7 + $0x348] sm:$0xff]
    %v1170 = vld [vmem:[#allocation7 + $0x350] sm:$0xff]
    %v1171 = vld [vmem:[#allocation7 + $0x358] sm:$0xff]
    %v1172 = vld [vmem:[#allocation7 + $0x360] sm:$0xff]
    %v1173 = vld [vmem:[#allocation7 + $0x368] sm:$0xff]
    %v1174 = vld [vmem:[#allocation7 + $0x370] sm:$0xff]
    %v1175 = vld [vmem:[#allocation7 + $0x378] sm:$0xff]
    %v1176 = vld [vmem:[#allocation7 + $0x380] sm:$0xff]
    %v1177 = vld [vmem:[#allocation7 + $0x388] sm:$0xff]
    %v1178 = vld [vmem:[#allocation7 + $0x390] sm:$0xff]
    %v1179 = vld [vmem:[#allocation7 + $0x398] sm:$0xff]
    %v1180 = vld [vmem:[#allocation7 + $0x3a0] sm:$0xff]
    %v1181 = vld [vmem:[#allocation7 + $0x3a8] sm:$0xff]
    %v1182 = vld [vmem:[#allocation7 + $0x3b0] sm:$0xff]
    %v1183 = vld [vmem:[#allocation7 + $0x3b8] sm:$0xff]
    %v1184 = vld [vmem:[#allocation7 + $0x3c0] sm:$0xff]
    %v1185 = vld [vmem:[#allocation7 + $0x3c8] sm:$0xff]
    %v1186 = vld [vmem:[#allocation7 + $0x3d0] sm:$0xff]
    %v1187 = vld [vmem:[#allocation7 + $0x3d8] sm:$0xff]
    %v1188 = vld [vmem:[#allocation7 + $0x3e0] sm:$0xff]
    %v1189 = vld [vmem:[#allocation7 + $0x3e8] sm:$0xff]
    %v1190 = vld [vmem:[#allocation7 + $0x3f0] sm:$0xff]
    %v1191 = vld [vmem:[#allocation7 + $0x3f8] sm:$0xff]
    %v1192 = vld [vmem:[#allocation7 + $0x400] sm:$0xff]
    %v1193 = vld [vmem:[#allocation7 + $0x408] sm:$0xff]
    %v1194 = vld [vmem:[#allocation7 + $0x410] sm:$0xff]
    %v1195 = vld [vmem:[#allocation7 + $0x418] sm:$0xff]
    %v1196 = vld [vmem:[#allocation7 + $0x420] sm:$0xff]
    %v1197 = vld [vmem:[#allocation7 + $0x428] sm:$0xff]
    %v1198 = vld [vmem:[#allocation7 + $0x430] sm:$0xff]
    %v1199 = vld [vmem:[#allocation7 + $0x438] sm:$0xff]
    %v1200 = vld [vmem:[#allocation7 + $0x440] sm:$0xff]
    %v1201 = vld [vmem:[#allocation7 + $0x448] sm:$0xff]
    %v1202 = vld [vmem:[#allocation7 + $0x450] sm:$0xff]
    %v1203 = vld [vmem:[#allocation7 + $0x458] sm:$0xff]
    %v1204 = vld [vmem:[#allocation7 + $0x460] sm:$0xff]
    %v1205 = vld [vmem:[#allocation7 + $0x468] sm:$0xff]
    %v1206 = vld [vmem:[#allocation7 + $0x470] sm:$0xff]
    %v1207 = vld [vmem:[#allocation7 + $0x478] sm:$0xff]
    %v1208 = vld [vmem:[#allocation7 + $0x480] sm:$0xff]
    %v1209 = vld [vmem:[#allocation7 + $0x488] sm:$0xff]
    %v1210 = vld [vmem:[#allocation7 + $0x490] sm:$0xff]
    %v1211 = vld [vmem:[#allocation7 + $0x498] sm:$0xff]
    %v1212 = vld [vmem:[#allocation7 + $0x4a0] sm:$0xff]
    %v1213 = vld [vmem:[#allocation7 + $0x4a8] sm:$0xff]
    %v1214 = vld [vmem:[#allocation7 + $0x4b0] sm:$0xff]
    %v1215 = vld [vmem:[#allocation7 + $0x4b8] sm:$0xff]
    %v1216 = vld [vmem:[#allocation7 + $0x4c0] sm:$0xff]
    %v1217 = vld [vmem:[#allocation7 + $0x4c8] sm:$0xff]
    %v1218 = vld [vmem:[#allocation7 + $0x4d0] sm:$0xff]
    %v1219 = vld [vmem:[#allocation7 + $0x4d8] sm:$0xff]
    %v1220 = vld [vmem:[#allocation7 + $0x4e0] sm:$0xff]
    %v1221 = vld [vmem:[#allocation7 + $0x4e8] sm:$0xff]
    %v1222 = vld [vmem:[#allocation7 + $0x4f0] sm:$0xff]
    %v1223 = vld [vmem:[#allocation7 + $0x4f8] sm:$0xff]
    %v1224 = vld [vmem:[#allocation7 + $0x500] sm:$0xff]
    %v1225 = vld [vmem:[#allocation7 + $0x508] sm:$0xff]
    %v1226 = vld [vmem:[#allocation7 + $0x510] sm:$0xff]
    %v1227 = vld [vmem:[#allocation7 + $0x518] sm:$0xff]
    %v1228 = vld [vmem:[#allocation7 + $0x520] sm:$0xff]
    %v1229 = vld [vmem:[#allocation7 + $0x528] sm:$0xff]
    %v1230 = vld [vmem:[#allocation7 + $0x530] sm:$0xff]
    %v1231 = vld [vmem:[#allocation7 + $0x538] sm:$0xff]
    %v1232 = vld [vmem:[#allocation7 + $0x540] sm:$0xff]
    %v1233 = vld [vmem:[#allocation7 + $0x548] sm:$0xff]
    %v1234 = vld [vmem:[#allocation7 + $0x550] sm:$0xff]
    %v1235 = vld [vmem:[#allocation7 + $0x558] sm:$0xff]
    %v1236 = vld [vmem:[#allocation7 + $0x560] sm:$0xff]
    %v1237 = vld [vmem:[#allocation7 + $0x568] sm:$0xff]
    %v1238 = vld [vmem:[#allocation7 + $0x570] sm:$0xff]
    %v1239 = vld [vmem:[#allocation7 + $0x578] sm:$0xff]
    %v1240 = vld [vmem:[#allocation7 + $0x580] sm:$0xff]
    %v1241 = vld [vmem:[#allocation7 + $0x588] sm:$0xff]
    %v1242 = vld [vmem:[#allocation7 + $0x590] sm:$0xff]
    %v1243 = vld [vmem:[#allocation7 + $0x598] sm:$0xff]
    %v1244 = vld [vmem:[#allocation7 + $0x5a0] sm:$0xff]
    %v1245 = vld [vmem:[#allocation7 + $0x5a8] sm:$0xff]
    %v1246 = vld [vmem:[#allocation7 + $0x5b0] sm:$0xff]
    %v1247 = vld [vmem:[#allocation7 + $0x5b8] sm:$0xff]
    %v1248 = vld [vmem:[#allocation7 + $0x5c0] sm:$0xff]
    %v1249 = vld [vmem:[#allocation7 + $0x5c8] sm:$0xff]
    %v1250 = vld [vmem:[#allocation7 + $0x5d0] sm:$0xff]
    %v1251 = vld [vmem:[#allocation7 + $0x5d8] sm:$0xff]
    %v1252 = vld [vmem:[#allocation7 + $0x5e0] sm:$0xff]
    %v1253 = vld [vmem:[#allocation7 + $0x5e8] sm:$0xff]
    %v1254 = vld [vmem:[#allocation7 + $0x5f0] sm:$0xff]
    %v1255 = vld [vmem:[#allocation7 + $0x5f8] sm:$0xff]
    %v1256 = vld [vmem:[#allocation7 + $0x600] sm:$0xff]
    %v1257 = vld [vmem:[#allocation7 + $0x608] sm:$0xff]
    %v1258 = vld [vmem:[#allocation7 + $0x610] sm:$0xff]
    %v1259 = vld [vmem:[#allocation7 + $0x618] sm:$0xff]
    %v1260 = vld [vmem:[#allocation7 + $0x620] sm:$0xff]
    %v1261 = vld [vmem:[#allocation7 + $0x628] sm:$0xff]
    %v1262 = vld [vmem:[#allocation7 + $0x630] sm:$0xff]
    %v1263 = vld [vmem:[#allocation7 + $0x638] sm:$0xff]
    %v1264 = vld [vmem:[#allocation7 + $0x640] sm:$0xff]
    %v1265 = vld [vmem:[#allocation7 + $0x648] sm:$0xff]
    %v1266 = vld [vmem:[#allocation7 + $0x650] sm:$0xff]
    %v1267 = vld [vmem:[#allocation7 + $0x658] sm:$0xff]
    %v1268 = vld [vmem:[#allocation7 + $0x660] sm:$0xff]
    %v1269 = vld [vmem:[#allocation7 + $0x668] sm:$0xff]
    %v1270 = vld [vmem:[#allocation7 + $0x670] sm:$0xff]
    %v1271 = vld [vmem:[#allocation7 + $0x678] sm:$0xff]
    %v1272 = vld [vmem:[#allocation7 + $0x680] sm:$0xff]
    %v1273 = vld [vmem:[#allocation7 + $0x688] sm:$0xff]
    %v1274 = vld [vmem:[#allocation7 + $0x690] sm:$0xff]
    %v1275 = vld [vmem:[#allocation7 + $0x698] sm:$0xff]
    %v1276 = vld [vmem:[#allocation7 + $0x6a0] sm:$0xff]
    %v1277 = vld [vmem:[#allocation7 + $0x6a8] sm:$0xff]
    %v1278 = vld [vmem:[#allocation7 + $0x6b0] sm:$0xff]
    %v1279 = vld [vmem:[#allocation7 + $0x6b8] sm:$0xff]
    %v1280 = vld [vmem:[#allocation7 + $0x6c0] sm:$0xff]
    %v1281 = vld [vmem:[#allocation7 + $0x6c8] sm:$0xff]
    %v1282 = vld [vmem:[#allocation7 + $0x6d0] sm:$0xff]
    %v1283 = vld [vmem:[#allocation7 + $0x6d8] sm:$0xff]
    %v1284 = vld [vmem:[#allocation7 + $0x6e0] sm:$0xff]
    %v1285 = vld [vmem:[#allocation7 + $0x6e8] sm:$0xff]
    %v1286 = vld [vmem:[#allocation7 + $0x6f0] sm:$0xff]
    %v1287 = vld [vmem:[#allocation7 + $0x6f8] sm:$0xff]
    %v1288 = vld [vmem:[#allocation7 + $0x700] sm:$0xff]
    %v1289 = vld [vmem:[#allocation7 + $0x708] sm:$0xff]
    %v1290 = vld [vmem:[#allocation7 + $0x710] sm:$0xff]
    %v1291 = vld [vmem:[#allocation7 + $0x718] sm:$0xff]
    %v1292 = vld [vmem:[#allocation7 + $0x720] sm:$0xff]
    %v1293 = vld [vmem:[#allocation7 + $0x728] sm:$0xff]
    %v1294 = vld [vmem:[#allocation7 + $0x730] sm:$0xff]
    %v1295 = vld [vmem:[#allocation7 + $0x738] sm:$0xff]
    %v1296 = vld [vmem:[#allocation7 + $0x740] sm:$0xff]
    %v1297 = vld [vmem:[#allocation7 + $0x748] sm:$0xff]
    %v1298 = vld [vmem:[#allocation7 + $0x750] sm:$0xff]
    %v1299 = vld [vmem:[#allocation7 + $0x758] sm:$0xff]
    %v1300 = vld [vmem:[#allocation7 + $0x760] sm:$0xff]
    %v1301 = vld [vmem:[#allocation7 + $0x768] sm:$0xff]
    %v1302 = vld [vmem:[#allocation7 + $0x770] sm:$0xff]
    %v1303 = vld [vmem:[#allocation7 + $0x778] sm:$0xff]
    %v1304 = vld [vmem:[#allocation7 + $0x780] sm:$0xff]
    %v1305 = vld [vmem:[#allocation7 + $0x788] sm:$0xff]
    %v1306 = vld [vmem:[#allocation7 + $0x790] sm:$0xff]
    %v1307 = vld [vmem:[#allocation7 + $0x798] sm:$0xff]
    %v1308 = vld [vmem:[#allocation7 + $0x7a0] sm:$0xff]
    %v1309 = vld [vmem:[#allocation7 + $0x7a8] sm:$0xff]
    %v1310 = vld [vmem:[#allocation7 + $0x7b0] sm:$0xff]
    %v1311 = vld [vmem:[#allocation7 + $0x7b8] sm:$0xf]
    %v1312 = vld [vmem:[#allocation7 + $0x7c0] sm:$0xf]
    %v1313 = vld [vmem:[#allocation7 + $0x7c8] sm:$0xf]
    %v1314 = vld [vmem:[#allocation7 + $0x7d0] sm:$0xf]
    %v1315 = vld [vmem:[#allocation7 + $0x7d8] sm:$0xf]
    %v1316 = vld [vmem:[#allocation7 + $0x7e0] sm:$0xf]
    %v1317 = vld [vmem:[#allocation7 + $0x7e8] sm:$0xf]
    %v1318 = vld [vmem:[#allocation7 + $0x7f0] sm:$0xf]
    %v1319 = vld [vmem:[#allocation7 + $0x7f8] sm:$0xf]
    %v1320 = vld [vmem:[#allocation7 + $0x800] sm:$0xf]
    %v1321 = vld [vmem:[#allocation7 + $0x808] sm:$0xf]
    %v1322 = vld [vmem:[#allocation7 + $0x810] sm:$0xf]
    %v1323 = vld [vmem:[#allocation7 + $0x818] sm:$0xf]
    %v1324 = vld [vmem:[#allocation8] sm:$0xff]
    %v1325 = vld [vmem:[#allocation8 + $0x8] sm:$0x1f]
    %v1328 = vlaneseq
    %v1329 = vshrl.u32 %v1328, 7
    %v1330 = vsub.s32 0, %v1329
    %v1331 = vrot.slane %v1324, %v1330
    %v1332 = vlaneseq
    %v1333 = vshrl.u32 %v1332, 7
    %v1334 = vsub.s32 1, %v1333
    %v1335 = vrot.slane %v1324, %v1334
    %v1336 = vlaneseq
    %v1337 = vshrl.u32 %v1336, 7
    %v1338 = vsub.s32 2, %v1337
    %v1339 = vrot.slane %v1324, %v1338
    %v1340 = vlaneseq
    %v1341 = vshrl.u32 %v1340, 7
    %v1342 = vsub.s32 3, %v1341
    %v1343 = vrot.slane %v1324, %v1342
    %v1344 = vlaneseq
    %v1345 = vshrl.u32 %v1344, 7
    %v1346 = vsub.s32 4, %v1345
    %v1347 = vrot.slane %v1324, %v1346
    %v1348 = vlaneseq
    %v1349 = vshrl.u32 %v1348, 7
    %v1350 = vsub.s32 5, %v1349
    %v1351 = vrot.slane %v1324, %v1350
    %v1352 = vlaneseq
    %v1353 = vshrl.u32 %v1352, 7
    %v1354 = vsub.s32 6, %v1353
    %v1355 = vrot.slane %v1324, %v1354
    %v1356 = vlaneseq
    %v1357 = vshrl.u32 %v1356, 7
    %v1358 = vsub.s32 7, %v1357
    %v1359 = vrot.slane %v1324, %v1358
    %v1360 = vlaneseq
    %v1361 = vshrl.u32 %v1360, 7
    %v1362 = vsub.s32 0, %v1361
    %v1363 = vrot.slane %v1325, %v1362
    %v1364 = vlaneseq
    %v1365 = vshrl.u32 %v1364, 7
    %v1366 = vsub.s32 1, %v1365
    %v1367 = vrot.slane %v1325, %v1366
    %v1368 = vlaneseq
    %v1369 = vshrl.u32 %v1368, 7
    %v1370 = vsub.s32 2, %v1369
    %v1371 = vrot.slane %v1325, %v1370
    %v1372 = vlaneseq
    %v1373 = vshrl.u32 %v1372, 7
    %v1374 = vsub.s32 3, %v1373
    %v1375 = vrot.slane %v1325, %v1374
    %v1376 = vlaneseq
    %v1377 = vshrl.u32 %v1376, 7
    %v1378 = vsub.s32 4, %v1377
    %v1379 = vrot.slane %v1325, %v1378
    %v1394 = vsel %vm450, %v1061, 0
    %v1397 = vsel %vm450, %v1063, 0
    %v1400 = vsel %vm457, %v1311, 0
    %v1403 = vsel %vm457, %v1312, 0
    %v1406 = vsel %vm457, %v1313, 0
    %v1409 = vsel %vm457, %v1314, 0
    %v1412 = vsel %vm457, %v1315, 0
    %v1415 = vsel %vm457, %v1316, 0
    %v1418 = vsel %vm457, %v1317, 0
    %v1421 = vsel %vm457, %v1318, 0
    %v1424 = vsel %vm457, %v1319, 0
    %v1427 = vsel %vm457, %v1320, 0
    %v1430 = vsel %vm457, %v1321, 0
    %v1433 = vsel %vm457, %v1322, 0
    %v1436 = vsel %vm457, %v1323, 0
    %1438 = vmatprep.subr.mxu0 %v1260
    %1439 = vmatpush1.msra.mxu0 %v1259
    %1440 = vmatprep.subr.mxu0 %v1247
    %1441 = vmatpush1.msra.mxu0 %v1246
    %1442 = vmatprep.subr.mxu0 %v1234
    %1443 = vmatpush1.msra.mxu0 %v1233
    %1444 = vmatprep.subr.mxu0 %v1221
    %1445 = vmatpush1.msra.mxu0 %v1220
    %1446 = vmatprep.subr.mxu0 %v1208
    %1447 = vmatpush1.msra.mxu0 %v1207
    %1448 = vmatprep.subr.mxu0 %v1195
    %1449 = vmatpush1.msra.mxu0 %v1194
    %1450 = vmatprep.subr.mxu0 %v1182
    %1451 = vmatpush1.msra.mxu0 %v1181
    %1452 = vmatprep.subr.mxu0 %v1169
    %1453 = vmatpush1.msra.mxu0 %v1168
    %1454 = vmatprep.subr.mxu0 %v1156
    %1455 = vmatpush1.msra.mxu0 %v1155
    %1456 = vmatprep.subr.mxu0 %v1143
    %1457 = vmatpush1.msra.mxu0 %v1142
    %1458 = vmatprep.subr.mxu0 %v1130
    %1459 = vmatpush1.msra.mxu0 %v1129
    %1460 = vmatprep.subr.mxu0 %v1117
    %1461 = vmatpush1.msra.mxu0 %v1116
    %1462 = vmatprep.subr.mxu0 %v1104
    %1463 = vmatpush1.msra.mxu0 %v1103
    %1464 = vmatprep.subr.mxu0 %v1091
    %1465 = vmatpush1.msra.mxu0 %v1090
    %1466 = vmatprep.subr.mxu0 %v1078
    %1467 = vmatpush1.msra.mxu0 %v1077
    %1468 = vmatprep.subr.mxu0 %v1065
    %1469 = vmatpush1.msra.mxu0 %v1064
    %1470 = vmatprep.subr.mxu0 0.0
    %1471 = vmatpush2.msra.mxu0 0.0
    %1472 = vmatprep.subr.mxu0 0.0
    %1473 = vmatpush2.msra.mxu0 0.0
    %1474 = vmatprep.subr.mxu0 0.0
    %1475 = vmatpush2.msra.mxu0 0.0
    %1476 = vmatprep.subr.mxu0 0.0
    %1477 = vmatpush2.msra.mxu0 0.0
    %1478 = vmatprep.subr.mxu0 0.0
    %1479 = vmatpush2.msra.mxu0 0.0
    %1480 = vmatprep.subr.mxu0 0.0
    %1481 = vmatpush2.msra.mxu0 0.0
    %1482 = vmatprep.subr.mxu0 0.0
    %1483 = vmatpush2.msra.mxu0 0.0
    %1484 = vmatprep.subr.mxu0 0.0
    %1485 = vmatpush2.msra.mxu0 0.0
    %1486 = vmatprep.subr.mxu0 0.0
    %1487 = vmatpush2.msra.mxu0 0.0
    %1488 = vmatprep.subr.mxu0 0.0
    %1489 = vmatpush2.msra.mxu0 0.0
    %1490 = vmatprep.subr.mxu0 0.0
    %1491 = vmatpush2.msra.mxu0 0.0
    %1492 = vmatprep.subr.mxu0 0.0
    %1493 = vmatpush2.msra.mxu0 0.0
    %1494 = vmatprep.subr.mxu0 %v1403
    %1495 = vmatpush2.msra.mxu0 %v1400
    %1496 = vmatprep.subr.mxu0 %v1299
    %1497 = vmatpush2.msra.mxu0 %v1298
    %1498 = vmatprep.subr.mxu0 %v1286
    %1499 = vmatpush2.msra.mxu0 %v1285
    %1500 = vmatprep.subr.mxu0 %v1273
    %1501 = vmatpush2.msra.mxu0 %v1272
    %1502 = vmatprep.mubr.f32.mxu0 %v1394
    %1503 = vmatmul.mubr.f32.gmra.mxu0 %v1060
    %v1504 = vpop.f32.mrf.mxu0
    %v1505 = vadd.f32 %v1331, %v1504
    %v1506 = vpop.f32.mrf.mxu0
    %v1507 = vadd.f32 %v1335, %v1506
    %1508 = vmatprep.mubr.f32.mxu0 %v1397
    %1509 = vmatmul.mubr.f32.gmra.mxu0 %v1062
    %v1510 = vpop.f32.mrf.mxu0
    %v1511 = vadd.f32 %v1331, %v1510
    %v1512 = vpop.f32.mrf.mxu0
    %v1513 = vadd.f32 %v1335, %v1512
    %1514 = vdwg.mxu0
    %1515 = vmatprep.subr.mxu0 %v1262
    %1516 = vmatpush1.msra.mxu0 %v1261
    %1517 = vmatprep.subr.mxu0 %v1249
    %1518 = vmatpush1.msra.mxu0 %v1248
    %1519 = vmatprep.subr.mxu0 %v1236
    %1520 = vmatpush1.msra.mxu0 %v1235
    %1521 = vmatprep.subr.mxu0 %v1223
    %1522 = vmatpush1.msra.mxu0 %v1222
    %1523 = vmatprep.subr.mxu0 %v1210
    %1524 = vmatpush1.msra.mxu0 %v1209
    %1525 = vmatprep.subr.mxu0 %v1197
    %1526 = vmatpush1.msra.mxu0 %v1196
    %1527 = vmatprep.subr.mxu0 %v1184
    %1528 = vmatpush1.msra.mxu0 %v1183
    %1529 = vmatprep.subr.mxu0 %v1171
    %1530 = vmatpush1.msra.mxu0 %v1170
    %1531 = vmatprep.subr.mxu0 %v1158
    %1532 = vmatpush1.msra.mxu0 %v1157
    %1533 = vmatprep.subr.mxu0 %v1145
    %1534 = vmatpush1.msra.mxu0 %v1144
    %1535 = vmatprep.subr.mxu0 %v1132
    %1536 = vmatpush1.msra.mxu0 %v1131
    %1537 = vmatprep.subr.mxu0 %v1119
    %1538 = vmatpush1.msra.mxu0 %v1118
    %1539 = vmatprep.subr.mxu0 %v1106
    %1540 = vmatpush1.msra.mxu0 %v1105
    %1541 = vmatprep.subr.mxu0 %v1093
    %1542 = vmatpush1.msra.mxu0 %v1092
    %1543 = vmatprep.subr.mxu0 %v1080
    %1544 = vmatpush1.msra.mxu0 %v1079
    %1545 = vmatprep.subr.mxu0 %v1067
    %1546 = vmatpush1.msra.mxu0 %v1066
    %1547 = vmatprep.subr.mxu0 0.0
    %1548 = vmatpush2.msra.mxu0 0.0
    %1549 = vmatprep.subr.mxu0 0.0
    %1550 = vmatpush2.msra.mxu0 0.0
    %1551 = vmatprep.subr.mxu0 0.0
    %1552 = vmatpush2.msra.mxu0 0.0
    %1553 = vmatprep.subr.mxu0 0.0
    %1554 = vmatpush2.msra.mxu0 0.0
    %1555 = vmatprep.subr.mxu0 0.0
    %1556 = vmatpush2.msra.mxu0 0.0
    %1557 = vmatprep.subr.mxu0 0.0
    %1558 = vmatpush2.msra.mxu0 0.0
    %1559 = vmatprep.subr.mxu0 0.0
    %1560 = vmatpush2.msra.mxu0 0.0
    %1561 = vmatprep.subr.mxu0 0.0
    %1562 = vmatpush2.msra.mxu0 0.0
    %1563 = vmatprep.subr.mxu0 0.0
    %1564 = vmatpush2.msra.mxu0 0.0
    %1565 = vmatprep.subr.mxu0 0.0
    %1566 = vmatpush2.msra.mxu0 0.0
    %1567 = vmatprep.subr.mxu0 0.0
    %1568 = vmatpush2.msra.mxu0 0.0
    %1569 = vmatprep.subr.mxu0 0.0
    %1570 = vmatpush2.msra.mxu0 0.0
    %1571 = vmatprep.subr.mxu0 %v1409
    %1572 = vmatpush2.msra.mxu0 %v1406
    %1573 = vmatprep.subr.mxu0 %v1301
    %1574 = vmatpush2.msra.mxu0 %v1300
    %1575 = vmatprep.subr.mxu0 %v1288
    %1576 = vmatpush2.msra.mxu0 %v1287
    %1577 = vmatprep.subr.mxu0 %v1275
    %1578 = vmatpush2.msra.mxu0 %v1274
    %1579 = vmatprep.mubr.f32.mxu0 %v1394
    %1580 = vmatmul.mubr.f32.gmra.mxu0 %v1060
    %v1581 = vpop.f32.mrf.mxu0
    %v1582 = vadd.f32 %v1339, %v1581
    %v1583 = vpop.f32.mrf.mxu0
    %v1584 = vadd.f32 %v1343, %v1583
    %1585 = vmatprep.mubr.f32.mxu0 %v1397
    %1586 = vmatmul.mubr.f32.gmra.mxu0 %v1062
    %v1587 = vpop.f32.mrf.mxu0
    %v1588 = vadd.f32 %v1339, %v1587
    %v1589 = vpop.f32.mrf.mxu0
    %v1590 = vadd.f32 %v1343, %v1589
    %1591 = vdwg.mxu0
    %1592 = vmatprep.subr.mxu0 %v1264
    %1593 = vmatpush1.msra.mxu0 %v1263
    %1594 = vmatprep.subr.mxu0 %v1251
    %1595 = vmatpush1.msra.mxu0 %v1250
    %1596 = vmatprep.subr.mxu0 %v1238
    %1597 = vmatpush1.msra.mxu0 %v1237
    %1598 = vmatprep.subr.mxu0 %v1225
    %1599 = vmatpush1.msra.mxu0 %v1224
    %1600 = vmatprep.subr.mxu0 %v1212
    %1601 = vmatpush1.msra.mxu0 %v1211
    %1602 = vmatprep.subr.mxu0 %v1199
    %1603 = vmatpush1.msra.mxu0 %v1198
    %1604 = vmatprep.subr.mxu0 %v1186
    %1605 = vmatpush1.msra.mxu0 %v1185
    %1606 = vmatprep.subr.mxu0 %v1173
    %1607 = vmatpush1.msra.mxu0 %v1172
    %1608 = vmatprep.subr.mxu0 %v1160
    %1609 = vmatpush1.msra.mxu0 %v1159
    %1610 = vmatprep.subr.mxu0 %v1147
    %1611 = vmatpush1.msra.mxu0 %v1146
    %1612 = vmatprep.subr.mxu0 %v1134
    %1613 = vmatpush1.msra.mxu0 %v1133
    %1614 = vmatprep.subr.mxu0 %v1121
    %1615 = vmatpush1.msra.mxu0 %v1120
    %1616 = vmatprep.subr.mxu0 %v1108
    %1617 = vmatpush1.msra.mxu0 %v1107
    %1618 = vmatprep.subr.mxu0 %v1095
    %1619 = vmatpush1.msra.mxu0 %v1094
    %1620 = vmatprep.subr.mxu0 %v1082
    %1621 = vmatpush1.msra.mxu0 %v1081
    %1622 = vmatprep.subr.mxu0 %v1069
    %1623 = vmatpush1.msra.mxu0 %v1068
    %1624 = vmatprep.subr.mxu0 0.0
    %1625 = vmatpush2.msra.mxu0 0.0
    %1626 = vmatprep.subr.mxu0 0.0
    %1627 = vmatpush2.msra.mxu0 0.0
    %1628 = vmatprep.subr.mxu0 0.0
    %1629 = vmatpush2.msra.mxu0 0.0
    %1630 = vmatprep.subr.mxu0 0.0
    %1631 = vmatpush2.msra.mxu0 0.0
    %1632 = vmatprep.subr.mxu0 0.0
    %1633 = vmatpush2.msra.mxu0 0.0
    %1634 = vmatprep.subr.mxu0 0.0
    %1635 = vmatpush2.msra.mxu0 0.0
    %1636 = vmatprep.subr.mxu0 0.0
    %1637 = vmatpush2.msra.mxu0 0.0
    %1638 = vmatprep.subr.mxu0 0.0
    %1639 = vmatpush2.msra.mxu0 0.0
    %1640 = vmatprep.subr.mxu0 0.0
    %1641 = vmatpush2.msra.mxu0 0.0
    %1642 = vmatprep.subr.mxu0 0.0
    %1643 = vmatpush2.msra.mxu0 0.0
    %1644 = vmatprep.subr.mxu0 0.0
    %1645 = vmatpush2.msra.mxu0 0.0
    %1646 = vmatprep.subr.mxu0 0.0
    %1647 = vmatpush2.msra.mxu0 0.0
    %1648 = vmatprep.subr.mxu0 %v1415
    %1649 = vmatpush2.msra.mxu0 %v1412
    %1650 = vmatprep.subr.mxu0 %v1303
    %1651 = vmatpush2.msra.mxu0 %v1302
    %1652 = vmatprep.subr.mxu0 %v1290
    %1653 = vmatpush2.msra.mxu0 %v1289
    %1654 = vmatprep.subr.mxu0 %v1277
    %1655 = vmatpush2.msra.mxu0 %v1276
    %1656 = vmatprep.mubr.f32.mxu0 %v1394
    %1657 = vmatmul.mubr.f32.gmra.mxu0 %v1060
    %v1658 = vpop.f32.mrf.mxu0
    %v1659 = vadd.f32 %v1347, %v1658
    %v1660 = vpop.f32.mrf.mxu0
    %v1661 = vadd.f32 %v1351, %v1660
    %1662 = vmatprep.mubr.f32.mxu0 %v1397
    %1663 = vmatmul.mubr.f32.gmra.mxu0 %v1062
    %v1664 = vpop.f32.mrf.mxu0
    %v1665 = vadd.f32 %v1347, %v1664
    %v1666 = vpop.f32.mrf.mxu0
    %v1667 = vadd.f32 %v1351, %v1666
    %1668 = vdwg.mxu0
    %1669 = vmatprep.subr.mxu0 %v1266
    %1670 = vmatpush1.msra.mxu0 %v1265
    %1671 = vmatprep.subr.mxu0 %v1253
    %1672 = vmatpush1.msra.mxu0 %v1252
    %1673 = vmatprep.subr.mxu0 %v1240
    %1674 = vmatpush1.msra.mxu0 %v1239
    %1675 = vmatprep.subr.mxu0 %v1227
    %1676 = vmatpush1.msra.mxu0 %v1226
    %1677 = vmatprep.subr.mxu0 %v1214
    %1678 = vmatpush1.msra.mxu0 %v1213
    %1679 = vmatprep.subr.mxu0 %v1201
    %1680 = vmatpush1.msra.mxu0 %v1200
    %1681 = vmatprep.subr.mxu0 %v1188
    %1682 = vmatpush1.msra.mxu0 %v1187
    %1683 = vmatprep.subr.mxu0 %v1175
    %1684 = vmatpush1.msra.mxu0 %v1174
    %1685 = vmatprep.subr.mxu0 %v1162
    %1686 = vmatpush1.msra.mxu0 %v1161
    %1687 = vmatprep.subr.mxu0 %v1149
    %1688 = vmatpush1.msra.mxu0 %v1148
    %1689 = vmatprep.subr.mxu0 %v1136
    %1690 = vmatpush1.msra.mxu0 %v1135
    %1691 = vmatprep.subr.mxu0 %v1123
    %1692 = vmatpush1.msra.mxu0 %v1122
    %1693 = vmatprep.subr.mxu0 %v1110
    %1694 = vmatpush1.msra.mxu0 %v1109
    %1695 = vmatprep.subr.mxu0 %v1097
    %1696 = vmatpush1.msra.mxu0 %v1096
    %1697 = vmatprep.subr.mxu0 %v1084
    %1698 = vmatpush1.msra.mxu0 %v1083
    %1699 = vmatprep.subr.mxu0 %v1071
    %1700 = vmatpush1.msra.mxu0 %v1070
    %1701 = vmatprep.subr.mxu0 0.0
    %1702 = vmatpush2.msra.mxu0 0.0
    %1703 = vmatprep.subr.mxu0 0.0
    %1704 = vmatpush2.msra.mxu0 0.0
    %1705 = vmatprep.subr.mxu0 0.0
    %1706 = vmatpush2.msra.mxu0 0.0
    %1707 = vmatprep.subr.mxu0 0.0
    %1708 = vmatpush2.msra.mxu0 0.0
    %1709 = vmatprep.subr.mxu0 0.0
    %1710 = vmatpush2.msra.mxu0 0.0
    %1711 = vmatprep.subr.mxu0 0.0
    %1712 = vmatpush2.msra.mxu0 0.0
    %1713 = vmatprep.subr.mxu0 0.0
    %1714 = vmatpush2.msra.mxu0 0.0
    %1715 = vmatprep.subr.mxu0 0.0
    %1716 = vmatpush2.msra.mxu0 0.0
    %1717 = vmatprep.subr.mxu0 0.0
    %1718 = vmatpush2.msra.mxu0 0.0
    %1719 = vmatprep.subr.mxu0 0.0
    %1720 = vmatpush2.msra.mxu0 0.0
    %1721 = vmatprep.subr.mxu0 0.0
    %1722 = vmatpush2.msra.mxu0 0.0
    %1723 = vmatprep.subr.mxu0 0.0
    %1724 = vmatpush2.msra.mxu0 0.0
    %1725 = vmatprep.subr.mxu0 %v1421
    %1726 = vmatpush2.msra.mxu0 %v1418
    %1727 = vmatprep.subr.mxu0 %v1305
    %1728 = vmatpush2.msra.mxu0 %v1304
    %1729 = vmatprep.subr.mxu0 %v1292
    %1730 = vmatpush2.msra.mxu0 %v1291
    %1731 = vmatprep.subr.mxu0 %v1279
    %1732 = vmatpush2.msra.mxu0 %v1278
    %1733 = vmatprep.mubr.f32.mxu0 %v1394
    %1734 = vmatmul.mubr.f32.gmra.mxu0 %v1060
    %v1735 = vpop.f32.mrf.mxu0
    %v1736 = vadd.f32 %v1355, %v1735
    %v1737 = vpop.f32.mrf.mxu0
    %v1738 = vadd.f32 %v1359, %v1737
    %1739 = vmatprep.mubr.f32.mxu0 %v1397
    %1740 = vmatmul.mubr.f32.gmra.mxu0 %v1062
    %v1741 = vpop.f32.mrf.mxu0
    %v1742 = vadd.f32 %v1355, %v1741
    %v1743 = vpop.f32.mrf.mxu0
    %v1744 = vadd.f32 %v1359, %v1743
    %1745 = vdwg.mxu0
    %1746 = vmatprep.subr.mxu0 %v1268
    %1747 = vmatpush1.msra.mxu0 %v1267
    %1748 = vmatprep.subr.mxu0 %v1255
    %1749 = vmatpush1.msra.mxu0 %v1254
    %1750 = vmatprep.subr.mxu0 %v1242
    %1751 = vmatpush1.msra.mxu0 %v1241
    %1752 = vmatprep.subr.mxu0 %v1229
    %1753 = vmatpush1.msra.mxu0 %v1228
    %1754 = vmatprep.subr.mxu0 %v1216
    %1755 = vmatpush1.msra.mxu0 %v1215
    %1756 = vmatprep.subr.mxu0 %v1203
    %1757 = vmatpush1.msra.mxu0 %v1202
    %1758 = vmatprep.subr.mxu0 %v1190
    %1759 = vmatpush1.msra.mxu0 %v1189
    %1760 = vmatprep.subr.mxu0 %v1177
    %1761 = vmatpush1.msra.mxu0 %v1176
    %1762 = vmatprep.subr.mxu0 %v1164
    %1763 = vmatpush1.msra.mxu0 %v1163
    %1764 = vmatprep.subr.mxu0 %v1151
    %1765 = vmatpush1.msra.mxu0 %v1150
    %1766 = vmatprep.subr.mxu0 %v1138
    %1767 = vmatpush1.msra.mxu0 %v1137
    %1768 = vmatprep.subr.mxu0 %v1125
    %1769 = vmatpush1.msra.mxu0 %v1124
    %1770 = vmatprep.subr.mxu0 %v1112
    %1771 = vmatpush1.msra.mxu0 %v1111
    %1772 = vmatprep.subr.mxu0 %v1099
    %1773 = vmatpush1.msra.mxu0 %v1098
    %1774 = vmatprep.subr.mxu0 %v1086
    %1775 = vmatpush1.msra.mxu0 %v1085
    %1776 = vmatprep.subr.mxu0 %v1073
    %1777 = vmatpush1.msra.mxu0 %v1072
    %1778 = vmatprep.subr.mxu0 0.0
    %1779 = vmatpush2.msra.mxu0 0.0
    %1780 = vmatprep.subr.mxu0 0.0
    %1781 = vmatpush2.msra.mxu0 0.0
    %1782 = vmatprep.subr.mxu0 0.0
    %1783 = vmatpush2.msra.mxu0 0.0
    %1784 = vmatprep.subr.mxu0 0.0
    %1785 = vmatpush2.msra.mxu0 0.0
    %1786 = vmatprep.subr.mxu0 0.0
    %1787 = vmatpush2.msra.mxu0 0.0
    %1788 = vmatprep.subr.mxu0 0.0
    %1789 = vmatpush2.msra.mxu0 0.0
    %1790 = vmatprep.subr.mxu0 0.0
    %1791 = vmatpush2.msra.mxu0 0.0
    %1792 = vmatprep.subr.mxu0 0.0
    %1793 = vmatpush2.msra.mxu0 0.0
    %1794 = vmatprep.subr.mxu0 0.0
    %1795 = vmatpush2.msra.mxu0 0.0
    %1796 = vmatprep.subr.mxu0 0.0
    %1797 = vmatpush2.msra.mxu0 0.0
    %1798 = vmatprep.subr.mxu0 0.0
    %1799 = vmatpush2.msra.mxu0 0.0
    %1800 = vmatprep.subr.mxu0 0.0
    %1801 = vmatpush2.msra.mxu0 0.0
    %1802 = vmatprep.subr.mxu0 %v1427
    %1803 = vmatpush2.msra.mxu0 %v1424
    %1804 = vmatprep.subr.mxu0 %v1307
    %1805 = vmatpush2.msra.mxu0 %v1306
    %1806 = vmatprep.subr.mxu0 %v1294
    %1807 = vmatpush2.msra.mxu0 %v1293
    %1808 = vmatprep.subr.mxu0 %v1281
    %1809 = vmatpush2.msra.mxu0 %v1280
    %1810 = vmatprep.mubr.f32.mxu0 %v1394
    %1811 = vmatmul.mubr.f32.gmra.mxu0 %v1060
    %v1812 = vpop.f32.mrf.mxu0
    %v1813 = vadd.f32 %v1363, %v1812
    %v1814 = vpop.f32.mrf.mxu0
    %v1815 = vadd.f32 %v1367, %v1814
    %1816 = vmatprep.mubr.f32.mxu0 %v1397
    %1817 = vmatmul.mubr.f32.gmra.mxu0 %v1062
    %v1818 = vpop.f32.mrf.mxu0
    %v1819 = vadd.f32 %v1363, %v1818
    %v1820 = vpop.f32.mrf.mxu0
    %v1821 = vadd.f32 %v1367, %v1820
    %1822 = vdwg.mxu0
    %1823 = vmatprep.subr.mxu0 %v1270
    %1824 = vmatpush1.msra.mxu0 %v1269
    %1825 = vmatprep.subr.mxu0 %v1257
    %1826 = vmatpush1.msra.mxu0 %v1256
    %1827 = vmatprep.subr.mxu0 %v1244
    %1828 = vmatpush1.msra.mxu0 %v1243
    %1829 = vmatprep.subr.mxu0 %v1231
    %1830 = vmatpush1.msra.mxu0 %v1230
    %1831 = vmatprep.subr.mxu0 %v1218
    %1832 = vmatpush1.msra.mxu0 %v1217
    %1833 = vmatprep.subr.mxu0 %v1205
    %1834 = vmatpush1.msra.mxu0 %v1204
    %1835 = vmatprep.subr.mxu0 %v1192
    %1836 = vmatpush1.msra.mxu0 %v1191
    %1837 = vmatprep.subr.mxu0 %v1179
    %1838 = vmatpush1.msra.mxu0 %v1178
    %1839 = vmatprep.subr.mxu0 %v1166
    %1840 = vmatpush1.msra.mxu0 %v1165
    %1841 = vmatprep.subr.mxu0 %v1153
    %1842 = vmatpush1.msra.mxu0 %v1152
    %1843 = vmatprep.subr.mxu0 %v1140
    %1844 = vmatpush1.msra.mxu0 %v1139
    %1845 = vmatprep.subr.mxu0 %v1127
    %1846 = vmatpush1.msra.mxu0 %v1126
    %1847 = vmatprep.subr.mxu0 %v1114
    %1848 = vmatpush1.msra.mxu0 %v1113
    %1849 = vmatprep.subr.mxu0 %v1101
    %1850 = vmatpush1.msra.mxu0 %v1100
    %1851 = vmatprep.subr.mxu0 %v1088
    %1852 = vmatpush1.msra.mxu0 %v1087
    %1853 = vmatprep.subr.mxu0 %v1075
    %1854 = vmatpush1.msra.mxu0 %v1074
    %1855 = vmatprep.subr.mxu0 0.0
    %1856 = vmatpush2.msra.mxu0 0.0
    %1857 = vmatprep.subr.mxu0 0.0
    %1858 = vmatpush2.msra.mxu0 0.0
    %1859 = vmatprep.subr.mxu0 0.0
    %1860 = vmatpush2.msra.mxu0 0.0
    %1861 = vmatprep.subr.mxu0 0.0
    %1862 = vmatpush2.msra.mxu0 0.0
    %1863 = vmatprep.subr.mxu0 0.0
    %1864 = vmatpush2.msra.mxu0 0.0
    %1865 = vmatprep.subr.mxu0 0.0
    %1866 = vmatpush2.msra.mxu0 0.0
    %1867 = vmatprep.subr.mxu0 0.0
    %1868 = vmatpush2.msra.mxu0 0.0
    %1869 = vmatprep.subr.mxu0 0.0
    %1870 = vmatpush2.msra.mxu0 0.0
    %1871 = vmatprep.subr.mxu0 0.0
    %1872 = vmatpush2.msra.mxu0 0.0
    %1873 = vmatprep.subr.mxu0 0.0
    %1874 = vmatpush2.msra.mxu0 0.0
    %1875 = vmatprep.subr.mxu0 0.0
    %1876 = vmatpush2.msra.mxu0 0.0
    %1877 = vmatprep.subr.mxu0 0.0
    %1878 = vmatpush2.msra.mxu0 0.0
    %1879 = vmatprep.subr.mxu0 %v1433
    %1880 = vmatpush2.msra.mxu0 %v1430
    %1881 = vmatprep.subr.mxu0 %v1309
    %1882 = vmatpush2.msra.mxu0 %v1308
    %1883 = vmatprep.subr.mxu0 %v1296
    %1884 = vmatpush2.msra.mxu0 %v1295
    %1885 = vmatprep.subr.mxu0 %v1283
    %1886 = vmatpush2.msra.mxu0 %v1282
    %1887 = vmatprep.mubr.f32.mxu0 %v1394
    %1888 = vmatmul.mubr.f32.gmra.mxu0 %v1060
    %v1889 = vpop.f32.mrf.mxu0
    %v1890 = vadd.f32 %v1371, %v1889
    %v1891 = vpop.f32.mrf.mxu0
    %v1892 = vadd.f32 %v1375, %v1891
    %1893 = vmatprep.mubr.f32.mxu0 %v1397
    %1894 = vmatmul.mubr.f32.gmra.mxu0 %v1062
    %v1895 = vpop.f32.mrf.mxu0
    %v1896 = vadd.f32 %v1371, %v1895
    %v1897 = vpop.f32.mrf.mxu0
    %v1898 = vadd.f32 %v1375, %v1897
    %1899 = vdwg.mxu0
    %1900 = vmatprep.subr.mxu0 0.0
    %1901 = vmatpush1.msra.mxu0 %v1271
    %1902 = vmatprep.subr.mxu0 0.0
    %1903 = vmatpush1.msra.mxu0 %v1258
    %1904 = vmatprep.subr.mxu0 0.0
    %1905 = vmatpush1.msra.mxu0 %v1245
    %1906 = vmatprep.subr.mxu0 0.0
    %1907 = vmatpush1.msra.mxu0 %v1232
    %1908 = vmatprep.subr.mxu0 0.0
    %1909 = vmatpush1.msra.mxu0 %v1219
    %1910 = vmatprep.subr.mxu0 0.0
    %1911 = vmatpush1.msra.mxu0 %v1206
    %1912 = vmatprep.subr.mxu0 0.0
    %1913 = vmatpush1.msra.mxu0 %v1193
    %1914 = vmatprep.subr.mxu0 0.0
    %1915 = vmatpush1.msra.mxu0 %v1180
    %1916 = vmatprep.subr.mxu0 0.0
    %1917 = vmatpush1.msra.mxu0 %v1167
    %1918 = vmatprep.subr.mxu0 0.0
    %1919 = vmatpush1.msra.mxu0 %v1154
    %1920 = vmatprep.subr.mxu0 0.0
    %1921 = vmatpush1.msra.mxu0 %v1141
    %1922 = vmatprep.subr.mxu0 0.0
    %1923 = vmatpush1.msra.mxu0 %v1128
    %1924 = vmatprep.subr.mxu0 0.0
    %1925 = vmatpush1.msra.mxu0 %v1115
    %1926 = vmatprep.subr.mxu0 0.0
    %1927 = vmatpush1.msra.mxu0 %v1102
    %1928 = vmatprep.subr.mxu0 0.0
    %1929 = vmatpush1.msra.mxu0 %v1089
    %1930 = vmatprep.subr.mxu0 0.0
    %1931 = vmatpush1.msra.mxu0 %v1076
    %1932 = vmatprep.subr.mxu0 0.0
    %1933 = vmatpush2.msra.mxu0 0.0
    %1934 = vmatprep.subr.mxu0 0.0
    %1935 = vmatpush2.msra.mxu0 0.0
    %1936 = vmatprep.subr.mxu0 0.0
    %1937 = vmatpush2.msra.mxu0 0.0
    %1938 = vmatprep.subr.mxu0 0.0
    %1939 = vmatpush2.msra.mxu0 0.0
    %1940 = vmatprep.subr.mxu0 0.0
    %1941 = vmatpush2.msra.mxu0 0.0
    %1942 = vmatprep.subr.mxu0 0.0
    %1943 = vmatpush2.msra.mxu0 0.0
    %1944 = vmatprep.subr.mxu0 0.0
    %1945 = vmatpush2.msra.mxu0 0.0
    %1946 = vmatprep.subr.mxu0 0.0
    %1947 = vmatpush2.msra.mxu0 0.0
    %1948 = vmatprep.subr.mxu0 0.0
    %1949 = vmatpush2.msra.mxu0 0.0
    %1950 = vmatprep.subr.mxu0 0.0
    %1951 = vmatpush2.msra.mxu0 0.0
    %1952 = vmatprep.subr.mxu0 0.0
    %1953 = vmatpush2.msra.mxu0 0.0
    %1954 = vmatprep.subr.mxu0 0.0
    %1955 = vmatpush2.msra.mxu0 0.0
    %1956 = vmatprep.subr.mxu0 0.0
    %1957 = vmatpush2.msra.mxu0 %v1436
    %1958 = vmatprep.subr.mxu0 0.0
    %1959 = vmatpush2.msra.mxu0 %v1310
    %1960 = vmatprep.subr.mxu0 0.0
    %1961 = vmatpush2.msra.mxu0 %v1297
    %1962 = vmatprep.subr.mxu0 0.0
    %1963 = vmatpush2.msra.mxu0 %v1284
    %1964 = vmatprep.mubr.f32.mxu0 %v1394
    %1965 = vmatmul.mubr.f32.gmra.mxu0 %v1060
    %v1966 = vpop.f32.mrf.mxu0
    %v1967 = vadd.f32 %v1379, %v1966
    %v1968 = vpop.f32.mrf.mxu0
    %1969 = vmatprep.mubr.f32.mxu0 %v1397
    %1970 = vmatmul.mubr.f32.gmra.mxu0 %v1062
    %v1971 = vpop.f32.mrf.mxu0
    %v1972 = vadd.f32 %v1379, %v1971
    %v1973 = vpop.f32.mrf.mxu0
    %1974 = vdwg.mxu0
    %v1975 = vmax.f32 %v1505, 0.0
    %v1976 = vmax.f32 %v1507, 0.0
    %v1977 = vmax.f32 %v1582, 0.0
    %v1978 = vmax.f32 %v1584, 0.0
    %v1979 = vmax.f32 %v1659, 0.0
    %v1980 = vmax.f32 %v1661, 0.0
    %v1981 = vmax.f32 %v1736, 0.0
    %v1982 = vmax.f32 %v1738, 0.0
    %v1983 = vmax.f32 %v1813, 0.0
    %v1984 = vmax.f32 %v1815, 0.0
    %v1985 = vmax.f32 %v1890, 0.0
    %v1986 = vmax.f32 %v1892, 0.0
    %v1987 = vmax.f32 %v1967, 0.0
    %v1988 = vmax.f32 %v1511, 0.0
    %v1989 = vmax.f32 %v1513, 0.0
    %v1990 = vmax.f32 %v1588, 0.0
    %v1991 = vmax.f32 %v1590, 0.0
    %v1992 = vmax.f32 %v1665, 0.0
    %v1993 = vmax.f32 %v1667, 0.0
    %v1994 = vmax.f32 %v1742, 0.0
    %v1995 = vmax.f32 %v1744, 0.0
    %v1996 = vmax.f32 %v1819, 0.0
    %v1997 = vmax.f32 %v1821, 0.0
    %v1998 = vmax.f32 %v1896, 0.0
    %v1999 = vmax.f32 %v1898, 0.0
    %v2000 = vmax.f32 %v1972, 0.0
    %2001 = vst [vmem:[#allocation2] sm:$0xff] 0.0
    %2002 = vst [vmem:[#allocation2 + $0x8] sm:$0xff] 0.0
    %2003 = vst [vmem:[#allocation2 + $0x10] sm:$0xff] 0.0
    %2004 = vst [vmem:[#allocation2 + $0x18] sm:$0xff] 0.0
    %2005 = vst [vmem:[#allocation2 + $0x20] sm:$0xff] 0.0
    %2006 = vst [vmem:[#allocation2 + $0x28] sm:$0xff] 0.0
    %2007 = vst [vmem:[#allocation2 + $0x30] sm:$0xff] 0.0
    %2008 = vst [vmem:[#allocation2 + $0x38] sm:$0xff] 0.0
    %2009 = vst [vmem:[#allocation2 + $0x40] sm:$0xff] 0.0
    %2010 = vst [vmem:[#allocation2 + $0x48] sm:$0xff] 0.0
    %2011 = vst [vmem:[#allocation2 + $0x50] sm:$0xff] 0.0
    %2012 = vst [vmem:[#allocation2 + $0x58] sm:$0xff] 0.0
    %2013 = vst [vmem:[#allocation2 + $0x60] sm:$0xff] 0.0
    %2014 = vst [vmem:[#allocation2 + $0x68] sm:$0xff] 0.0
    %2015 = vst [vmem:[#allocation2 + $0x70] sm:$0xff] 0.0
    %2016 = vst [vmem:[#allocation2 + $0x78] sm:$0xff] 0.0
    %2017 = vst [vmem:[#allocation2 + $0x80] sm:$0xff] 0.0
    %2018 = vst [vmem:[#allocation2 + $0x88] sm:$0xff] 0.0
    %2019 = vst [vmem:[#allocation2 + $0x90] sm:$0xff] 0.0
    %2020 = vst [vmem:[#allocation2 + $0x98] sm:$0xff] 0.0
    %2021 = vst [vmem:[#allocation2 + $0xa0] sm:$0xff] 0.0
    %2022 = vst [vmem:[#allocation2 + $0xa8] sm:$0xff] 0.0
    %2023 = vst [vmem:[#allocation2 + $0xb0] sm:$0xff] 0.0
    %2024 = vst [vmem:[#allocation2 + $0xb8] sm:$0xff] 0.0
    %2025 = vst [vmem:[#allocation2 + $0xc0] sm:$0xff] 0.0
    %2026 = vst [vmem:[#allocation2 + $0xc8] sm:$0xff] 0.0
    %2027 = vst [vmem:[#allocation2 + $0xd0] sm:$0xff] 0.0
    %2028 = vst [vmem:[#allocation2 + $0xd8] sm:$0xff] 0.0
    %2029 = vst [vmem:[#allocation2 + $0xe0] sm:$0xff] 0.0
    %2030 = vst [vmem:[#allocation2 + $0xe8] sm:$0xff] 0.0
    %2031 = vst [vmem:[#allocation2 + $0xf0] sm:$0xff] 0.0
    %2032 = vst [vmem:[#allocation2 + $0xf8] sm:$0xff] 0.0
    %2033 = vst [vmem:[#allocation2 + $0x100] sm:$0xff] 0.0
    %2034 = vst [vmem:[#allocation2 + $0x108] sm:$0xff] 0.0
    %2035 = vst [vmem:[#allocation2 + $0x110] sm:$0xff] 0.0
    %2036 = vst [vmem:[#allocation2 + $0x118] sm:$0xff] 0.0
    %2037 = vst [vmem:[#allocation2 + $0x120] sm:$0xff] 0.0
    %2038 = vst [vmem:[#allocation2 + $0x128] sm:$0xff] 0.0
    %2039 = vst [vmem:[#allocation2 + $0x130] sm:$0xff] 0.0
    %2040 = vst [vmem:[#allocation2 + $0x138] sm:$0xff] 0.0
    %2041 = vst [vmem:[#allocation2 + $0x140] sm:$0xff] 0.0
    %2042 = vst [vmem:[#allocation2 + $0x148] sm:$0xff] 0.0
    %2043 = vst [vmem:[#allocation2 + $0x150] sm:$0xff] 0.0
    %2044 = vst [vmem:[#allocation2 + $0x158] sm:$0xff] 0.0
    %2045 = vst [vmem:[#allocation2 + $0x160] sm:$0xff] 0.0
    %2046 = vst [vmem:[#allocation2 + $0x168] sm:$0xff] 0.0
    %2047 = vst [vmem:[#allocation2 + $0x170] sm:$0xff] 0.0
    %2048 = vst [vmem:[#allocation2 + $0x178] sm:$0xff] 0.0
    %2049 = vst [vmem:[#allocation2 + $0x180] sm:$0xff] 0.0
    %2050 = vst [vmem:[#allocation2 + $0x188] sm:$0xff] 0.0
    %2051 = vst [vmem:[#allocation2 + $0x190] sm:$0xff] 0.0
    %2052 = vst [vmem:[#allocation2 + $0x198] sm:$0xff] 0.0
    %2053 = vst [vmem:[#allocation2] sm:$0xff] %v1034
    %2054 = vst [vmem:[#allocation2 + $0x8] sm:$0xff] %v1035
    %2055 = vst [vmem:[#allocation2 + $0x10] sm:$0xff] %v1036
    %2056 = vst [vmem:[#allocation2 + $0x18] sm:$0xff] %v1037
    %2057 = vst [vmem:[#allocation2 + $0x20] sm:$0xff] %v1038
    %2058 = vst [vmem:[#allocation2 + $0x28] sm:$0xff] %v1039
    %2059 = vst [vmem:[#allocation2 + $0x30] sm:$0xff] %v1040
    %2060 = vst [vmem:[#allocation2 + $0x38] sm:$0xff] %v1041
    %2061 = vst [vmem:[#allocation2 + $0x40] sm:$0xff] %v1042
    %2062 = vst [vmem:[#allocation2 + $0x48] sm:$0xff] %v1043
    %2063 = vst [vmem:[#allocation2 + $0x50] sm:$0xff] %v1044
    %2064 = vst [vmem:[#allocation2 + $0x58] sm:$0xff] %v1045
    %2065 = vst [vmem:[#allocation2 + $0x60] sm:$0xff] %v1046
    %2066 = vst [vmem:[#allocation2 + $0x68] sm:$0x3] %v1047
    %2067 = vst [vmem:[#allocation2 + $0x70] sm:$0x3] %v1048
    %2068 = vst [vmem:[#allocation2 + $0x78] sm:$0x3] %v1049
    %2069 = vst [vmem:[#allocation2 + $0x80] sm:$0x3] %v1050
    %2070 = vst [vmem:[#allocation2 + $0x88] sm:$0x3] %v1051
    %2071 = vst [vmem:[#allocation2 + $0x90] sm:$0x3] %v1052
    %2072 = vst [vmem:[#allocation2 + $0x98] sm:$0x3] %v1053
    %2073 = vst [vmem:[#allocation2 + $0xa0] sm:$0x3] %v1054
    %2074 = vst [vmem:[#allocation2 + $0xa8] sm:$0x3] %v1055
    %2075 = vst [vmem:[#allocation2 + $0xb0] sm:$0x3] %v1056
    %2076 = vst [vmem:[#allocation2 + $0xb8] sm:$0x3] %v1057
    %2077 = vst [vmem:[#allocation2 + $0xc0] sm:$0x3] %v1058
    %2078 = vst [vmem:[#allocation2 + $0xc8] sm:$0x3] %v1059
    %2079 = vst [vmem:[#allocation2 + $0xd0] sm:$0xff] %v1975
    %2080 = vst [vmem:[#allocation2 + $0xd8] sm:$0xff] %v1976
    %2081 = vst [vmem:[#allocation2 + $0xe0] sm:$0xff] %v1977
    %2082 = vst [vmem:[#allocation2 + $0xe8] sm:$0xff] %v1978
    %2083 = vst [vmem:[#allocation2 + $0xf0] sm:$0xff] %v1979
    %2084 = vst [vmem:[#allocation2 + $0xf8] sm:$0xff] %v1980
    %2085 = vst [vmem:[#allocation2 + $0x100] sm:$0xff] %v1981
    %2086 = vst [vmem:[#allocation2 + $0x108] sm:$0xff] %v1982
    %2087 = vst [vmem:[#allocation2 + $0x110] sm:$0xff] %v1983
    %2088 = vst [vmem:[#allocation2 + $0x118] sm:$0xff] %v1984
    %2089 = vst [vmem:[#allocation2 + $0x120] sm:$0xff] %v1985
    %2090 = vst [vmem:[#allocation2 + $0x128] sm:$0xff] %v1986
    %2091 = vst [vmem:[#allocation2 + $0x130] sm:$0xff] %v1987
    %2092 = vst [vmem:[#allocation2 + $0x138] sm:$0x1] %v1988
    %2093 = vst [vmem:[#allocation2 + $0x140] sm:$0x1] %v1989
    %2094 = vst [vmem:[#allocation2 + $0x148] sm:$0x1] %v1990
    %2095 = vst [vmem:[#allocation2 + $0x150] sm:$0x1] %v1991
    %2096 = vst [vmem:[#allocation2 + $0x158] sm:$0x1] %v1992
    %2097 = vst [vmem:[#allocation2 + $0x160] sm:$0x1] %v1993
    %2098 = vst [vmem:[#allocation2 + $0x168] sm:$0x1] %v1994
    %2099 = vst [vmem:[#allocation2 + $0x170] sm:$0x1] %v1995
    %2100 = vst [vmem:[#allocation2 + $0x178] sm:$0x1] %v1996
    %2101 = vst [vmem:[#allocation2 + $0x180] sm:$0x1] %v1997
    %2102 = vst [vmem:[#allocation2 + $0x188] sm:$0x1] %v1998
    %2103 = vst [vmem:[#allocation2 + $0x190] sm:$0x1] %v1999
    %2104 = vst [vmem:[#allocation2 + $0x198] sm:$0x1] %v2000
    %v2105 = vld [vmem:[%s6] sm:$0xff]
    %v2106 = vld [vmem:[%s6 + $0x8] sm:$0xff]
    %v2107 = vld [vmem:[%s6 + $0x10] sm:$0xff]
    %v2108 = vld [vmem:[%s6 + $0x18] sm:$0xff]
    %v2109 = vld [vmem:[%s6 + $0x20] sm:$0xff]
    %v2110 = vld [vmem:[%s6 + $0x28] sm:$0xff]
    %v2111 = vld [vmem:[%s6 + $0x30] sm:$0xff]
    %v2112 = vld [vmem:[%s6 + $0x38] sm:$0xff]
    %v2113 = vld [vmem:[#allocation2] sm:$0xff]
    %v2114 = vld [vmem:[#allocation2 + $0x8] sm:$0xff]
    %v2115 = vld [vmem:[#allocation2 + $0x10] sm:$0xff]
    %v2116 = vld [vmem:[#allocation2 + $0x18] sm:$0xff]
    %v2117 = vld [vmem:[#allocation2 + $0x20] sm:$0xff]
    %v2118 = vld [vmem:[#allocation2 + $0x28] sm:$0xff]
    %v2119 = vld [vmem:[#allocation2 + $0x30] sm:$0xff]
    %v2120 = vld [vmem:[#allocation2 + $0x38] sm:$0xff]
    %v2121 = vld [vmem:[#allocation2 + $0x40] sm:$0xff]
    %v2122 = vld [vmem:[#allocation2 + $0x48] sm:$0xff]
    %v2123 = vld [vmem:[#allocation2 + $0x50] sm:$0xff]
    %v2124 = vld [vmem:[#allocation2 + $0x58] sm:$0xff]
    %v2125 = vld [vmem:[#allocation2 + $0x60] sm:$0xff]
    %v2126 = vld [vmem:[#allocation2 + $0x68] sm:$0xff]
    %v2127 = vld [vmem:[#allocation2 + $0x70] sm:$0xff]
    %v2128 = vld [vmem:[#allocation2 + $0x78] sm:$0xff]
    %v2129 = vld [vmem:[#allocation2 + $0x80] sm:$0xff]
    %v2130 = vld [vmem:[#allocation2 + $0x88] sm:$0xff]
    %v2131 = vld [vmem:[#allocation2 + $0x90] sm:$0xff]
    %v2132 = vld [vmem:[#allocation2 + $0x98] sm:$0xff]
    %v2133 = vld [vmem:[#allocation2 + $0xa0] sm:$0xff]
    %v2134 = vld [vmem:[#allocation2 + $0xa8] sm:$0xff]
    %v2135 = vld [vmem:[#allocation2 + $0xb0] sm:$0xff]
    %v2136 = vld [vmem:[#allocation2 + $0xb8] sm:$0xff]
    %v2137 = vld [vmem:[#allocation2 + $0xc0] sm:$0xff]
    %v2138 = vld [vmem:[#allocation2 + $0xc8] sm:$0xff]
    %v2139 = vld [vmem:[#allocation2 + $0xd0] sm:$0xff]
    %v2140 = vld [vmem:[#allocation2 + $0xd8] sm:$0xff]
    %v2141 = vld [vmem:[#allocation2 + $0xe0] sm:$0xff]
    %v2142 = vld [vmem:[#allocation2 + $0xe8] sm:$0xff]
    %v2143 = vld [vmem:[#allocation2 + $0xf0] sm:$0xff]
    %v2144 = vld [vmem:[#allocation2 + $0xf8] sm:$0xff]
    %v2145 = vld [vmem:[#allocation2 + $0x100] sm:$0xff]
    %v2146 = vld [vmem:[#allocation2 + $0x108] sm:$0xff]
    %v2147 = vld [vmem:[#allocation2 + $0x110] sm:$0xff]
    %v2148 = vld [vmem:[#allocation2 + $0x118] sm:$0xff]
    %v2149 = vld [vmem:[#allocation2 + $0x120] sm:$0xff]
    %v2150 = vld [vmem:[#allocation2 + $0x128] sm:$0xff]
    %v2151 = vld [vmem:[#allocation2 + $0x130] sm:$0xff]
    %v2152 = vld [vmem:[#allocation2 + $0x138] sm:$0xff]
    %v2153 = vld [vmem:[#allocation2 + $0x140] sm:$0xff]
    %v2154 = vld [vmem:[#allocation2 + $0x148] sm:$0xff]
    %v2155 = vld [vmem:[#allocation2 + $0x150] sm:$0xff]
    %v2156 = vld [vmem:[#allocation2 + $0x158] sm:$0xff]
    %v2157 = vld [vmem:[#allocation2 + $0x160] sm:$0xff]
    %v2158 = vld [vmem:[#allocation2 + $0x168] sm:$0xff]
    %v2159 = vld [vmem:[#allocation2 + $0x170] sm:$0xff]
    %v2160 = vld [vmem:[#allocation2 + $0x178] sm:$0xff]
    %v2161 = vld [vmem:[#allocation2 + $0x180] sm:$0xff]
    %v2162 = vld [vmem:[#allocation2 + $0x188] sm:$0xff]
    %v2163 = vld [vmem:[#allocation2 + $0x190] sm:$0xff]
    %v2164 = vld [vmem:[#allocation2 + $0x198] sm:$0xff]
    %v2165 = vld [vmem:[%s7] sm:$0xff]
    %v2166 = vld [vmem:[%s7 + $0x8] sm:$0xff]
    %v2167 = vld [vmem:[%s7 + $0x10] sm:$0xff]
    %v2168 = vld [vmem:[%s7 + $0x18] sm:$0xff]
    %v2169 = vld [vmem:[%s7 + $0x20] sm:$0xff]
    %v2170 = vld [vmem:[%s7 + $0x28] sm:$0xff]
    %v2171 = vld [vmem:[%s7 + $0x30] sm:$0xff]
    %v2172 = vld [vmem:[%s7 + $0x38] sm:$0xff]
    %2174 = vset.pattern.permute.xlu0 0
    %2175 = vperm.xlu0 %2174, %v2165
    %v2176 = vpop.permute.xlu0 %2175
    %2179 = vset.pattern.permute.xlu0 0
    %2180 = vperm.xlu0 %2179, %v2166
    %v2181 = vpop.permute.xlu0 %2180
    %2184 = vset.pattern.permute.xlu0 0
    %2185 = vperm.xlu0 %2184, %v2167
    %v2186 = vpop.permute.xlu0 %2185
    %2189 = vset.pattern.permute.xlu0 0
    %2190 = vperm.xlu0 %2189, %v2168
    %v2191 = vpop.permute.xlu0 %2190
    %2194 = vset.pattern.permute.xlu0 0
    %2195 = vperm.xlu0 %2194, %v2169
    %v2196 = vpop.permute.xlu0 %2195
    %2199 = vset.pattern.permute.xlu0 0
    %2200 = vperm.xlu0 %2199, %v2170
    %v2201 = vpop.permute.xlu0 %2200
    %2204 = vset.pattern.permute.xlu0 0
    %2205 = vperm.xlu0 %2204, %v2171
    %v2206 = vpop.permute.xlu0 %2205
    %2209 = vset.pattern.permute.xlu0 0
    %2210 = vperm.xlu0 %2209, %v2172
    %v2211 = vpop.permute.xlu0 %2210
    %vm2213 = vcmask 261120
    %v2215 = vsel %vm2213, %v2105, 0
    %v2218 = vsel %vm2213, %v2106, 0
    %v2221 = vsel %vm2213, %v2107, 0
    %v2224 = vsel %vm2213, %v2108, 0
    %v2227 = vsel %vm2213, %v2109, 0
    %v2230 = vsel %vm2213, %v2110, 0
    %v2233 = vsel %vm2213, %v2111, 0
    %v2236 = vsel %vm2213, %v2112, 0
    %2238 = vmatprep.subr.mxu0 0.0
    %2239 = vmatpush1.msra.mxu0 0.0
    %2240 = vmatprep.subr.mxu0 0.0
    %2241 = vmatpush1.msra.mxu0 0.0
    %2242 = vmatprep.subr.mxu0 0.0
    %2243 = vmatpush1.msra.mxu0 0.0
    %2244 = vmatprep.subr.mxu0 0.0
    %2245 = vmatpush1.msra.mxu0 0.0
    %2246 = vmatprep.subr.mxu0 0.0
    %2247 = vmatpush1.msra.mxu0 0.0
    %2248 = vmatprep.subr.mxu0 0.0
    %2249 = vmatpush1.msra.mxu0 0.0
    %2250 = vmatprep.subr.mxu0 0.0
    %2251 = vmatpush1.msra.mxu0 0.0
    %2252 = vmatprep.subr.mxu0 0.0
    %2253 = vmatpush1.msra.mxu0 0.0
    %2254 = vmatprep.subr.mxu0 0.0
    %2255 = vmatpush1.msra.mxu0 0.0
    %2256 = vmatprep.subr.mxu0 0.0
    %2257 = vmatpush1.msra.mxu0 0.0
    %2258 = vmatprep.subr.mxu0 0.0
    %2259 = vmatpush1.msra.mxu0 0.0
    %2260 = vmatprep.subr.mxu0 0.0
    %2261 = vmatpush1.msra.mxu0 0.0
    %2262 = vmatprep.subr.mxu0 %v2153
    %2263 = vmatpush1.msra.mxu0 %v2152
    %2264 = vmatprep.subr.mxu0 %v2140
    %2265 = vmatpush1.msra.mxu0 %v2139
    %2266 = vmatprep.subr.mxu0 %v2127
    %2267 = vmatpush1.msra.mxu0 %v2126
    %2268 = vmatprep.subr.mxu0 %v2114
    %2269 = vmatpush1.msra.mxu0 %v2113
    %2270 = vmatprep.subr.mxu0 0.0
    %2271 = vmatpush2.msra.mxu0 0.0
    %2272 = vmatprep.subr.mxu0 0.0
    %2273 = vmatpush2.msra.mxu0 0.0
    %2274 = vmatprep.subr.mxu0 0.0
    %2275 = vmatpush2.msra.mxu0 0.0
    %2276 = vmatprep.subr.mxu0 0.0
    %2277 = vmatpush2.msra.mxu0 0.0
    %2278 = vmatprep.subr.mxu0 0.0
    %2279 = vmatpush2.msra.mxu0 0.0
    %2280 = vmatprep.subr.mxu0 0.0
    %2281 = vmatpush2.msra.mxu0 0.0
    %2282 = vmatprep.subr.mxu0 0.0
    %2283 = vmatpush2.msra.mxu0 0.0
    %2284 = vmatprep.subr.mxu0 0.0
    %2285 = vmatpush2.msra.mxu0 0.0
    %2286 = vmatprep.subr.mxu0 0.0
    %2287 = vmatpush2.msra.mxu0 0.0
    %2288 = vmatprep.subr.mxu0 0.0
    %2289 = vmatpush2.msra.mxu0 0.0
    %2290 = vmatprep.subr.mxu0 0.0
    %2291 = vmatpush2.msra.mxu0 0.0
    %2292 = vmatprep.subr.mxu0 0.0
    %2293 = vmatpush2.msra.mxu0 0.0
    %2294 = vmatprep.subr.mxu0 0.0
    %2295 = vmatpush2.msra.mxu0 0.0
    %2296 = vmatprep.subr.mxu0 0.0
    %2297 = vmatpush2.msra.mxu0 0.0
    %2298 = vmatprep.subr.mxu0 0.0
    %2299 = vmatpush2.msra.mxu0 0.0
    %2300 = vmatprep.subr.mxu0 0.0
    %2301 = vmatpush2.msra.mxu0 0.0
    %2302 = vmatprep.mubr.f32.mxu0 0.0
    %2303 = vmatmul.mubr.f32.gmra.mxu0 %v2215
    %v2304 = vpop.f32.mrf.mxu0
    %v2305 = vadd.f32 %v2176, %v2304
    %v2306 = vpop.f32.mrf.mxu0
    %v2307 = vadd.f32 %v2176, %v2306
    %2308 = vmatprep.mubr.f32.mxu0 0.0
    %2309 = vmatmul.mubr.f32.gmra.mxu0 %v2218
    %v2310 = vpop.f32.mrf.mxu0
    %v2311 = vadd.f32 %v2181, %v2310
    %v2312 = vpop.f32.mrf.mxu0
    %v2313 = vadd.f32 %v2181, %v2312
    %2314 = vmatprep.mubr.f32.mxu0 0.0
    %2315 = vmatmul.mubr.f32.gmra.mxu0 %v2221
    %v2316 = vpop.f32.mrf.mxu0
    %v2317 = vadd.f32 %v2186, %v2316
    %v2318 = vpop.f32.mrf.mxu0
    %v2319 = vadd.f32 %v2186, %v2318
    %2320 = vmatprep.mubr.f32.mxu0 0.0
    %2321 = vmatmul.mubr.f32.gmra.mxu0 %v2224
    %v2322 = vpop.f32.mrf.mxu0
    %v2323 = vadd.f32 %v2191, %v2322
    %v2324 = vpop.f32.mrf.mxu0
    %v2325 = vadd.f32 %v2191, %v2324
    %2326 = vmatprep.mubr.f32.mxu0 0.0
    %2327 = vmatmul.mubr.f32.gmra.mxu0 %v2227
    %v2328 = vpop.f32.mrf.mxu0
    %v2329 = vadd.f32 %v2196, %v2328
    %v2330 = vpop.f32.mrf.mxu0
    %v2331 = vadd.f32 %v2196, %v2330
    %2332 = vmatprep.mubr.f32.mxu0 0.0
    %2333 = vmatmul.mubr.f32.gmra.mxu0 %v2230
    %v2334 = vpop.f32.mrf.mxu0
    %v2335 = vadd.f32 %v2201, %v2334
    %v2336 = vpop.f32.mrf.mxu0
    %v2337 = vadd.f32 %v2201, %v2336
    %2338 = vmatprep.mubr.f32.mxu0 0.0
    %2339 = vmatmul.mubr.f32.gmra.mxu0 %v2233
    %v2340 = vpop.f32.mrf.mxu0
    %v2341 = vadd.f32 %v2206, %v2340
    %v2342 = vpop.f32.mrf.mxu0
    %v2343 = vadd.f32 %v2206, %v2342
    %2344 = vmatprep.mubr.f32.mxu0 0.0
    %2345 = vmatmul.mubr.f32.gmra.mxu0 %v2236
    %v2346 = vpop.f32.mrf.mxu0
    %v2347 = vadd.f32 %v2211, %v2346
    %v2348 = vpop.f32.mrf.mxu0
    %v2349 = vadd.f32 %v2211, %v2348
    %2350 = vdwg.mxu0
    %2351 = vmatprep.subr.mxu0 0.0
    %2352 = vmatpush1.msra.mxu0 0.0
    %2353 = vmatprep.subr.mxu0 0.0
    %2354 = vmatpush1.msra.mxu0 0.0
    %2355 = vmatprep.subr.mxu0 0.0
    %2356 = vmatpush1.msra.mxu0 0.0
    %2357 = vmatprep.subr.mxu0 0.0
    %2358 = vmatpush1.msra.mxu0 0.0
    %2359 = vmatprep.subr.mxu0 0.0
    %2360 = vmatpush1.msra.mxu0 0.0
    %2361 = vmatprep.subr.mxu0 0.0
    %2362 = vmatpush1.msra.mxu0 0.0
    %2363 = vmatprep.subr.mxu0 0.0
    %2364 = vmatpush1.msra.mxu0 0.0
    %2365 = vmatprep.subr.mxu0 0.0
    %2366 = vmatpush1.msra.mxu0 0.0
    %2367 = vmatprep.subr.mxu0 0.0
    %2368 = vmatpush1.msra.mxu0 0.0
    %2369 = vmatprep.subr.mxu0 0.0
    %2370 = vmatpush1.msra.mxu0 0.0
    %2371 = vmatprep.subr.mxu0 0.0
    %2372 = vmatpush1.msra.mxu0 0.0
    %2373 = vmatprep.subr.mxu0 0.0
    %2374 = vmatpush1.msra.mxu0 0.0
    %2375 = vmatprep.subr.mxu0 %v2155
    %2376 = vmatpush1.msra.mxu0 %v2154
    %2377 = vmatprep.subr.mxu0 %v2142
    %2378 = vmatpush1.msra.mxu0 %v2141
    %2379 = vmatprep.subr.mxu0 %v2129
    %2380 = vmatpush1.msra.mxu0 %v2128
    %2381 = vmatprep.subr.mxu0 %v2116
    %2382 = vmatpush1.msra.mxu0 %v2115
    %2383 = vmatprep.subr.mxu0 0.0
    %2384 = vmatpush2.msra.mxu0 0.0
    %2385 = vmatprep.subr.mxu0 0.0
    %2386 = vmatpush2.msra.mxu0 0.0
    %2387 = vmatprep.subr.mxu0 0.0
    %2388 = vmatpush2.msra.mxu0 0.0
    %2389 = vmatprep.subr.mxu0 0.0
    %2390 = vmatpush2.msra.mxu0 0.0
    %2391 = vmatprep.subr.mxu0 0.0
    %2392 = vmatpush2.msra.mxu0 0.0
    %2393 = vmatprep.subr.mxu0 0.0
    %2394 = vmatpush2.msra.mxu0 0.0
    %2395 = vmatprep.subr.mxu0 0.0
    %2396 = vmatpush2.msra.mxu0 0.0
    %2397 = vmatprep.subr.mxu0 0.0
    %2398 = vmatpush2.msra.mxu0 0.0
    %2399 = vmatprep.subr.mxu0 0.0
    %2400 = vmatpush2.msra.mxu0 0.0
    %2401 = vmatprep.subr.mxu0 0.0
    %2402 = vmatpush2.msra.mxu0 0.0
    %2403 = vmatprep.subr.mxu0 0.0
    %2404 = vmatpush2.msra.mxu0 0.0
    %2405 = vmatprep.subr.mxu0 0.0
    %2406 = vmatpush2.msra.mxu0 0.0
    %2407 = vmatprep.subr.mxu0 0.0
    %2408 = vmatpush2.msra.mxu0 0.0
    %2409 = vmatprep.subr.mxu0 0.0
    %2410 = vmatpush2.msra.mxu0 0.0
    %2411 = vmatprep.subr.mxu0 0.0
    %2412 = vmatpush2.msra.mxu0 0.0
    %2413 = vmatprep.subr.mxu0 0.0
    %2414 = vmatpush2.msra.mxu0 0.0
    %2415 = vmatprep.mubr.f32.mxu0 0.0
    %2416 = vmatmul.mubr.f32.gmra.mxu0 %v2215
    %v2417 = vpop.f32.mrf.mxu0
    %v2418 = vadd.f32 %v2176, %v2417
    %v2419 = vpop.f32.mrf.mxu0
    %v2420 = vadd.f32 %v2176, %v2419
    %2421 = vmatprep.mubr.f32.mxu0 0.0
    %2422 = vmatmul.mubr.f32.gmra.mxu0 %v2218
    %v2423 = vpop.f32.mrf.mxu0
    %v2424 = vadd.f32 %v2181, %v2423
    %v2425 = vpop.f32.mrf.mxu0
    %v2426 = vadd.f32 %v2181, %v2425
    %2427 = vmatprep.mubr.f32.mxu0 0.0
    %2428 = vmatmul.mubr.f32.gmra.mxu0 %v2221
    %v2429 = vpop.f32.mrf.mxu0
    %v2430 = vadd.f32 %v2186, %v2429
    %v2431 = vpop.f32.mrf.mxu0
    %v2432 = vadd.f32 %v2186, %v2431
    %2433 = vmatprep.mubr.f32.mxu0 0.0
    %2434 = vmatmul.mubr.f32.gmra.mxu0 %v2224
    %v2435 = vpop.f32.mrf.mxu0
    %v2436 = vadd.f32 %v2191, %v2435
    %v2437 = vpop.f32.mrf.mxu0
    %v2438 = vadd.f32 %v2191, %v2437
    %2439 = vmatprep.mubr.f32.mxu0 0.0
    %2440 = vmatmul.mubr.f32.gmra.mxu0 %v2227
    %v2441 = vpop.f32.mrf.mxu0
    %v2442 = vadd.f32 %v2196, %v2441
    %v2443 = vpop.f32.mrf.mxu0
    %v2444 = vadd.f32 %v2196, %v2443
    %2445 = vmatprep.mubr.f32.mxu0 0.0
    %2446 = vmatmul.mubr.f32.gmra.mxu0 %v2230
    %v2447 = vpop.f32.mrf.mxu0
    %v2448 = vadd.f32 %v2201, %v2447
    %v2449 = vpop.f32.mrf.mxu0
    %v2450 = vadd.f32 %v2201, %v2449
    %2451 = vmatprep.mubr.f32.mxu0 0.0
    %2452 = vmatmul.mubr.f32.gmra.mxu0 %v2233
    %v2453 = vpop.f32.mrf.mxu0
    %v2454 = vadd.f32 %v2206, %v2453
    %v2455 = vpop.f32.mrf.mxu0
    %v2456 = vadd.f32 %v2206, %v2455
    %2457 = vmatprep.mubr.f32.mxu0 0.0
    %2458 = vmatmul.mubr.f32.gmra.mxu0 %v2236
    %v2459 = vpop.f32.mrf.mxu0
    %v2460 = vadd.f32 %v2211, %v2459
    %v2461 = vpop.f32.mrf.mxu0
    %v2462 = vadd.f32 %v2211, %v2461
    %2463 = vdwg.mxu0
    %2464 = vmatprep.subr.mxu0 0.0
    %2465 = vmatpush1.msra.mxu0 0.0
    %2466 = vmatprep.subr.mxu0 0.0
    %2467 = vmatpush1.msra.mxu0 0.0
    %2468 = vmatprep.subr.mxu0 0.0
    %2469 = vmatpush1.msra.mxu0 0.0
    %2470 = vmatprep.subr.mxu0 0.0
    %2471 = vmatpush1.msra.mxu0 0.0
    %2472 = vmatprep.subr.mxu0 0.0
    %2473 = vmatpush1.msra.mxu0 0.0
    %2474 = vmatprep.subr.mxu0 0.0
    %2475 = vmatpush1.msra.mxu0 0.0
    %2476 = vmatprep.subr.mxu0 0.0
    %2477 = vmatpush1.msra.mxu0 0.0
    %2478 = vmatprep.subr.mxu0 0.0
    %2479 = vmatpush1.msra.mxu0 0.0
    %2480 = vmatprep.subr.mxu0 0.0
    %2481 = vmatpush1.msra.mxu0 0.0
    %2482 = vmatprep.subr.mxu0 0.0
    %2483 = vmatpush1.msra.mxu0 0.0
    %2484 = vmatprep.subr.mxu0 0.0
    %2485 = vmatpush1.msra.mxu0 0.0
    %2486 = vmatprep.subr.mxu0 0.0
    %2487 = vmatpush1.msra.mxu0 0.0
    %2488 = vmatprep.subr.mxu0 %v2157
    %2489 = vmatpush1.msra.mxu0 %v2156
    %2490 = vmatprep.subr.mxu0 %v2144
    %2491 = vmatpush1.msra.mxu0 %v2143
    %2492 = vmatprep.subr.mxu0 %v2131
    %2493 = vmatpush1.msra.mxu0 %v2130
    %2494 = vmatprep.subr.mxu0 %v2118
    %2495 = vmatpush1.msra.mxu0 %v2117
    %2496 = vmatprep.subr.mxu0 0.0
    %2497 = vmatpush2.msra.mxu0 0.0
    %2498 = vmatprep.subr.mxu0 0.0
    %2499 = vmatpush2.msra.mxu0 0.0
    %2500 = vmatprep.subr.mxu0 0.0
    %2501 = vmatpush2.msra.mxu0 0.0
    %2502 = vmatprep.subr.mxu0 0.0
    %2503 = vmatpush2.msra.mxu0 0.0
    %2504 = vmatprep.subr.mxu0 0.0
    %2505 = vmatpush2.msra.mxu0 0.0
    %2506 = vmatprep.subr.mxu0 0.0
    %2507 = vmatpush2.msra.mxu0 0.0
    %2508 = vmatprep.subr.mxu0 0.0
    %2509 = vmatpush2.msra.mxu0 0.0
    %2510 = vmatprep.subr.mxu0 0.0
    %2511 = vmatpush2.msra.mxu0 0.0
    %2512 = vmatprep.subr.mxu0 0.0
    %2513 = vmatpush2.msra.mxu0 0.0
    %2514 = vmatprep.subr.mxu0 0.0
    %2515 = vmatpush2.msra.mxu0 0.0
    %2516 = vmatprep.subr.mxu0 0.0
    %2517 = vmatpush2.msra.mxu0 0.0
    %2518 = vmatprep.subr.mxu0 0.0
    %2519 = vmatpush2.msra.mxu0 0.0
    %2520 = vmatprep.subr.mxu0 0.0
    %2521 = vmatpush2.msra.mxu0 0.0
    %2522 = vmatprep.subr.mxu0 0.0
    %2523 = vmatpush2.msra.mxu0 0.0
    %2524 = vmatprep.subr.mxu0 0.0
    %2525 = vmatpush2.msra.mxu0 0.0
    %2526 = vmatprep.subr.mxu0 0.0
    %2527 = vmatpush2.msra.mxu0 0.0
    %2528 = vmatprep.mubr.f32.mxu0 0.0
    %2529 = vmatmul.mubr.f32.gmra.mxu0 %v2215
    %v2530 = vpop.f32.mrf.mxu0
    %v2531 = vadd.f32 %v2176, %v2530
    %v2532 = vpop.f32.mrf.mxu0
    %v2533 = vadd.f32 %v2176, %v2532
    %2534 = vmatprep.mubr.f32.mxu0 0.0
    %2535 = vmatmul.mubr.f32.gmra.mxu0 %v2218
    %v2536 = vpop.f32.mrf.mxu0
    %v2537 = vadd.f32 %v2181, %v2536
    %v2538 = vpop.f32.mrf.mxu0
    %v2539 = vadd.f32 %v2181, %v2538
    %2540 = vmatprep.mubr.f32.mxu0 0.0
    %2541 = vmatmul.mubr.f32.gmra.mxu0 %v2221
    %v2542 = vpop.f32.mrf.mxu0
    %v2543 = vadd.f32 %v2186, %v2542
    %v2544 = vpop.f32.mrf.mxu0
    %v2545 = vadd.f32 %v2186, %v2544
    %2546 = vmatprep.mubr.f32.mxu0 0.0
    %2547 = vmatmul.mubr.f32.gmra.mxu0 %v2224
    %v2548 = vpop.f32.mrf.mxu0
    %v2549 = vadd.f32 %v2191, %v2548
    %v2550 = vpop.f32.mrf.mxu0
    %v2551 = vadd.f32 %v2191, %v2550
    %2552 = vmatprep.mubr.f32.mxu0 0.0
    %2553 = vmatmul.mubr.f32.gmra.mxu0 %v2227
    %v2554 = vpop.f32.mrf.mxu0
    %v2555 = vadd.f32 %v2196, %v2554
    %v2556 = vpop.f32.mrf.mxu0
    %v2557 = vadd.f32 %v2196, %v2556
    %2558 = vmatprep.mubr.f32.mxu0 0.0
    %2559 = vmatmul.mubr.f32.gmra.mxu0 %v2230
    %v2560 = vpop.f32.mrf.mxu0
    %v2561 = vadd.f32 %v2201, %v2560
    %v2562 = vpop.f32.mrf.mxu0
    %v2563 = vadd.f32 %v2201, %v2562
    %2564 = vmatprep.mubr.f32.mxu0 0.0
    %2565 = vmatmul.mubr.f32.gmra.mxu0 %v2233
    %v2566 = vpop.f32.mrf.mxu0
    %v2567 = vadd.f32 %v2206, %v2566
    %v2568 = vpop.f32.mrf.mxu0
    %v2569 = vadd.f32 %v2206, %v2568
    %2570 = vmatprep.mubr.f32.mxu0 0.0
    %2571 = vmatmul.mubr.f32.gmra.mxu0 %v2236
    %v2572 = vpop.f32.mrf.mxu0
    %v2573 = vadd.f32 %v2211, %v2572
    %v2574 = vpop.f32.mrf.mxu0
    %v2575 = vadd.f32 %v2211, %v2574
    %2576 = vdwg.mxu0
    %2577 = vmatprep.subr.mxu0 0.0
    %2578 = vmatpush1.msra.mxu0 0.0
    %2579 = vmatprep.subr.mxu0 0.0
    %2580 = vmatpush1.msra.mxu0 0.0
    %2581 = vmatprep.subr.mxu0 0.0
    %2582 = vmatpush1.msra.mxu0 0.0
    %2583 = vmatprep.subr.mxu0 0.0
    %2584 = vmatpush1.msra.mxu0 0.0
    %2585 = vmatprep.subr.mxu0 0.0
    %2586 = vmatpush1.msra.mxu0 0.0
    %2587 = vmatprep.subr.mxu0 0.0
    %2588 = vmatpush1.msra.mxu0 0.0
    %2589 = vmatprep.subr.mxu0 0.0
    %2590 = vmatpush1.msra.mxu0 0.0
    %2591 = vmatprep.subr.mxu0 0.0
    %2592 = vmatpush1.msra.mxu0 0.0
    %2593 = vmatprep.subr.mxu0 0.0
    %2594 = vmatpush1.msra.mxu0 0.0
    %2595 = vmatprep.subr.mxu0 0.0
    %2596 = vmatpush1.msra.mxu0 0.0
    %2597 = vmatprep.subr.mxu0 0.0
    %2598 = vmatpush1.msra.mxu0 0.0
    %2599 = vmatprep.subr.mxu0 0.0
    %2600 = vmatpush1.msra.mxu0 0.0
    %2601 = vmatprep.subr.mxu0 %v2159
    %2602 = vmatpush1.msra.mxu0 %v2158
    %2603 = vmatprep.subr.mxu0 %v2146
    %2604 = vmatpush1.msra.mxu0 %v2145
    %2605 = vmatprep.subr.mxu0 %v2133
    %2606 = vmatpush1.msra.mxu0 %v2132
    %2607 = vmatprep.subr.mxu0 %v2120
    %2608 = vmatpush1.msra.mxu0 %v2119
    %2609 = vmatprep.subr.mxu0 0.0
    %2610 = vmatpush2.msra.mxu0 0.0
    %2611 = vmatprep.subr.mxu0 0.0
    %2612 = vmatpush2.msra.mxu0 0.0
    %2613 = vmatprep.subr.mxu0 0.0
    %2614 = vmatpush2.msra.mxu0 0.0
    %2615 = vmatprep.subr.mxu0 0.0
    %2616 = vmatpush2.msra.mxu0 0.0
    %2617 = vmatprep.subr.mxu0 0.0
    %2618 = vmatpush2.msra.mxu0 0.0
    %2619 = vmatprep.subr.mxu0 0.0
    %2620 = vmatpush2.msra.mxu0 0.0
    %2621 = vmatprep.subr.mxu0 0.0
    %2622 = vmatpush2.msra.mxu0 0.0
    %2623 = vmatprep.subr.mxu0 0.0
    %2624 = vmatpush2.msra.mxu0 0.0
    %2625 = vmatprep.subr.mxu0 0.0
    %2626 = vmatpush2.msra.mxu0 0.0
    %2627 = vmatprep.subr.mxu0 0.0
    %2628 = vmatpush2.msra.mxu0 0.0
    %2629 = vmatprep.subr.mxu0 0.0
    %2630 = vmatpush2.msra.mxu0 0.0
    %2631 = vmatprep.subr.mxu0 0.0
    %2632 = vmatpush2.msra.mxu0 0.0
    %2633 = vmatprep.subr.mxu0 0.0
    %2634 = vmatpush2.msra.mxu0 0.0
    %2635 = vmatprep.subr.mxu0 0.0
    %2636 = vmatpush2.msra.mxu0 0.0
    %2637 = vmatprep.subr.mxu0 0.0
    %2638 = vmatpush2.msra.mxu0 0.0
    %2639 = vmatprep.subr.mxu0 0.0
    %2640 = vmatpush2.msra.mxu0 0.0
    %2641 = vmatprep.mubr.f32.mxu0 0.0
    %2642 = vmatmul.mubr.f32.gmra.mxu0 %v2215
    %v2643 = vpop.f32.mrf.mxu0
    %v2644 = vadd.f32 %v2176, %v2643
    %v2645 = vpop.f32.mrf.mxu0
    %v2646 = vadd.f32 %v2176, %v2645
    %2647 = vmatprep.mubr.f32.mxu0 0.0
    %2648 = vmatmul.mubr.f32.gmra.mxu0 %v2218
    %v2649 = vpop.f32.mrf.mxu0
    %v2650 = vadd.f32 %v2181, %v2649
    %v2651 = vpop.f32.mrf.mxu0
    %v2652 = vadd.f32 %v2181, %v2651
    %2653 = vmatprep.mubr.f32.mxu0 0.0
    %2654 = vmatmul.mubr.f32.gmra.mxu0 %v2221
    %v2655 = vpop.f32.mrf.mxu0
    %v2656 = vadd.f32 %v2186, %v2655
    %v2657 = vpop.f32.mrf.mxu0
    %v2658 = vadd.f32 %v2186, %v2657
    %2659 = vmatprep.mubr.f32.mxu0 0.0
    %2660 = vmatmul.mubr.f32.gmra.mxu0 %v2224
    %v2661 = vpop.f32.mrf.mxu0
    %v2662 = vadd.f32 %v2191, %v2661
    %v2663 = vpop.f32.mrf.mxu0
    %v2664 = vadd.f32 %v2191, %v2663
    %2665 = vmatprep.mubr.f32.mxu0 0.0
    %2666 = vmatmul.mubr.f32.gmra.mxu0 %v2227
    %v2667 = vpop.f32.mrf.mxu0
    %v2668 = vadd.f32 %v2196, %v2667
    %v2669 = vpop.f32.mrf.mxu0
    %v2670 = vadd.f32 %v2196, %v2669
    %2671 = vmatprep.mubr.f32.mxu0 0.0
    %2672 = vmatmul.mubr.f32.gmra.mxu0 %v2230
    %v2673 = vpop.f32.mrf.mxu0
    %v2674 = vadd.f32 %v2201, %v2673
    %v2675 = vpop.f32.mrf.mxu0
    %v2676 = vadd.f32 %v2201, %v2675
    %2677 = vmatprep.mubr.f32.mxu0 0.0
    %2678 = vmatmul.mubr.f32.gmra.mxu0 %v2233
    %v2679 = vpop.f32.mrf.mxu0
    %v2680 = vadd.f32 %v2206, %v2679
    %v2681 = vpop.f32.mrf.mxu0
    %v2682 = vadd.f32 %v2206, %v2681
    %2683 = vmatprep.mubr.f32.mxu0 0.0
    %2684 = vmatmul.mubr.f32.gmra.mxu0 %v2236
    %v2685 = vpop.f32.mrf.mxu0
    %v2686 = vadd.f32 %v2211, %v2685
    %v2687 = vpop.f32.mrf.mxu0
    %v2688 = vadd.f32 %v2211, %v2687
    %2689 = vdwg.mxu0
    %2690 = vmatprep.subr.mxu0 0.0
    %2691 = vmatpush1.msra.mxu0 0.0
    %2692 = vmatprep.subr.mxu0 0.0
    %2693 = vmatpush1.msra.mxu0 0.0
    %2694 = vmatprep.subr.mxu0 0.0
    %2695 = vmatpush1.msra.mxu0 0.0
    %2696 = vmatprep.subr.mxu0 0.0
    %2697 = vmatpush1.msra.mxu0 0.0
    %2698 = vmatprep.subr.mxu0 0.0
    %2699 = vmatpush1.msra.mxu0 0.0
    %2700 = vmatprep.subr.mxu0 0.0
    %2701 = vmatpush1.msra.mxu0 0.0
    %2702 = vmatprep.subr.mxu0 0.0
    %2703 = vmatpush1.msra.mxu0 0.0
    %2704 = vmatprep.subr.mxu0 0.0
    %2705 = vmatpush1.msra.mxu0 0.0
    %2706 = vmatprep.subr.mxu0 0.0
    %2707 = vmatpush1.msra.mxu0 0.0
    %2708 = vmatprep.subr.mxu0 0.0
    %2709 = vmatpush1.msra.mxu0 0.0
    %2710 = vmatprep.subr.mxu0 0.0
    %2711 = vmatpush1.msra.mxu0 0.0
    %2712 = vmatprep.subr.mxu0 0.0
    %2713 = vmatpush1.msra.mxu0 0.0
    %2714 = vmatprep.subr.mxu0 %v2161
    %2715 = vmatpush1.msra.mxu0 %v2160
    %2716 = vmatprep.subr.mxu0 %v2148
    %2717 = vmatpush1.msra.mxu0 %v2147
    %2718 = vmatprep.subr.mxu0 %v2135
    %2719 = vmatpush1.msra.mxu0 %v2134
    %2720 = vmatprep.subr.mxu0 %v2122
    %2721 = vmatpush1.msra.mxu0 %v2121
    %2722 = vmatprep.subr.mxu0 0.0
    %2723 = vmatpush2.msra.mxu0 0.0
    %2724 = vmatprep.subr.mxu0 0.0
    %2725 = vmatpush2.msra.mxu0 0.0
    %2726 = vmatprep.subr.mxu0 0.0
    %2727 = vmatpush2.msra.mxu0 0.0
    %2728 = vmatprep.subr.mxu0 0.0
    %2729 = vmatpush2.msra.mxu0 0.0
    %2730 = vmatprep.subr.mxu0 0.0
    %2731 = vmatpush2.msra.mxu0 0.0
    %2732 = vmatprep.subr.mxu0 0.0
    %2733 = vmatpush2.msra.mxu0 0.0
    %2734 = vmatprep.subr.mxu0 0.0
    %2735 = vmatpush2.msra.mxu0 0.0
    %2736 = vmatprep.subr.mxu0 0.0
    %2737 = vmatpush2.msra.mxu0 0.0
    %2738 = vmatprep.subr.mxu0 0.0
    %2739 = vmatpush2.msra.mxu0 0.0
    %2740 = vmatprep.subr.mxu0 0.0
    %2741 = vmatpush2.msra.mxu0 0.0
    %2742 = vmatprep.subr.mxu0 0.0
    %2743 = vmatpush2.msra.mxu0 0.0
    %2744 = vmatprep.subr.mxu0 0.0
    %2745 = vmatpush2.msra.mxu0 0.0
    %2746 = vmatprep.subr.mxu0 0.0
    %2747 = vmatpush2.msra.mxu0 0.0
    %2748 = vmatprep.subr.mxu0 0.0
    %2749 = vmatpush2.msra.mxu0 0.0
    %2750 = vmatprep.subr.mxu0 0.0
    %2751 = vmatpush2.msra.mxu0 0.0
    %2752 = vmatprep.subr.mxu0 0.0
    %2753 = vmatpush2.msra.mxu0 0.0
    %2754 = vmatprep.mubr.f32.mxu0 0.0
    %2755 = vmatmul.mubr.f32.gmra.mxu0 %v2215
    %v2756 = vpop.f32.mrf.mxu0
    %v2757 = vadd.f32 %v2176, %v2756
    %v2758 = vpop.f32.mrf.mxu0
    %v2759 = vadd.f32 %v2176, %v2758
    %2760 = vmatprep.mubr.f32.mxu0 0.0
    %2761 = vmatmul.mubr.f32.gmra.mxu0 %v2218
    %v2762 = vpop.f32.mrf.mxu0
    %v2763 = vadd.f32 %v2181, %v2762
    %v2764 = vpop.f32.mrf.mxu0
    %v2765 = vadd.f32 %v2181, %v2764
    %2766 = vmatprep.mubr.f32.mxu0 0.0
    %2767 = vmatmul.mubr.f32.gmra.mxu0 %v2221
    %v2768 = vpop.f32.mrf.mxu0
    %v2769 = vadd.f32 %v2186, %v2768
    %v2770 = vpop.f32.mrf.mxu0
    %v2771 = vadd.f32 %v2186, %v2770
    %2772 = vmatprep.mubr.f32.mxu0 0.0
    %2773 = vmatmul.mubr.f32.gmra.mxu0 %v2224
    %v2774 = vpop.f32.mrf.mxu0
    %v2775 = vadd.f32 %v2191, %v2774
    %v2776 = vpop.f32.mrf.mxu0
    %v2777 = vadd.f32 %v2191, %v2776
    %2778 = vmatprep.mubr.f32.mxu0 0.0
    %2779 = vmatmul.mubr.f32.gmra.mxu0 %v2227
    %v2780 = vpop.f32.mrf.mxu0
    %v2781 = vadd.f32 %v2196, %v2780
    %v2782 = vpop.f32.mrf.mxu0
    %v2783 = vadd.f32 %v2196, %v2782
    %2784 = vmatprep.mubr.f32.mxu0 0.0
    %2785 = vmatmul.mubr.f32.gmra.mxu0 %v2230
    %v2786 = vpop.f32.mrf.mxu0
    %v2787 = vadd.f32 %v2201, %v2786
    %v2788 = vpop.f32.mrf.mxu0
    %v2789 = vadd.f32 %v2201, %v2788
    %2790 = vmatprep.mubr.f32.mxu0 0.0
    %2791 = vmatmul.mubr.f32.gmra.mxu0 %v2233
    %v2792 = vpop.f32.mrf.mxu0
    %v2793 = vadd.f32 %v2206, %v2792
    %v2794 = vpop.f32.mrf.mxu0
    %v2795 = vadd.f32 %v2206, %v2794
    %2796 = vmatprep.mubr.f32.mxu0 0.0
    %2797 = vmatmul.mubr.f32.gmra.mxu0 %v2236
    %v2798 = vpop.f32.mrf.mxu0
    %v2799 = vadd.f32 %v2211, %v2798
    %v2800 = vpop.f32.mrf.mxu0
    %v2801 = vadd.f32 %v2211, %v2800
    %2802 = vdwg.mxu0
    %2803 = vmatprep.subr.mxu0 0.0
    %2804 = vmatpush1.msra.mxu0 0.0
    %2805 = vmatprep.subr.mxu0 0.0
    %2806 = vmatpush1.msra.mxu0 0.0
    %2807 = vmatprep.subr.mxu0 0.0
    %2808 = vmatpush1.msra.mxu0 0.0
    %2809 = vmatprep.subr.mxu0 0.0
    %2810 = vmatpush1.msra.mxu0 0.0
    %2811 = vmatprep.subr.mxu0 0.0
    %2812 = vmatpush1.msra.mxu0 0.0
    %2813 = vmatprep.subr.mxu0 0.0
    %2814 = vmatpush1.msra.mxu0 0.0
    %2815 = vmatprep.subr.mxu0 0.0
    %2816 = vmatpush1.msra.mxu0 0.0
    %2817 = vmatprep.subr.mxu0 0.0
    %2818 = vmatpush1.msra.mxu0 0.0
    %2819 = vmatprep.subr.mxu0 0.0
    %2820 = vmatpush1.msra.mxu0 0.0
    %2821 = vmatprep.subr.mxu0 0.0
    %2822 = vmatpush1.msra.mxu0 0.0
    %2823 = vmatprep.subr.mxu0 0.0
    %2824 = vmatpush1.msra.mxu0 0.0
    %2825 = vmatprep.subr.mxu0 0.0
    %2826 = vmatpush1.msra.mxu0 0.0
    %2827 = vmatprep.subr.mxu0 %v2163
    %2828 = vmatpush1.msra.mxu0 %v2162
    %2829 = vmatprep.subr.mxu0 %v2150
    %2830 = vmatpush1.msra.mxu0 %v2149
    %2831 = vmatprep.subr.mxu0 %v2137
    %2832 = vmatpush1.msra.mxu0 %v2136
    %2833 = vmatprep.subr.mxu0 %v2124
    %2834 = vmatpush1.msra.mxu0 %v2123
    %2835 = vmatprep.subr.mxu0 0.0
    %2836 = vmatpush2.msra.mxu0 0.0
    %2837 = vmatprep.subr.mxu0 0.0
    %2838 = vmatpush2.msra.mxu0 0.0
    %2839 = vmatprep.subr.mxu0 0.0
    %2840 = vmatpush2.msra.mxu0 0.0
    %2841 = vmatprep.subr.mxu0 0.0
    %2842 = vmatpush2.msra.mxu0 0.0
    %2843 = vmatprep.subr.mxu0 0.0
    %2844 = vmatpush2.msra.mxu0 0.0
    %2845 = vmatprep.subr.mxu0 0.0
    %2846 = vmatpush2.msra.mxu0 0.0
    %2847 = vmatprep.subr.mxu0 0.0
    %2848 = vmatpush2.msra.mxu0 0.0
    %2849 = vmatprep.subr.mxu0 0.0
    %2850 = vmatpush2.msra.mxu0 0.0
    %2851 = vmatprep.subr.mxu0 0.0
    %2852 = vmatpush2.msra.mxu0 0.0
    %2853 = vmatprep.subr.mxu0 0.0
    %2854 = vmatpush2.msra.mxu0 0.0
    %2855 = vmatprep.subr.mxu0 0.0
    %2856 = vmatpush2.msra.mxu0 0.0
    %2857 = vmatprep.subr.mxu0 0.0
    %2858 = vmatpush2.msra.mxu0 0.0
    %2859 = vmatprep.subr.mxu0 0.0
    %2860 = vmatpush2.msra.mxu0 0.0
    %2861 = vmatprep.subr.mxu0 0.0
    %2862 = vmatpush2.msra.mxu0 0.0
    %2863 = vmatprep.subr.mxu0 0.0
    %2864 = vmatpush2.msra.mxu0 0.0
    %2865 = vmatprep.subr.mxu0 0.0
    %2866 = vmatpush2.msra.mxu0 0.0
    %2867 = vmatprep.mubr.f32.mxu0 0.0
    %2868 = vmatmul.mubr.f32.gmra.mxu0 %v2215
    %v2869 = vpop.f32.mrf.mxu0
    %v2870 = vadd.f32 %v2176, %v2869
    %v2871 = vpop.f32.mrf.mxu0
    %v2872 = vadd.f32 %v2176, %v2871
    %2873 = vmatprep.mubr.f32.mxu0 0.0
    %2874 = vmatmul.mubr.f32.gmra.mxu0 %v2218
    %v2875 = vpop.f32.mrf.mxu0
    %v2876 = vadd.f32 %v2181, %v2875
    %v2877 = vpop.f32.mrf.mxu0
    %v2878 = vadd.f32 %v2181, %v2877
    %2879 = vmatprep.mubr.f32.mxu0 0.0
    %2880 = vmatmul.mubr.f32.gmra.mxu0 %v2221
    %v2881 = vpop.f32.mrf.mxu0
    %v2882 = vadd.f32 %v2186, %v2881
    %v2883 = vpop.f32.mrf.mxu0
    %v2884 = vadd.f32 %v2186, %v2883
    %2885 = vmatprep.mubr.f32.mxu0 0.0
    %2886 = vmatmul.mubr.f32.gmra.mxu0 %v2224
    %v2887 = vpop.f32.mrf.mxu0
    %v2888 = vadd.f32 %v2191, %v2887
    %v2889 = vpop.f32.mrf.mxu0
    %v2890 = vadd.f32 %v2191, %v2889
    %2891 = vmatprep.mubr.f32.mxu0 0.0
    %2892 = vmatmul.mubr.f32.gmra.mxu0 %v2227
    %v2893 = vpop.f32.mrf.mxu0
    %v2894 = vadd.f32 %v2196, %v2893
    %v2895 = vpop.f32.mrf.mxu0
    %v2896 = vadd.f32 %v2196, %v2895
    %2897 = vmatprep.mubr.f32.mxu0 0.0
    %2898 = vmatmul.mubr.f32.gmra.mxu0 %v2230
    %v2899 = vpop.f32.mrf.mxu0
    %v2900 = vadd.f32 %v2201, %v2899
    %v2901 = vpop.f32.mrf.mxu0
    %v2902 = vadd.f32 %v2201, %v2901
    %2903 = vmatprep.mubr.f32.mxu0 0.0
    %2904 = vmatmul.mubr.f32.gmra.mxu0 %v2233
    %v2905 = vpop.f32.mrf.mxu0
    %v2906 = vadd.f32 %v2206, %v2905
    %v2907 = vpop.f32.mrf.mxu0
    %v2908 = vadd.f32 %v2206, %v2907
    %2909 = vmatprep.mubr.f32.mxu0 0.0
    %2910 = vmatmul.mubr.f32.gmra.mxu0 %v2236
    %v2911 = vpop.f32.mrf.mxu0
    %v2912 = vadd.f32 %v2211, %v2911
    %v2913 = vpop.f32.mrf.mxu0
    %v2914 = vadd.f32 %v2211, %v2913
    %2915 = vdwg.mxu0
    %2916 = vmatprep.subr.mxu0 0.0
    %2917 = vmatpush1.msra.mxu0 0.0
    %2918 = vmatprep.subr.mxu0 0.0
    %2919 = vmatpush1.msra.mxu0 0.0
    %2920 = vmatprep.subr.mxu0 0.0
    %2921 = vmatpush1.msra.mxu0 0.0
    %2922 = vmatprep.subr.mxu0 0.0
    %2923 = vmatpush1.msra.mxu0 0.0
    %2924 = vmatprep.subr.mxu0 0.0
    %2925 = vmatpush1.msra.mxu0 0.0
    %2926 = vmatprep.subr.mxu0 0.0
    %2927 = vmatpush1.msra.mxu0 0.0
    %2928 = vmatprep.subr.mxu0 0.0
    %2929 = vmatpush1.msra.mxu0 0.0
    %2930 = vmatprep.subr.mxu0 0.0
    %2931 = vmatpush1.msra.mxu0 0.0
    %2932 = vmatprep.subr.mxu0 0.0
    %2933 = vmatpush1.msra.mxu0 0.0
    %2934 = vmatprep.subr.mxu0 0.0
    %2935 = vmatpush1.msra.mxu0 0.0
    %2936 = vmatprep.subr.mxu0 0.0
    %2937 = vmatpush1.msra.mxu0 0.0
    %2938 = vmatprep.subr.mxu0 0.0
    %2939 = vmatpush1.msra.mxu0 0.0
    %2940 = vmatprep.subr.mxu0 0.0
    %2941 = vmatpush1.msra.mxu0 %v2164
    %2942 = vmatprep.subr.mxu0 0.0
    %2943 = vmatpush1.msra.mxu0 %v2151
    %2944 = vmatprep.subr.mxu0 0.0
    %2945 = vmatpush1.msra.mxu0 %v2138
    %2946 = vmatprep.subr.mxu0 0.0
    %2947 = vmatpush1.msra.mxu0 %v2125
    %2948 = vmatprep.subr.mxu0 0.0
    %2949 = vmatpush2.msra.mxu0 0.0
    %2950 = vmatprep.subr.mxu0 0.0
    %2951 = vmatpush2.msra.mxu0 0.0
    %2952 = vmatprep.subr.mxu0 0.0
    %2953 = vmatpush2.msra.mxu0 0.0
    %2954 = vmatprep.subr.mxu0 0.0
    %2955 = vmatpush2.msra.mxu0 0.0
    %2956 = vmatprep.subr.mxu0 0.0
    %2957 = vmatpush2.msra.mxu0 0.0
    %2958 = vmatprep.subr.mxu0 0.0
    %2959 = vmatpush2.msra.mxu0 0.0
    %2960 = vmatprep.subr.mxu0 0.0
    %2961 = vmatpush2.msra.mxu0 0.0
    %2962 = vmatprep.subr.mxu0 0.0
    %2963 = vmatpush2.msra.mxu0 0.0
    %2964 = vmatprep.subr.mxu0 0.0
    %2965 = vmatpush2.msra.mxu0 0.0
    %2966 = vmatprep.subr.mxu0 0.0
    %2967 = vmatpush2.msra.mxu0 0.0
    %2968 = vmatprep.subr.mxu0 0.0
    %2969 = vmatpush2.msra.mxu0 0.0
    %2970 = vmatprep.subr.mxu0 0.0
    %2971 = vmatpush2.msra.mxu0 0.0
    %2972 = vmatprep.subr.mxu0 0.0
    %2973 = vmatpush2.msra.mxu0 0.0
    %2974 = vmatprep.subr.mxu0 0.0
    %2975 = vmatpush2.msra.mxu0 0.0
    %2976 = vmatprep.subr.mxu0 0.0
    %2977 = vmatpush2.msra.mxu0 0.0
    %2978 = vmatprep.subr.mxu0 0.0
    %2979 = vmatpush2.msra.mxu0 0.0
    %2980 = vmatprep.mubr.f32.mxu0 0.0
    %2981 = vmatmul.mubr.f32.gmra.mxu0 %v2215
    %v2982 = vpop.f32.mrf.mxu0
    %v2983 = vadd.f32 %v2176, %v2982
    %v2984 = vpop.f32.mrf.mxu0
    %2985 = vmatprep.mubr.f32.mxu0 0.0
    %2986 = vmatmul.mubr.f32.gmra.mxu0 %v2218
    %v2987 = vpop.f32.mrf.mxu0
    %v2988 = vadd.f32 %v2181, %v2987
    %v2989 = vpop.f32.mrf.mxu0
    %2990 = vmatprep.mubr.f32.mxu0 0.0
    %2991 = vmatmul.mubr.f32.gmra.mxu0 %v2221
    %v2992 = vpop.f32.mrf.mxu0
    %v2993 = vadd.f32 %v2186, %v2992
    %v2994 = vpop.f32.mrf.mxu0
    %2995 = vmatprep.mubr.f32.mxu0 0.0
    %2996 = vmatmul.mubr.f32.gmra.mxu0 %v2224
    %v2997 = vpop.f32.mrf.mxu0
    %v2998 = vadd.f32 %v2191, %v2997
    %v2999 = vpop.f32.mrf.mxu0
    %3000 = vmatprep.mubr.f32.mxu0 0.0
    %3001 = vmatmul.mubr.f32.gmra.mxu0 %v2227
    %v3002 = vpop.f32.mrf.mxu0
    %v3003 = vadd.f32 %v2196, %v3002
    %v3004 = vpop.f32.mrf.mxu0
    %3005 = vmatprep.mubr.f32.mxu0 0.0
    %3006 = vmatmul.mubr.f32.gmra.mxu0 %v2230
    %v3007 = vpop.f32.mrf.mxu0
    %v3008 = vadd.f32 %v2201, %v3007
    %v3009 = vpop.f32.mrf.mxu0
    %3010 = vmatprep.mubr.f32.mxu0 0.0
    %3011 = vmatmul.mubr.f32.gmra.mxu0 %v2233
    %v3012 = vpop.f32.mrf.mxu0
    %v3013 = vadd.f32 %v2206, %v3012
    %v3014 = vpop.f32.mrf.mxu0
    %3015 = vmatprep.mubr.f32.mxu0 0.0
    %3016 = vmatmul.mubr.f32.gmra.mxu0 %v2236
    %v3017 = vpop.f32.mrf.mxu0
    %v3018 = vadd.f32 %v2211, %v3017
    %v3019 = vpop.f32.mrf.mxu0
    %3020 = vdwg.mxu0
    %v3021 = vmax.f32 %v2305, 0.0
    %v3022 = vmax.f32 %v2307, 0.0
    %v3023 = vmax.f32 %v2418, 0.0
    %v3024 = vmax.f32 %v2420, 0.0
    %v3025 = vmax.f32 %v2531, 0.0
    %v3026 = vmax.f32 %v2533, 0.0
    %v3027 = vmax.f32 %v2644, 0.0
    %v3028 = vmax.f32 %v2646, 0.0
    %v3029 = vmax.f32 %v2757, 0.0
    %v3030 = vmax.f32 %v2759, 0.0
    %v3031 = vmax.f32 %v2870, 0.0
    %v3032 = vmax.f32 %v2872, 0.0
    %v3033 = vmax.f32 %v2983, 0.0
    %v3034 = vmax.f32 %v2311, 0.0
    %v3035 = vmax.f32 %v2313, 0.0
    %v3036 = vmax.f32 %v2424, 0.0
    %v3037 = vmax.f32 %v2426, 0.0
    %v3038 = vmax.f32 %v2537, 0.0
    %v3039 = vmax.f32 %v2539, 0.0
    %v3040 = vmax.f32 %v2650, 0.0
    %v3041 = vmax.f32 %v2652, 0.0
    %v3042 = vmax.f32 %v2763, 0.0
    %v3043 = vmax.f32 %v2765, 0.0
    %v3044 = vmax.f32 %v2876, 0.0
    %v3045 = vmax.f32 %v2878, 0.0
    %v3046 = vmax.f32 %v2988, 0.0
    %v3047 = vmax.f32 %v2317, 0.0
    %v3048 = vmax.f32 %v2319, 0.0
    %v3049 = vmax.f32 %v2430, 0.0
    %v3050 = vmax.f32 %v2432, 0.0
    %v3051 = vmax.f32 %v2543, 0.0
    %v3052 = vmax.f32 %v2545, 0.0
    %v3053 = vmax.f32 %v2656, 0.0
    %v3054 = vmax.f32 %v2658, 0.0
    %v3055 = vmax.f32 %v2769, 0.0
    %v3056 = vmax.f32 %v2771, 0.0
    %v3057 = vmax.f32 %v2882, 0.0
    %v3058 = vmax.f32 %v2884, 0.0
    %v3059 = vmax.f32 %v2993, 0.0
    %v3060 = vmax.f32 %v2323, 0.0
    %v3061 = vmax.f32 %v2325, 0.0
    %v3062 = vmax.f32 %v2436, 0.0
    %v3063 = vmax.f32 %v2438, 0.0
    %v3064 = vmax.f32 %v2549, 0.0
    %v3065 = vmax.f32 %v2551, 0.0
    %v3066 = vmax.f32 %v2662, 0.0
    %v3067 = vmax.f32 %v2664, 0.0
    %v3068 = vmax.f32 %v2775, 0.0
    %v3069 = vmax.f32 %v2777, 0.0
    %v3070 = vmax.f32 %v2888, 0.0
    %v3071 = vmax.f32 %v2890, 0.0
    %v3072 = vmax.f32 %v2998, 0.0
    %v3073 = vmax.f32 %v2329, 0.0
    %v3074 = vmax.f32 %v2331, 0.0
    %v3075 = vmax.f32 %v2442, 0.0
    %v3076 = vmax.f32 %v2444, 0.0
    %v3077 = vmax.f32 %v2555, 0.0
    %v3078 = vmax.f32 %v2557, 0.0
    %v3079 = vmax.f32 %v2668, 0.0
    %v3080 = vmax.f32 %v2670, 0.0
    %v3081 = vmax.f32 %v2781, 0.0
    %v3082 = vmax.f32 %v2783, 0.0
    %v3083 = vmax.f32 %v2894, 0.0
    %v3084 = vmax.f32 %v2896, 0.0
    %v3085 = vmax.f32 %v3003, 0.0
    %v3086 = vmax.f32 %v2335, 0.0
    %v3087 = vmax.f32 %v2337, 0.0
    %v3088 = vmax.f32 %v2448, 0.0
    %v3089 = vmax.f32 %v2450, 0.0
    %v3090 = vmax.f32 %v2561, 0.0
    %v3091 = vmax.f32 %v2563, 0.0
    %v3092 = vmax.f32 %v2674, 0.0
    %v3093 = vmax.f32 %v2676, 0.0
    %v3094 = vmax.f32 %v2787, 0.0
    %v3095 = vmax.f32 %v2789, 0.0
    %v3096 = vmax.f32 %v2900, 0.0
    %v3097 = vmax.f32 %v2902, 0.0
    %v3098 = vmax.f32 %v3008, 0.0
    %v3099 = vmax.f32 %v2341, 0.0
    %v3100 = vmax.f32 %v2343, 0.0
    %v3101 = vmax.f32 %v2454, 0.0
    %v3102 = vmax.f32 %v2456, 0.0
    %v3103 = vmax.f32 %v2567, 0.0
    %v3104 = vmax.f32 %v2569, 0.0
    %v3105 = vmax.f32 %v2680, 0.0
    %v3106 = vmax.f32 %v2682, 0.0
    %v3107 = vmax.f32 %v2793, 0.0
    %v3108 = vmax.f32 %v2795, 0.0
    %v3109 = vmax.f32 %v2906, 0.0
    %v3110 = vmax.f32 %v2908, 0.0
    %v3111 = vmax.f32 %v3013, 0.0
    %v3112 = vmax.f32 %v2347, 0.0
    %v3113 = vmax.f32 %v2349, 0.0
    %v3114 = vmax.f32 %v2460, 0.0
    %v3115 = vmax.f32 %v2462, 0.0
    %v3116 = vmax.f32 %v2573, 0.0
    %v3117 = vmax.f32 %v2575, 0.0
    %v3118 = vmax.f32 %v2686, 0.0
    %v3119 = vmax.f32 %v2688, 0.0
    %v3120 = vmax.f32 %v2799, 0.0
    %v3121 = vmax.f32 %v2801, 0.0
    %v3122 = vmax.f32 %v2912, 0.0
    %v3123 = vmax.f32 %v2914, 0.0
    %v3124 = vmax.f32 %v3018, 0.0
    %v3125 = vld [vmem:[#allocation10] sm:$0xff]
    %v3126 = vld [vmem:[%s9] sm:$0xff]
    %3128 = vset.pattern.permute.xlu0 0
    %3129 = vperm.xlu0 %3128, %v3126
    %v3130 = vpop.permute.xlu0 %3129
    %vm3132 = vcmask 523264
    %v3134 = vsel %vm3132, %v3125, 0
    %3136 = vmatprep.subr.mxu0 0.0
    %3137 = vmatpush1.msra.mxu0 0.0
    %3138 = vmatprep.subr.mxu0 0.0
    %3139 = vmatpush1.msra.mxu0 0.0
    %3140 = vmatprep.subr.mxu0 0.0
    %3141 = vmatpush1.msra.mxu0 0.0
    %3142 = vmatprep.subr.mxu0 0.0
    %3143 = vmatpush1.msra.mxu0 0.0
    %3144 = vmatprep.subr.mxu0 0.0
    %3145 = vmatpush1.msra.mxu0 0.0
    %3146 = vmatprep.subr.mxu0 0.0
    %3147 = vmatpush1.msra.mxu0 0.0
    %3148 = vmatprep.subr.mxu0 0.0
    %3149 = vmatpush1.msra.mxu0 0.0
    %3150 = vmatprep.subr.mxu0 0.0
    %3151 = vmatpush1.msra.mxu0 0.0
    %3152 = vmatprep.subr.mxu0 %v3113
    %3153 = vmatpush1.msra.mxu0 %v3112
    %3154 = vmatprep.subr.mxu0 %v3100
    %3155 = vmatpush1.msra.mxu0 %v3099
    %3156 = vmatprep.subr.mxu0 %v3087
    %3157 = vmatpush1.msra.mxu0 %v3086
    %3158 = vmatprep.subr.mxu0 %v3074
    %3159 = vmatpush1.msra.mxu0 %v3073
    %3160 = vmatprep.subr.mxu0 %v3061
    %3161 = vmatpush1.msra.mxu0 %v3060
    %3162 = vmatprep.subr.mxu0 %v3048
    %3163 = vmatpush1.msra.mxu0 %v3047
    %3164 = vmatprep.subr.mxu0 %v3035
    %3165 = vmatpush1.msra.mxu0 %v3034
    %3166 = vmatprep.subr.mxu0 %v3022
    %3167 = vmatpush1.msra.mxu0 %v3021
    %3168 = vmatprep.subr.mxu0 0.0
    %3169 = vmatpush2.msra.mxu0 0.0
    %3170 = vmatprep.subr.mxu0 0.0
    %3171 = vmatpush2.msra.mxu0 0.0
    %3172 = vmatprep.subr.mxu0 0.0
    %3173 = vmatpush2.msra.mxu0 0.0
    %3174 = vmatprep.subr.mxu0 0.0
    %3175 = vmatpush2.msra.mxu0 0.0
    %3176 = vmatprep.subr.mxu0 0.0
    %3177 = vmatpush2.msra.mxu0 0.0
    %3178 = vmatprep.subr.mxu0 0.0
    %3179 = vmatpush2.msra.mxu0 0.0
    %3180 = vmatprep.subr.mxu0 0.0
    %3181 = vmatpush2.msra.mxu0 0.0
    %3182 = vmatprep.subr.mxu0 0.0
    %3183 = vmatpush2.msra.mxu0 0.0
    %3184 = vmatprep.subr.mxu0 0.0
    %3185 = vmatpush2.msra.mxu0 0.0
    %3186 = vmatprep.subr.mxu0 0.0
    %3187 = vmatpush2.msra.mxu0 0.0
    %3188 = vmatprep.subr.mxu0 0.0
    %3189 = vmatpush2.msra.mxu0 0.0
    %3190 = vmatprep.subr.mxu0 0.0
    %3191 = vmatpush2.msra.mxu0 0.0
    %3192 = vmatprep.subr.mxu0 0.0
    %3193 = vmatpush2.msra.mxu0 0.0
    %3194 = vmatprep.subr.mxu0 0.0
    %3195 = vmatpush2.msra.mxu0 0.0
    %3196 = vmatprep.subr.mxu0 0.0
    %3197 = vmatpush2.msra.mxu0 0.0
    %3198 = vmatprep.subr.mxu0 0.0
    %3199 = vmatpush2.msra.mxu0 0.0
    %3200 = vmatprep.mubr.f32.mxu0 0.0
    %3201 = vmatmul.mubr.f32.gmra.mxu0 %v3134
    %v3202 = vpop.f32.mrf.mxu0
    %v3203 = vadd.f32 %v3130, %v3202
    %v3204 = vpop.f32.mrf.mxu0
    %v3205 = vadd.f32 %v3130, %v3204
    %3206 = vdwg.mxu0
    %3207 = vmatprep.subr.mxu0 0.0
    %3208 = vmatpush1.msra.mxu0 0.0
    %3209 = vmatprep.subr.mxu0 0.0
    %3210 = vmatpush1.msra.mxu0 0.0
    %3211 = vmatprep.subr.mxu0 0.0
    %3212 = vmatpush1.msra.mxu0 0.0
    %3213 = vmatprep.subr.mxu0 0.0
    %3214 = vmatpush1.msra.mxu0 0.0
    %3215 = vmatprep.subr.mxu0 0.0
    %3216 = vmatpush1.msra.mxu0 0.0
    %3217 = vmatprep.subr.mxu0 0.0
    %3218 = vmatpush1.msra.mxu0 0.0
    %3219 = vmatprep.subr.mxu0 0.0
    %3220 = vmatpush1.msra.mxu0 0.0
    %3221 = vmatprep.subr.mxu0 0.0
    %3222 = vmatpush1.msra.mxu0 0.0
    %3223 = vmatprep.subr.mxu0 %v3115
    %3224 = vmatpush1.msra.mxu0 %v3114
    %3225 = vmatprep.subr.mxu0 %v3102
    %3226 = vmatpush1.msra.mxu0 %v3101
    %3227 = vmatprep.subr.mxu0 %v3089
    %3228 = vmatpush1.msra.mxu0 %v3088
    %3229 = vmatprep.subr.mxu0 %v3076
    %3230 = vmatpush1.msra.mxu0 %v3075
    %3231 = vmatprep.subr.mxu0 %v3063
    %3232 = vmatpush1.msra.mxu0 %v3062
    %3233 = vmatprep.subr.mxu0 %v3050
    %3234 = vmatpush1.msra.mxu0 %v3049
    %3235 = vmatprep.subr.mxu0 %v3037
    %3236 = vmatpush1.msra.mxu0 %v3036
    %3237 = vmatprep.subr.mxu0 %v3024
    %3238 = vmatpush1.msra.mxu0 %v3023
    %3239 = vmatprep.subr.mxu0 0.0
    %3240 = vmatpush2.msra.mxu0 0.0
    %3241 = vmatprep.subr.mxu0 0.0
    %3242 = vmatpush2.msra.mxu0 0.0
    %3243 = vmatprep.subr.mxu0 0.0
    %3244 = vmatpush2.msra.mxu0 0.0
    %3245 = vmatprep.subr.mxu0 0.0
    %3246 = vmatpush2.msra.mxu0 0.0
    %3247 = vmatprep.subr.mxu0 0.0
    %3248 = vmatpush2.msra.mxu0 0.0
    %3249 = vmatprep.subr.mxu0 0.0
    %3250 = vmatpush2.msra.mxu0 0.0
    %3251 = vmatprep.subr.mxu0 0.0
    %3252 = vmatpush2.msra.mxu0 0.0
    %3253 = vmatprep.subr.mxu0 0.0
    %3254 = vmatpush2.msra.mxu0 0.0
    %3255 = vmatprep.subr.mxu0 0.0
    %3256 = vmatpush2.msra.mxu0 0.0
    %3257 = vmatprep.subr.mxu0 0.0
    %3258 = vmatpush2.msra.mxu0 0.0
    %3259 = vmatprep.subr.mxu0 0.0
    %3260 = vmatpush2.msra.mxu0 0.0
    %3261 = vmatprep.subr.mxu0 0.0
    %3262 = vmatpush2.msra.mxu0 0.0
    %3263 = vmatprep.subr.mxu0 0.0
    %3264 = vmatpush2.msra.mxu0 0.0
    %3265 = vmatprep.subr.mxu0 0.0
    %3266 = vmatpush2.msra.mxu0 0.0
    %3267 = vmatprep.subr.mxu0 0.0
    %3268 = vmatpush2.msra.mxu0 0.0
    %3269 = vmatprep.subr.mxu0 0.0
    %3270 = vmatpush2.msra.mxu0 0.0
    %3271 = vmatprep.mubr.f32.mxu0 0.0
    %3272 = vmatmul.mubr.f32.gmra.mxu0 %v3134
    %v3273 = vpop.f32.mrf.mxu0
    %v3274 = vadd.f32 %v3130, %v3273
    %v3275 = vpop.f32.mrf.mxu0
    %v3276 = vadd.f32 %v3130, %v3275
    %3277 = vdwg.mxu0
    %3278 = vmatprep.subr.mxu0 0.0
    %3279 = vmatpush1.msra.mxu0 0.0
    %3280 = vmatprep.subr.mxu0 0.0
    %3281 = vmatpush1.msra.mxu0 0.0
    %3282 = vmatprep.subr.mxu0 0.0
    %3283 = vmatpush1.msra.mxu0 0.0
    %3284 = vmatprep.subr.mxu0 0.0
    %3285 = vmatpush1.msra.mxu0 0.0
    %3286 = vmatprep.subr.mxu0 0.0
    %3287 = vmatpush1.msra.mxu0 0.0
    %3288 = vmatprep.subr.mxu0 0.0
    %3289 = vmatpush1.msra.mxu0 0.0
    %3290 = vmatprep.subr.mxu0 0.0
    %3291 = vmatpush1.msra.mxu0 0.0
    %3292 = vmatprep.subr.mxu0 0.0
    %3293 = vmatpush1.msra.mxu0 0.0
    %3294 = vmatprep.subr.mxu0 %v3117
    %3295 = vmatpush1.msra.mxu0 %v3116
    %3296 = vmatprep.subr.mxu0 %v3104
    %3297 = vmatpush1.msra.mxu0 %v3103
    %3298 = vmatprep.subr.mxu0 %v3091
    %3299 = vmatpush1.msra.mxu0 %v3090
    %3300 = vmatprep.subr.mxu0 %v3078
    %3301 = vmatpush1.msra.mxu0 %v3077
    %3302 = vmatprep.subr.mxu0 %v3065
    %3303 = vmatpush1.msra.mxu0 %v3064
    %3304 = vmatprep.subr.mxu0 %v3052
    %3305 = vmatpush1.msra.mxu0 %v3051
    %3306 = vmatprep.subr.mxu0 %v3039
    %3307 = vmatpush1.msra.mxu0 %v3038
    %3308 = vmatprep.subr.mxu0 %v3026
    %3309 = vmatpush1.msra.mxu0 %v3025
    %3310 = vmatprep.subr.mxu0 0.0
    %3311 = vmatpush2.msra.mxu0 0.0
    %3312 = vmatprep.subr.mxu0 0.0
    %3313 = vmatpush2.msra.mxu0 0.0
    %3314 = vmatprep.subr.mxu0 0.0
    %3315 = vmatpush2.msra.mxu0 0.0
    %3316 = vmatprep.subr.mxu0 0.0
    %3317 = vmatpush2.msra.mxu0 0.0
    %3318 = vmatprep.subr.mxu0 0.0
    %3319 = vmatpush2.msra.mxu0 0.0
    %3320 = vmatprep.subr.mxu0 0.0
    %3321 = vmatpush2.msra.mxu0 0.0
    %3322 = vmatprep.subr.mxu0 0.0
    %3323 = vmatpush2.msra.mxu0 0.0
    %3324 = vmatprep.subr.mxu0 0.0
    %3325 = vmatpush2.msra.mxu0 0.0
    %3326 = vmatprep.subr.mxu0 0.0
    %3327 = vmatpush2.msra.mxu0 0.0
    %3328 = vmatprep.subr.mxu0 0.0
    %3329 = vmatpush2.msra.mxu0 0.0
    %3330 = vmatprep.subr.mxu0 0.0
    %3331 = vmatpush2.msra.mxu0 0.0
    %3332 = vmatprep.subr.mxu0 0.0
    %3333 = vmatpush2.msra.mxu0 0.0
    %3334 = vmatprep.subr.mxu0 0.0
    %3335 = vmatpush2.msra.mxu0 0.0
    %3336 = vmatprep.subr.mxu0 0.0
    %3337 = vmatpush2.msra.mxu0 0.0
    %3338 = vmatprep.subr.mxu0 0.0
    %3339 = vmatpush2.msra.mxu0 0.0
    %3340 = vmatprep.subr.mxu0 0.0
    %3341 = vmatpush2.msra.mxu0 0.0
    %3342 = vmatprep.mubr.f32.mxu0 0.0
    %3343 = vmatmul.mubr.f32.gmra.mxu0 %v3134
    %v3344 = vpop.f32.mrf.mxu0
    %v3345 = vadd.f32 %v3130, %v3344
    %v3346 = vpop.f32.mrf.mxu0
    %v3347 = vadd.f32 %v3130, %v3346
    %3348 = vdwg.mxu0
    %3349 = vmatprep.subr.mxu0 0.0
    %3350 = vmatpush1.msra.mxu0 0.0
    %3351 = vmatprep.subr.mxu0 0.0
    %3352 = vmatpush1.msra.mxu0 0.0
    %3353 = vmatprep.subr.mxu0 0.0
    %3354 = vmatpush1.msra.mxu0 0.0
    %3355 = vmatprep.subr.mxu0 0.0
    %3356 = vmatpush1.msra.mxu0 0.0
    %3357 = vmatprep.subr.mxu0 0.0
    %3358 = vmatpush1.msra.mxu0 0.0
    %3359 = vmatprep.subr.mxu0 0.0
    %3360 = vmatpush1.msra.mxu0 0.0
    %3361 = vmatprep.subr.mxu0 0.0
    %3362 = vmatpush1.msra.mxu0 0.0
    %3363 = vmatprep.subr.mxu0 0.0
    %3364 = vmatpush1.msra.mxu0 0.0
    %3365 = vmatprep.subr.mxu0 %v3119
    %3366 = vmatpush1.msra.mxu0 %v3118
    %3367 = vmatprep.subr.mxu0 %v3106
    %3368 = vmatpush1.msra.mxu0 %v3105
    %3369 = vmatprep.subr.mxu0 %v3093
    %3370 = vmatpush1.msra.mxu0 %v3092
    %3371 = vmatprep.subr.mxu0 %v3080
    %3372 = vmatpush1.msra.mxu0 %v3079
    %3373 = vmatprep.subr.mxu0 %v3067
    %3374 = vmatpush1.msra.mxu0 %v3066
    %3375 = vmatprep.subr.mxu0 %v3054
    %3376 = vmatpush1.msra.mxu0 %v3053
    %3377 = vmatprep.subr.mxu0 %v3041
    %3378 = vmatpush1.msra.mxu0 %v3040
    %3379 = vmatprep.subr.mxu0 %v3028
    %3380 = vmatpush1.msra.mxu0 %v3027
    %3381 = vmatprep.subr.mxu0 0.0
    %3382 = vmatpush2.msra.mxu0 0.0
    %3383 = vmatprep.subr.mxu0 0.0
    %3384 = vmatpush2.msra.mxu0 0.0
    %3385 = vmatprep.subr.mxu0 0.0
    %3386 = vmatpush2.msra.mxu0 0.0
    %3387 = vmatprep.subr.mxu0 0.0
    %3388 = vmatpush2.msra.mxu0 0.0
    %3389 = vmatprep.subr.mxu0 0.0
    %3390 = vmatpush2.msra.mxu0 0.0
    %3391 = vmatprep.subr.mxu0 0.0
    %3392 = vmatpush2.msra.mxu0 0.0
    %3393 = vmatprep.subr.mxu0 0.0
    %3394 = vmatpush2.msra.mxu0 0.0
    %3395 = vmatprep.subr.mxu0 0.0
    %3396 = vmatpush2.msra.mxu0 0.0
    %3397 = vmatprep.subr.mxu0 0.0
    %3398 = vmatpush2.msra.mxu0 0.0
    %3399 = vmatprep.subr.mxu0 0.0
    %3400 = vmatpush2.msra.mxu0 0.0
    %3401 = vmatprep.subr.mxu0 0.0
    %3402 = vmatpush2.msra.mxu0 0.0
    %3403 = vmatprep.subr.mxu0 0.0
    %3404 = vmatpush2.msra.mxu0 0.0
    %3405 = vmatprep.subr.mxu0 0.0
    %3406 = vmatpush2.msra.mxu0 0.0
    %3407 = vmatprep.subr.mxu0 0.0
    %3408 = vmatpush2.msra.mxu0 0.0
    %3409 = vmatprep.subr.mxu0 0.0
    %3410 = vmatpush2.msra.mxu0 0.0
    %3411 = vmatprep.subr.mxu0 0.0
    %3412 = vmatpush2.msra.mxu0 0.0
    %3413 = vmatprep.mubr.f32.mxu0 0.0
    %3414 = vmatmul.mubr.f32.gmra.mxu0 %v3134
    %v3415 = vpop.f32.mrf.mxu0
    %v3416 = vadd.f32 %v3130, %v3415
    %v3417 = vpop.f32.mrf.mxu0
    %v3418 = vadd.f32 %v3130, %v3417
    %3419 = vdwg.mxu0
    %3420 = vmatprep.subr.mxu0 0.0
    %3421 = vmatpush1.msra.mxu0 0.0
    %3422 = vmatprep.subr.mxu0 0.0
    %3423 = vmatpush1.msra.mxu0 0.0
    %3424 = vmatprep.subr.mxu0 0.0
    %3425 = vmatpush1.msra.mxu0 0.0
    %3426 = vmatprep.subr.mxu0 0.0
    %3427 = vmatpush1.msra.mxu0 0.0
    %3428 = vmatprep.subr.mxu0 0.0
    %3429 = vmatpush1.msra.mxu0 0.0
    %3430 = vmatprep.subr.mxu0 0.0
    %3431 = vmatpush1.msra.mxu0 0.0
    %3432 = vmatprep.subr.mxu0 0.0
    %3433 = vmatpush1.msra.mxu0 0.0
    %3434 = vmatprep.subr.mxu0 0.0
    %3435 = vmatpush1.msra.mxu0 0.0
    %3436 = vmatprep.subr.mxu0 %v3121
    %3437 = vmatpush1.msra.mxu0 %v3120
    %3438 = vmatprep.subr.mxu0 %v3108
    %3439 = vmatpush1.msra.mxu0 %v3107
    %3440 = vmatprep.subr.mxu0 %v3095
    %3441 = vmatpush1.msra.mxu0 %v3094
    %3442 = vmatprep.subr.mxu0 %v3082
    %3443 = vmatpush1.msra.mxu0 %v3081
    %3444 = vmatprep.subr.mxu0 %v3069
    %3445 = vmatpush1.msra.mxu0 %v3068
    %3446 = vmatprep.subr.mxu0 %v3056
    %3447 = vmatpush1.msra.mxu0 %v3055
    %3448 = vmatprep.subr.mxu0 %v3043
    %3449 = vmatpush1.msra.mxu0 %v3042
    %3450 = vmatprep.subr.mxu0 %v3030
    %3451 = vmatpush1.msra.mxu0 %v3029
    %3452 = vmatprep.subr.mxu0 0.0
    %3453 = vmatpush2.msra.mxu0 0.0
    %3454 = vmatprep.subr.mxu0 0.0
    %3455 = vmatpush2.msra.mxu0 0.0
    %3456 = vmatprep.subr.mxu0 0.0
    %3457 = vmatpush2.msra.mxu0 0.0
    %3458 = vmatprep.subr.mxu0 0.0
    %3459 = vmatpush2.msra.mxu0 0.0
    %3460 = vmatprep.subr.mxu0 0.0
    %3461 = vmatpush2.msra.mxu0 0.0
    %3462 = vmatprep.subr.mxu0 0.0
    %3463 = vmatpush2.msra.mxu0 0.0
    %3464 = vmatprep.subr.mxu0 0.0
    %3465 = vmatpush2.msra.mxu0 0.0
    %3466 = vmatprep.subr.mxu0 0.0
    %3467 = vmatpush2.msra.mxu0 0.0
    %3468 = vmatprep.subr.mxu0 0.0
    %3469 = vmatpush2.msra.mxu0 0.0
    %3470 = vmatprep.subr.mxu0 0.0
    %3471 = vmatpush2.msra.mxu0 0.0
    %3472 = vmatprep.subr.mxu0 0.0
    %3473 = vmatpush2.msra.mxu0 0.0
    %3474 = vmatprep.subr.mxu0 0.0
    %3475 = vmatpush2.msra.mxu0 0.0
    %3476 = vmatprep.subr.mxu0 0.0
    %3477 = vmatpush2.msra.mxu0 0.0
    %3478 = vmatprep.subr.mxu0 0.0
    %3479 = vmatpush2.msra.mxu0 0.0
    %3480 = vmatprep.subr.mxu0 0.0
    %3481 = vmatpush2.msra.mxu0 0.0
    %3482 = vmatprep.subr.mxu0 0.0
    %3483 = vmatpush2.msra.mxu0 0.0
    %3484 = vmatprep.mubr.f32.mxu0 0.0
    %3485 = vmatmul.mubr.f32.gmra.mxu0 %v3134
    %v3486 = vpop.f32.mrf.mxu0
    %v3487 = vadd.f32 %v3130, %v3486
    %v3488 = vpop.f32.mrf.mxu0
    %v3489 = vadd.f32 %v3130, %v3488
    %3490 = vdwg.mxu0
    %3491 = vmatprep.subr.mxu0 0.0
    %3492 = vmatpush1.msra.mxu0 0.0
    %3493 = vmatprep.subr.mxu0 0.0
    %3494 = vmatpush1.msra.mxu0 0.0
    %3495 = vmatprep.subr.mxu0 0.0
    %3496 = vmatpush1.msra.mxu0 0.0
    %3497 = vmatprep.subr.mxu0 0.0
    %3498 = vmatpush1.msra.mxu0 0.0
    %3499 = vmatprep.subr.mxu0 0.0
    %3500 = vmatpush1.msra.mxu0 0.0
    %3501 = vmatprep.subr.mxu0 0.0
    %3502 = vmatpush1.msra.mxu0 0.0
    %3503 = vmatprep.subr.mxu0 0.0
    %3504 = vmatpush1.msra.mxu0 0.0
    %3505 = vmatprep.subr.mxu0 0.0
    %3506 = vmatpush1.msra.mxu0 0.0
    %3507 = vmatprep.subr.mxu0 %v3123
    %3508 = vmatpush1.msra.mxu0 %v3122
    %3509 = vmatprep.subr.mxu0 %v3110
    %3510 = vmatpush1.msra.mxu0 %v3109
    %3511 = vmatprep.subr.mxu0 %v3097
    %3512 = vmatpush1.msra.mxu0 %v3096
    %3513 = vmatprep.subr.mxu0 %v3084
    %3514 = vmatpush1.msra.mxu0 %v3083
    %3515 = vmatprep.subr.mxu0 %v3071
    %3516 = vmatpush1.msra.mxu0 %v3070
    %3517 = vmatprep.subr.mxu0 %v3058
    %3518 = vmatpush1.msra.mxu0 %v3057
    %3519 = vmatprep.subr.mxu0 %v3045
    %3520 = vmatpush1.msra.mxu0 %v3044
    %3521 = vmatprep.subr.mxu0 %v3032
    %3522 = vmatpush1.msra.mxu0 %v3031
    %3523 = vmatprep.subr.mxu0 0.0
    %3524 = vmatpush2.msra.mxu0 0.0
    %3525 = vmatprep.subr.mxu0 0.0
    %3526 = vmatpush2.msra.mxu0 0.0
    %3527 = vmatprep.subr.mxu0 0.0
    %3528 = vmatpush2.msra.mxu0 0.0
    %3529 = vmatprep.subr.mxu0 0.0
    %3530 = vmatpush2.msra.mxu0 0.0
    %3531 = vmatprep.subr.mxu0 0.0
    %3532 = vmatpush2.msra.mxu0 0.0
    %3533 = vmatprep.subr.mxu0 0.0
    %3534 = vmatpush2.msra.mxu0 0.0
    %3535 = vmatprep.subr.mxu0 0.0
    %3536 = vmatpush2.msra.mxu0 0.0
    %3537 = vmatprep.subr.mxu0 0.0
    %3538 = vmatpush2.msra.mxu0 0.0
    %3539 = vmatprep.subr.mxu0 0.0
    %3540 = vmatpush2.msra.mxu0 0.0
    %3541 = vmatprep.subr.mxu0 0.0
    %3542 = vmatpush2.msra.mxu0 0.0
    %3543 = vmatprep.subr.mxu0 0.0
    %3544 = vmatpush2.msra.mxu0 0.0
    %3545 = vmatprep.subr.mxu0 0.0
    %3546 = vmatpush2.msra.mxu0 0.0
    %3547 = vmatprep.subr.mxu0 0.0
    %3548 = vmatpush2.msra.mxu0 0.0
    %3549 = vmatprep.subr.mxu0 0.0
    %3550 = vmatpush2.msra.mxu0 0.0
    %3551 = vmatprep.subr.mxu0 0.0
    %3552 = vmatpush2.msra.mxu0 0.0
    %3553 = vmatprep.subr.mxu0 0.0
    %3554 = vmatpush2.msra.mxu0 0.0
    %3555 = vmatprep.mubr.f32.mxu0 0.0
    %3556 = vmatmul.mubr.f32.gmra.mxu0 %v3134
    %v3557 = vpop.f32.mrf.mxu0
    %v3558 = vadd.f32 %v3130, %v3557
    %v3559 = vpop.f32.mrf.mxu0
    %v3560 = vadd.f32 %v3130, %v3559
    %3561 = vdwg.mxu0
    %3562 = vmatprep.subr.mxu0 0.0
    %3563 = vmatpush1.msra.mxu0 0.0
    %3564 = vmatprep.subr.mxu0 0.0
    %3565 = vmatpush1.msra.mxu0 0.0
    %3566 = vmatprep.subr.mxu0 0.0
    %3567 = vmatpush1.msra.mxu0 0.0
    %3568 = vmatprep.subr.mxu0 0.0
    %3569 = vmatpush1.msra.mxu0 0.0
    %3570 = vmatprep.subr.mxu0 0.0
    %3571 = vmatpush1.msra.mxu0 0.0
    %3572 = vmatprep.subr.mxu0 0.0
    %3573 = vmatpush1.msra.mxu0 0.0
    %3574 = vmatprep.subr.mxu0 0.0
    %3575 = vmatpush1.msra.mxu0 0.0
    %3576 = vmatprep.subr.mxu0 0.0
    %3577 = vmatpush1.msra.mxu0 0.0
    %3578 = vmatprep.subr.mxu0 0.0
    %3579 = vmatpush1.msra.mxu0 %v3124
    %3580 = vmatprep.subr.mxu0 0.0
    %3581 = vmatpush1.msra.mxu0 %v3111
    %3582 = vmatprep.subr.mxu0 0.0
    %3583 = vmatpush1.msra.mxu0 %v3098
    %3584 = vmatprep.subr.mxu0 0.0
    %3585 = vmatpush1.msra.mxu0 %v3085
    %3586 = vmatprep.subr.mxu0 0.0
    %3587 = vmatpush1.msra.mxu0 %v3072
    %3588 = vmatprep.subr.mxu0 0.0
    %3589 = vmatpush1.msra.mxu0 %v3059
    %3590 = vmatprep.subr.mxu0 0.0
    %3591 = vmatpush1.msra.mxu0 %v3046
    %3592 = vmatprep.subr.mxu0 0.0
    %3593 = vmatpush1.msra.mxu0 %v3033
    %3594 = vmatprep.subr.mxu0 0.0
    %3595 = vmatpush2.msra.mxu0 0.0
    %3596 = vmatprep.subr.mxu0 0.0
    %3597 = vmatpush2.msra.mxu0 0.0
    %3598 = vmatprep.subr.mxu0 0.0
    %3599 = vmatpush2.msra.mxu0 0.0
    %3600 = vmatprep.subr.mxu0 0.0
    %3601 = vmatpush2.msra.mxu0 0.0
    %3602 = vmatprep.subr.mxu0 0.0
    %3603 = vmatpush2.msra.mxu0 0.0
    %3604 = vmatprep.subr.mxu0 0.0
    %3605 = vmatpush2.msra.mxu0 0.0
    %3606 = vmatprep.subr.mxu0 0.0
    %3607 = vmatpush2.msra.mxu0 0.0
    %3608 = vmatprep.subr.mxu0 0.0
    %3609 = vmatpush2.msra.mxu0 0.0
    %3610 = vmatprep.subr.mxu0 0.0
    %3611 = vmatpush2.msra.mxu0 0.0
    %3612 = vmatprep.subr.mxu0 0.0
    %3613 = vmatpush2.msra.mxu0 0.0
    %3614 = vmatprep.subr.mxu0 0.0
    %3615 = vmatpush2.msra.mxu0 0.0
    %3616 = vmatprep.subr.mxu0 0.0
    %3617 = vmatpush2.msra.mxu0 0.0
    %3618 = vmatprep.subr.mxu0 0.0
    %3619 = vmatpush2.msra.mxu0 0.0
    %3620 = vmatprep.subr.mxu0 0.0
    %3621 = vmatpush2.msra.mxu0 0.0
    %3622 = vmatprep.subr.mxu0 0.0
    %3623 = vmatpush2.msra.mxu0 0.0
    %3624 = vmatprep.subr.mxu0 0.0
    %3625 = vmatpush2.msra.mxu0 0.0
    %3626 = vmatprep.mubr.f32.mxu0 0.0
    %3627 = vmatmul.mubr.f32.gmra.mxu0 %v3134
    %v3628 = vpop.f32.mrf.mxu0
    %v3629 = vadd.f32 %v3130, %v3628
    %v3630 = vpop.f32.mrf.mxu0
    %3631 = vdwg.mxu0
    %v3632 = vld [vmem:[#allocation11] sm:$0xff]
    %v3633 = vld [vmem:[#allocation11 + $0x8] sm:$0xff]
    %v3634 = vld [vmem:[#allocation11 + $0x10] sm:$0xff]
    %v3635 = vld [vmem:[#allocation11 + $0x18] sm:$0xff]
    %v3636 = vld [vmem:[#allocation11 + $0x20] sm:$0xff]
    %v3637 = vld [vmem:[#allocation11 + $0x28] sm:$0xff]
    %v3638 = vld [vmem:[#allocation11 + $0x30] sm:$0xff]
    %v3639 = vld [vmem:[#allocation11 + $0x38] sm:$0xff]
    %v3640 = vld [vmem:[#allocation11 + $0x40] sm:$0xff]
    %v3641 = vld [vmem:[#allocation11 + $0x48] sm:$0xff]
    %v3642 = vld [vmem:[#allocation11 + $0x50] sm:$0xff]
    %v3643 = vld [vmem:[#allocation11 + $0x58] sm:$0xff]
    %v3644 = vld [vmem:[#allocation11 + $0x60] sm:$0xff]
    %v3645 = vld [vmem:[#allocation11 + $0x68] sm:$0xff]
    %v3646 = vld [vmem:[#allocation11 + $0x70] sm:$0xff]
    %v3647 = vld [vmem:[#allocation11 + $0x78] sm:$0xff]
    %v3648 = vld [vmem:[#allocation11 + $0x80] sm:$0xff]
    %v3649 = vld [vmem:[#allocation11 + $0x88] sm:$0xff]
    %v3650 = vld [vmem:[#allocation11 + $0x90] sm:$0xff]
    %v3651 = vld [vmem:[#allocation11 + $0x98] sm:$0xff]
    %v3652 = vld [vmem:[#allocation11 + $0xa0] sm:$0xff]
    %v3653 = vld [vmem:[#allocation11 + $0xa8] sm:$0xff]
    %v3654 = vld [vmem:[#allocation11 + $0xb0] sm:$0xff]
    %v3655 = vld [vmem:[#allocation11 + $0xb8] sm:$0xff]
    %v3656 = vld [vmem:[#allocation11 + $0xc0] sm:$0xff]
    %v3657 = vld [vmem:[#allocation11 + $0xc8] sm:$0xff]
    %v3658 = vld [vmem:[#allocation11 + $0xd0] sm:$0xff]
    %v3659 = vld [vmem:[#allocation11 + $0xd8] sm:$0xff]
    %v3660 = vld [vmem:[#allocation11 + $0xe0] sm:$0xff]
    %v3661 = vld [vmem:[#allocation11 + $0xe8] sm:$0xff]
    %v3662 = vld [vmem:[#allocation11 + $0xf0] sm:$0xff]
    %v3663 = vld [vmem:[#allocation11 + $0xf8] sm:$0xff]
    %v3664 = vld [vmem:[#allocation11 + $0x100] sm:$0xff]
    %v3665 = vld [vmem:[#allocation11 + $0x108] sm:$0xff]
    %v3666 = vld [vmem:[#allocation11 + $0x110] sm:$0xff]
    %v3667 = vld [vmem:[#allocation11 + $0x118] sm:$0xff]
    %v3668 = vld [vmem:[#allocation11 + $0x120] sm:$0xff]
    %v3669 = vld [vmem:[#allocation11 + $0x128] sm:$0xff]
    %v3670 = vld [vmem:[#allocation11 + $0x130] sm:$0xff]
    %v3671 = vld [vmem:[#allocation11 + $0x138] sm:$0xff]
    %v3672 = vld [vmem:[#allocation11 + $0x140] sm:$0xff]
    %v3673 = vld [vmem:[#allocation11 + $0x148] sm:$0xff]
    %v3674 = vld [vmem:[#allocation11 + $0x150] sm:$0xff]
    %v3675 = vld [vmem:[#allocation11 + $0x158] sm:$0xff]
    %v3676 = vld [vmem:[#allocation11 + $0x160] sm:$0xff]
    %v3677 = vld [vmem:[#allocation11 + $0x168] sm:$0xff]
    %v3678 = vld [vmem:[#allocation11 + $0x170] sm:$0xff]
    %v3679 = vld [vmem:[#allocation11 + $0x178] sm:$0xff]
    %v3680 = vld [vmem:[#allocation11 + $0x180] sm:$0xff]
    %v3681 = vld [vmem:[#allocation11 + $0x188] sm:$0xff]
    %v3682 = vld [vmem:[#allocation11 + $0x190] sm:$0xff]
    %v3683 = vld [vmem:[#allocation11 + $0x198] sm:$0xff]
    %v3684 = vld [vmem:[#allocation11 + $0x1a0] sm:$0xff]
    %v3685 = vld [vmem:[#allocation11 + $0x1a8] sm:$0xff]
    %v3686 = vld [vmem:[#allocation11 + $0x1b0] sm:$0xff]
    %v3687 = vld [vmem:[#allocation11 + $0x1b8] sm:$0xff]
    %v3688 = vld [vmem:[#allocation11 + $0x1c0] sm:$0xff]
    %v3689 = vld [vmem:[#allocation11 + $0x1c8] sm:$0xff]
    %v3690 = vld [vmem:[#allocation11 + $0x1d0] sm:$0xff]
    %v3691 = vld [vmem:[#allocation11 + $0x1d8] sm:$0xff]
    %v3692 = vld [vmem:[#allocation11 + $0x1e0] sm:$0xff]
    %v3693 = vld [vmem:[#allocation11 + $0x1e8] sm:$0xff]
    %v3694 = vld [vmem:[#allocation11 + $0x1f0] sm:$0xff]
    %v3695 = vld [vmem:[#allocation11 + $0x1f8] sm:$0xff]
    %v3696 = vld [vmem:[#allocation11 + $0x200] sm:$0xff]
    %v3697 = vld [vmem:[#allocation11 + $0x208] sm:$0xff]
    %v3698 = vld [vmem:[#allocation11 + $0x210] sm:$0xff]
    %v3699 = vld [vmem:[#allocation11 + $0x218] sm:$0xff]
    %v3700 = vld [vmem:[#allocation11 + $0x220] sm:$0xff]
    %v3701 = vld [vmem:[#allocation11 + $0x228] sm:$0xff]
    %v3702 = vld [vmem:[#allocation11 + $0x230] sm:$0xff]
    %v3703 = vld [vmem:[#allocation11 + $0x238] sm:$0xff]
    %v3704 = vld [vmem:[#allocation11 + $0x240] sm:$0xff]
    %v3705 = vld [vmem:[#allocation11 + $0x248] sm:$0xff]
    %v3706 = vld [vmem:[#allocation11 + $0x250] sm:$0xff]
    %v3707 = vld [vmem:[#allocation11 + $0x258] sm:$0xff]
    %v3708 = vld [vmem:[#allocation11 + $0x260] sm:$0xff]
    %v3709 = vld [vmem:[#allocation11 + $0x268] sm:$0xff]
    %v3710 = vld [vmem:[#allocation11 + $0x270] sm:$0xff]
    %v3711 = vld [vmem:[#allocation11 + $0x278] sm:$0xff]
    %v3712 = vld [vmem:[#allocation11 + $0x280] sm:$0xff]
    %v3713 = vld [vmem:[#allocation11 + $0x288] sm:$0xff]
    %v3714 = vld [vmem:[#allocation11 + $0x290] sm:$0xff]
    %v3715 = vld [vmem:[#allocation11 + $0x298] sm:$0xff]
    %v3716 = vld [vmem:[#allocation11 + $0x2a0] sm:$0xff]
    %v3717 = vld [vmem:[#allocation11 + $0x2a8] sm:$0xff]
    %v3718 = vld [vmem:[#allocation11 + $0x2b0] sm:$0xff]
    %v3719 = vld [vmem:[#allocation11 + $0x2b8] sm:$0xff]
    %v3720 = vld [vmem:[#allocation11 + $0x2c0] sm:$0xff]
    %v3721 = vld [vmem:[#allocation11 + $0x2c8] sm:$0xff]
    %v3722 = vld [vmem:[#allocation11 + $0x2d0] sm:$0xff]
    %v3723 = vld [vmem:[#allocation11 + $0x2d8] sm:$0xff]
    %v3724 = vld [vmem:[#allocation11 + $0x2e0] sm:$0xff]
    %v3725 = vld [vmem:[#allocation11 + $0x2e8] sm:$0xff]
    %v3726 = vld [vmem:[#allocation11 + $0x2f0] sm:$0xff]
    %v3727 = vld [vmem:[#allocation11 + $0x2f8] sm:$0xff]
    %v3728 = vld [vmem:[#allocation11 + $0x300] sm:$0xff]
    %v3729 = vld [vmem:[#allocation11 + $0x308] sm:$0xff]
    %v3730 = vld [vmem:[#allocation11 + $0x310] sm:$0xff]
    %v3731 = vld [vmem:[#allocation11 + $0x318] sm:$0xff]
    %v3732 = vld [vmem:[#allocation11 + $0x320] sm:$0xff]
    %v3733 = vld [vmem:[#allocation11 + $0x328] sm:$0xff]
    %v3734 = vld [vmem:[#allocation11 + $0x330] sm:$0xff]
    %v3735 = vld [vmem:[#allocation11 + $0x338] sm:$0xff]
    %v3736 = vld [vmem:[#allocation11 + $0x340] sm:$0xff]
    %v3737 = vld [vmem:[#allocation11 + $0x348] sm:$0xff]
    %v3738 = vld [vmem:[#allocation11 + $0x350] sm:$0xff]
    %v3739 = vld [vmem:[#allocation11 + $0x358] sm:$0xff]
    %v3740 = vld [vmem:[#allocation11 + $0x360] sm:$0xff]
    %v3741 = vld [vmem:[#allocation11 + $0x368] sm:$0xff]
    %v3742 = vld [vmem:[#allocation11 + $0x370] sm:$0xff]
    %v3743 = vld [vmem:[#allocation11 + $0x378] sm:$0xff]
    %v3744 = vld [vmem:[#allocation11 + $0x380] sm:$0xff]
    %v3745 = vld [vmem:[#allocation11 + $0x388] sm:$0xff]
    %v3746 = vld [vmem:[#allocation11 + $0x390] sm:$0xff]
    %v3747 = vld [vmem:[#allocation11 + $0x398] sm:$0xff]
    %v3748 = vld [vmem:[#allocation11 + $0x3a0] sm:$0xff]
    %v3749 = vld [vmem:[#allocation11 + $0x3a8] sm:$0xff]
    %v3750 = vld [vmem:[#allocation11 + $0x3b0] sm:$0xff]
    %v3751 = vld [vmem:[#allocation11 + $0x3b8] sm:$0xff]
    %v3752 = vld [vmem:[#allocation11 + $0x3c0] sm:$0xff]
    %v3753 = vld [vmem:[#allocation11 + $0x3c8] sm:$0xff]
    %v3754 = vld [vmem:[#allocation11 + $0x3d0] sm:$0xff]
    %v3755 = vld [vmem:[#allocation11 + $0x3d8] sm:$0xff]
    %v3756 = vld [vmem:[#allocation11 + $0x3e0] sm:$0xff]
    %v3757 = vld [vmem:[#allocation11 + $0x3e8] sm:$0xff]
    %v3758 = vld [vmem:[#allocation11 + $0x3f0] sm:$0xff]
    %v3759 = vld [vmem:[#allocation11 + $0x3f8] sm:$0xff]
    %v3760 = vld [vmem:[#allocation11 + $0x400] sm:$0xff]
    %v3761 = vld [vmem:[#allocation11 + $0x408] sm:$0xff]
    %v3762 = vld [vmem:[#allocation11 + $0x410] sm:$0xff]
    %v3763 = vld [vmem:[#allocation11 + $0x418] sm:$0xff]
    %v3764 = vld [vmem:[#allocation11 + $0x420] sm:$0xff]
    %v3765 = vld [vmem:[#allocation11 + $0x428] sm:$0xff]
    %v3766 = vld [vmem:[#allocation11 + $0x430] sm:$0xff]
    %v3767 = vld [vmem:[#allocation11 + $0x438] sm:$0xff]
    %v3768 = vld [vmem:[#allocation11 + $0x440] sm:$0xff]
    %v3769 = vld [vmem:[#allocation11 + $0x448] sm:$0xff]
    %v3770 = vld [vmem:[#allocation11 + $0x450] sm:$0xff]
    %v3771 = vld [vmem:[#allocation11 + $0x458] sm:$0xff]
    %v3772 = vld [vmem:[#allocation11 + $0x460] sm:$0xff]
    %v3773 = vld [vmem:[#allocation11 + $0x468] sm:$0xff]
    %v3774 = vld [vmem:[#allocation11 + $0x470] sm:$0xff]
    %v3775 = vld [vmem:[#allocation11 + $0x478] sm:$0xff]
    %v3776 = vld [vmem:[#allocation11 + $0x480] sm:$0xff]
    %v3777 = vld [vmem:[#allocation11 + $0x488] sm:$0xff]
    %v3778 = vld [vmem:[#allocation11 + $0x490] sm:$0xff]
    %v3779 = vld [vmem:[#allocation11 + $0x498] sm:$0xff]
    %v3780 = vld [vmem:[#allocation11 + $0x4a0] sm:$0xff]
    %v3781 = vld [vmem:[#allocation11 + $0x4a8] sm:$0xff]
    %v3782 = vld [vmem:[#allocation11 + $0x4b0] sm:$0xff]
    %v3783 = vld [vmem:[#allocation11 + $0x4b8] sm:$0xff]
    %v3784 = vld [vmem:[#allocation11 + $0x4c0] sm:$0xff]
    %v3785 = vld [vmem:[#allocation11 + $0x4c8] sm:$0xff]
    %v3786 = vld [vmem:[#allocation11 + $0x4d0] sm:$0xff]
    %v3787 = vld [vmem:[#allocation11 + $0x4d8] sm:$0xff]
    %v3788 = vld [vmem:[#allocation11 + $0x4e0] sm:$0xff]
    %v3789 = vld [vmem:[#allocation11 + $0x4e8] sm:$0xff]
    %v3790 = vld [vmem:[#allocation11 + $0x4f0] sm:$0xff]
    %v3791 = vld [vmem:[#allocation11 + $0x4f8] sm:$0xff]
    %v3792 = vld [vmem:[#allocation11 + $0x500] sm:$0xff]
    %v3793 = vld [vmem:[#allocation11 + $0x508] sm:$0xff]
    %v3794 = vld [vmem:[#allocation11 + $0x510] sm:$0xff]
    %v3795 = vld [vmem:[#allocation11 + $0x518] sm:$0xff]
    %v3796 = vld [vmem:[#allocation11 + $0x520] sm:$0xff]
    %v3797 = vld [vmem:[#allocation11 + $0x528] sm:$0xff]
    %v3798 = vld [vmem:[#allocation11 + $0x530] sm:$0xff]
    %v3799 = vld [vmem:[#allocation11 + $0x538] sm:$0xff]
    %v3800 = vld [vmem:[#allocation11 + $0x540] sm:$0xff]
    %v3801 = vld [vmem:[#allocation11 + $0x548] sm:$0xff]
    %v3802 = vld [vmem:[#allocation11 + $0x550] sm:$0xff]
    %v3803 = vld [vmem:[#allocation11 + $0x558] sm:$0xff]
    %v3804 = vld [vmem:[#allocation11 + $0x560] sm:$0xff]
    %v3805 = vld [vmem:[#allocation11 + $0x568] sm:$0xff]
    %v3806 = vld [vmem:[#allocation11 + $0x570] sm:$0xff]
    %v3807 = vld [vmem:[#allocation11 + $0x578] sm:$0xff]
    %v3808 = vld [vmem:[#allocation11 + $0x580] sm:$0xff]
    %v3809 = vld [vmem:[#allocation11 + $0x588] sm:$0xff]
    %v3810 = vld [vmem:[#allocation11 + $0x590] sm:$0xff]
    %v3811 = vld [vmem:[#allocation11 + $0x598] sm:$0xff]
    %v3812 = vld [vmem:[#allocation11 + $0x5a0] sm:$0xff]
    %v3813 = vld [vmem:[#allocation11 + $0x5a8] sm:$0xff]
    %v3814 = vld [vmem:[#allocation11 + $0x5b0] sm:$0xff]
    %v3815 = vld [vmem:[#allocation11 + $0x5b8] sm:$0xff]
    %v3816 = vld [vmem:[#allocation11 + $0x5c0] sm:$0xff]
    %v3817 = vld [vmem:[#allocation11 + $0x5c8] sm:$0xff]
    %v3818 = vld [vmem:[#allocation11 + $0x5d0] sm:$0xff]
    %v3819 = vld [vmem:[#allocation11 + $0x5d8] sm:$0xff]
    %v3820 = vld [vmem:[#allocation11 + $0x5e0] sm:$0xff]
    %v3821 = vld [vmem:[#allocation11 + $0x5e8] sm:$0xff]
    %v3822 = vld [vmem:[#allocation11 + $0x5f0] sm:$0xff]
    %v3823 = vld [vmem:[#allocation11 + $0x5f8] sm:$0xff]
    %v3824 = vld [vmem:[#allocation11 + $0x600] sm:$0xff]
    %v3825 = vld [vmem:[#allocation11 + $0x608] sm:$0xff]
    %v3826 = vld [vmem:[#allocation11 + $0x610] sm:$0xff]
    %v3827 = vld [vmem:[#allocation11 + $0x618] sm:$0xff]
    %v3828 = vld [vmem:[#allocation11 + $0x620] sm:$0xff]
    %v3829 = vld [vmem:[#allocation11 + $0x628] sm:$0xff]
    %v3830 = vld [vmem:[#allocation11 + $0x630] sm:$0xff]
    %v3831 = vld [vmem:[#allocation11 + $0x638] sm:$0xff]
    %v3832 = vld [vmem:[#allocation11 + $0x640] sm:$0xff]
    %v3833 = vld [vmem:[#allocation11 + $0x648] sm:$0xff]
    %v3834 = vld [vmem:[#allocation11 + $0x650] sm:$0xff]
    %v3835 = vld [vmem:[#allocation11 + $0x658] sm:$0xff]
    %v3836 = vld [vmem:[#allocation11 + $0x660] sm:$0xff]
    %v3837 = vld [vmem:[#allocation11 + $0x668] sm:$0xff]
    %v3838 = vld [vmem:[#allocation11 + $0x670] sm:$0xff]
    %v3839 = vld [vmem:[#allocation11 + $0x678] sm:$0xff]
    %v3840 = vld [vmem:[#allocation11 + $0x680] sm:$0xff]
    %v3841 = vld [vmem:[#allocation11 + $0x688] sm:$0xff]
    %v3842 = vld [vmem:[#allocation11 + $0x690] sm:$0xff]
    %v3843 = vld [vmem:[#allocation11 + $0x698] sm:$0xff]
    %v3844 = vld [vmem:[#allocation11 + $0x6a0] sm:$0xff]
    %v3845 = vld [vmem:[#allocation11 + $0x6a8] sm:$0xff]
    %v3846 = vld [vmem:[#allocation11 + $0x6b0] sm:$0xff]
    %v3847 = vld [vmem:[#allocation11 + $0x6b8] sm:$0xff]
    %v3848 = vld [vmem:[#allocation11 + $0x6c0] sm:$0xff]
    %v3849 = vld [vmem:[#allocation11 + $0x6c8] sm:$0xff]
    %v3850 = vld [vmem:[#allocation11 + $0x6d0] sm:$0xff]
    %v3851 = vld [vmem:[#allocation11 + $0x6d8] sm:$0xff]
    %v3852 = vld [vmem:[#allocation11 + $0x6e0] sm:$0xff]
    %v3853 = vld [vmem:[#allocation11 + $0x6e8] sm:$0xff]
    %v3854 = vld [vmem:[#allocation11 + $0x6f0] sm:$0xff]
    %v3855 = vld [vmem:[#allocation11 + $0x6f8] sm:$0xff]
    %v3856 = vld [vmem:[#allocation11 + $0x700] sm:$0xff]
    %v3857 = vld [vmem:[#allocation11 + $0x708] sm:$0xff]
    %v3858 = vld [vmem:[#allocation11 + $0x710] sm:$0xff]
    %v3859 = vld [vmem:[#allocation11 + $0x718] sm:$0xff]
    %v3860 = vld [vmem:[#allocation11 + $0x720] sm:$0xff]
    %v3861 = vld [vmem:[#allocation11 + $0x728] sm:$0xff]
    %v3862 = vld [vmem:[#allocation11 + $0x730] sm:$0xff]
    %v3863 = vld [vmem:[#allocation11 + $0x738] sm:$0xff]
    %v3864 = vld [vmem:[#allocation11 + $0x740] sm:$0xff]
    %v3865 = vld [vmem:[#allocation11 + $0x748] sm:$0xff]
    %v3866 = vld [vmem:[#allocation11 + $0x750] sm:$0xff]
    %v3867 = vld [vmem:[#allocation11 + $0x758] sm:$0xff]
    %v3868 = vld [vmem:[#allocation11 + $0x760] sm:$0xff]
    %v3869 = vld [vmem:[#allocation11 + $0x768] sm:$0xff]
    %v3870 = vld [vmem:[#allocation11 + $0x770] sm:$0xff]
    %v3871 = vld [vmem:[#allocation11 + $0x778] sm:$0xff]
    %v3872 = vld [vmem:[#allocation11 + $0x780] sm:$0xff]
    %v3873 = vld [vmem:[#allocation11 + $0x788] sm:$0xff]
    %v3874 = vld [vmem:[#allocation11 + $0x790] sm:$0xff]
    %v3875 = vld [vmem:[#allocation11 + $0x798] sm:$0xff]
    %v3876 = vld [vmem:[#allocation11 + $0x7a0] sm:$0xff]
    %v3877 = vld [vmem:[#allocation11 + $0x7a8] sm:$0xff]
    %v3878 = vld [vmem:[#allocation11 + $0x7b0] sm:$0xff]
    %v3879 = vld [vmem:[#allocation11 + $0x7b8] sm:$0xff]
    %v3880 = vld [vmem:[#allocation11 + $0x7c0] sm:$0xff]
    %v3881 = vld [vmem:[#allocation11 + $0x7c8] sm:$0xff]
    %v3882 = vld [vmem:[#allocation11 + $0x7d0] sm:$0xff]
    %v3883 = vld [vmem:[#allocation11 + $0x7d8] sm:$0xff]
    %v3884 = vld [vmem:[#allocation11 + $0x7e0] sm:$0xff]
    %v3885 = vld [vmem:[#allocation11 + $0x7e8] sm:$0xff]
    %v3886 = vld [vmem:[#allocation11 + $0x7f0] sm:$0xff]
    %v3887 = vld [vmem:[#allocation11 + $0x7f8] sm:$0xff]
    %v3888 = vld [vmem:[#allocation11 + $0x800] sm:$0xff]
    %v3889 = vld [vmem:[#allocation11 + $0x808] sm:$0xff]
    %v3890 = vld [vmem:[#allocation11 + $0x810] sm:$0xff]
    %v3891 = vld [vmem:[#allocation11 + $0x818] sm:$0xff]
    %v3892 = vld [vmem:[#allocation11 + $0x820] sm:$0xff]
    %v3893 = vld [vmem:[#allocation11 + $0x828] sm:$0xff]
    %v3894 = vld [vmem:[#allocation11 + $0x830] sm:$0xff]
    %v3895 = vld [vmem:[#allocation11 + $0x838] sm:$0xff]
    %v3896 = vld [vmem:[#allocation11 + $0x840] sm:$0xff]
    %v3897 = vld [vmem:[#allocation11 + $0x848] sm:$0xff]
    %v3898 = vld [vmem:[#allocation11 + $0x850] sm:$0xff]
    %v3899 = vld [vmem:[#allocation11 + $0x858] sm:$0xff]
    %v3900 = vld [vmem:[#allocation11 + $0x860] sm:$0xff]
    %v3901 = vld [vmem:[#allocation11 + $0x868] sm:$0xff]
    %v3902 = vld [vmem:[#allocation11 + $0x870] sm:$0xff]
    %v3903 = vld [vmem:[#allocation11 + $0x878] sm:$0xff]
    %v3904 = vld [vmem:[#allocation11 + $0x880] sm:$0xff]
    %v3905 = vld [vmem:[#allocation11 + $0x888] sm:$0xff]
    %v3906 = vld [vmem:[#allocation11 + $0x890] sm:$0xff]
    %v3907 = vld [vmem:[#allocation11 + $0x898] sm:$0xff]
    %v3908 = vld [vmem:[#allocation11 + $0x8a0] sm:$0xff]
    %v3909 = vld [vmem:[#allocation11 + $0x8a8] sm:$0xff]
    %v3910 = vld [vmem:[#allocation11 + $0x8b0] sm:$0xff]
    %v3911 = vld [vmem:[#allocation11 + $0x8b8] sm:$0xff]
    %v3912 = vld [vmem:[#allocation11 + $0x8c0] sm:$0xff]
    %v3913 = vld [vmem:[#allocation11 + $0x8c8] sm:$0xff]
    %v3914 = vld [vmem:[#allocation11 + $0x8d0] sm:$0xff]
    %v3915 = vld [vmem:[#allocation11 + $0x8d8] sm:$0xff]
    %v3916 = vld [vmem:[#allocation11 + $0x8e0] sm:$0xff]
    %v3917 = vld [vmem:[#allocation11 + $0x8e8] sm:$0xff]
    %v3918 = vld [vmem:[#allocation11 + $0x8f0] sm:$0xff]
    %v3919 = vld [vmem:[#allocation11 + $0x8f8] sm:$0xff]
    %v3920 = vld [vmem:[#allocation11 + $0x900] sm:$0xff]
    %v3921 = vld [vmem:[#allocation11 + $0x908] sm:$0xff]
    %v3922 = vld [vmem:[#allocation11 + $0x910] sm:$0xff]
    %v3923 = vld [vmem:[#allocation11 + $0x918] sm:$0xff]
    %v3924 = vld [vmem:[#allocation11 + $0x920] sm:$0xff]
    %v3925 = vld [vmem:[#allocation11 + $0x928] sm:$0xff]
    %v3926 = vld [vmem:[#allocation11 + $0x930] sm:$0xff]
    %v3927 = vld [vmem:[#allocation11 + $0x938] sm:$0xff]
    %v3928 = vld [vmem:[#allocation11 + $0x940] sm:$0xff]
    %v3929 = vld [vmem:[#allocation11 + $0x948] sm:$0xff]
    %v3930 = vld [vmem:[#allocation11 + $0x950] sm:$0xff]
    %v3931 = vld [vmem:[#allocation11 + $0x958] sm:$0xff]
    %v3932 = vld [vmem:[#allocation11 + $0x960] sm:$0xff]
    %v3933 = vld [vmem:[#allocation11 + $0x968] sm:$0xff]
    %v3934 = vld [vmem:[#allocation11 + $0x970] sm:$0xff]
    %v3935 = vld [vmem:[#allocation11 + $0x978] sm:$0xff]
    %v3936 = vld [vmem:[#allocation11 + $0x980] sm:$0xff]
    %v3937 = vld [vmem:[#allocation11 + $0x988] sm:$0xff]
    %v3938 = vld [vmem:[#allocation11 + $0x990] sm:$0xff]
    %v3939 = vld [vmem:[#allocation11 + $0x998] sm:$0xff]
    %v3940 = vld [vmem:[#allocation11 + $0x9a0] sm:$0xff]
    %v3941 = vld [vmem:[#allocation11 + $0x9a8] sm:$0xff]
    %v3942 = vld [vmem:[#allocation11 + $0x9b0] sm:$0xff]
    %v3943 = vld [vmem:[#allocation11 + $0x9b8] sm:$0xff]
    %v3944 = vld [vmem:[#allocation11 + $0x9c0] sm:$0xff]
    %v3945 = vld [vmem:[#allocation11 + $0x9c8] sm:$0xff]
    %v3946 = vld [vmem:[#allocation11 + $0x9d0] sm:$0xff]
    %v3947 = vld [vmem:[#allocation11 + $0x9d8] sm:$0xff]
    %v3948 = vld [vmem:[#allocation11 + $0x9e0] sm:$0xff]
    %v3949 = vld [vmem:[#allocation11 + $0x9e8] sm:$0xff]
    %v3950 = vld [vmem:[#allocation11 + $0x9f0] sm:$0xff]
    %v3951 = vld [vmem:[#allocation11 + $0x9f8] sm:$0xff]
    %v3952 = vld [vmem:[#allocation11 + $0xa00] sm:$0xff]
    %v3953 = vld [vmem:[#allocation11 + $0xa08] sm:$0xff]
    %v3954 = vld [vmem:[#allocation11 + $0xa10] sm:$0xff]
    %v3955 = vld [vmem:[#allocation11 + $0xa18] sm:$0xff]
    %v3956 = vld [vmem:[#allocation11 + $0xa20] sm:$0xff]
    %v3957 = vld [vmem:[#allocation11 + $0xa28] sm:$0xff]
    %v3958 = vld [vmem:[#allocation11 + $0xa30] sm:$0xff]
    %v3959 = vld [vmem:[#allocation11 + $0xa38] sm:$0xff]
    %v3960 = vld [vmem:[#allocation11 + $0xa40] sm:$0xff]
    %v3961 = vld [vmem:[#allocation11 + $0xa48] sm:$0xff]
    %v3962 = vld [vmem:[#allocation11 + $0xa50] sm:$0xff]
    %v3963 = vld [vmem:[#allocation11 + $0xa58] sm:$0xff]
    %v3964 = vld [vmem:[#allocation11 + $0xa60] sm:$0xff]
    %v3965 = vld [vmem:[#allocation11 + $0xa68] sm:$0xff]
    %v3966 = vld [vmem:[#allocation11 + $0xa70] sm:$0xff]
    %v3967 = vld [vmem:[#allocation11 + $0xa78] sm:$0xff]
    %v3968 = vld [vmem:[#allocation11 + $0xa80] sm:$0xff]
    %v3969 = vld [vmem:[#allocation11 + $0xa88] sm:$0xff]
    %v3970 = vld [vmem:[#allocation11 + $0xa90] sm:$0xff]
    %v3971 = vld [vmem:[#allocation11 + $0xa98] sm:$0xff]
    %v3972 = vld [vmem:[#allocation11 + $0xaa0] sm:$0xff]
    %v3973 = vld [vmem:[#allocation11 + $0xaa8] sm:$0xff]
    %v3974 = vld [vmem:[#allocation11 + $0xab0] sm:$0xff]
    %v3975 = vld [vmem:[#allocation11 + $0xab8] sm:$0xff]
    %v3976 = vld [vmem:[#allocation11 + $0xac0] sm:$0xff]
    %v3977 = vld [vmem:[#allocation11 + $0xac8] sm:$0xff]
    %v3978 = vld [vmem:[#allocation11 + $0xad0] sm:$0xff]
    %v3979 = vld [vmem:[#allocation11 + $0xad8] sm:$0xff]
    %v3980 = vld [vmem:[#allocation11 + $0xae0] sm:$0xff]
    %v3981 = vld [vmem:[#allocation11 + $0xae8] sm:$0xff]
    %v3982 = vld [vmem:[#allocation11 + $0xaf0] sm:$0xff]
    %v3983 = vld [vmem:[#allocation11 + $0xaf8] sm:$0xff]
    %v3984 = vld [vmem:[#allocation11 + $0xb00] sm:$0xff]
    %v3985 = vld [vmem:[#allocation11 + $0xb08] sm:$0xff]
    %v3986 = vld [vmem:[#allocation11 + $0xb10] sm:$0xff]
    %v3987 = vld [vmem:[#allocation11 + $0xb18] sm:$0xff]
    %v3988 = vld [vmem:[#allocation11 + $0xb20] sm:$0xff]
    %v3989 = vld [vmem:[#allocation11 + $0xb28] sm:$0xff]
    %v3990 = vld [vmem:[#allocation11 + $0xb30] sm:$0xff]
    %v3991 = vld [vmem:[#allocation11 + $0xb38] sm:$0xff]
    %v3992 = vld [vmem:[#allocation11 + $0xb40] sm:$0xff]
    %v3993 = vld [vmem:[#allocation11 + $0xb48] sm:$0xff]
    %v3994 = vld [vmem:[#allocation11 + $0xb50] sm:$0xff]
    %v3995 = vld [vmem:[#allocation11 + $0xb58] sm:$0xff]
    %v3996 = vld [vmem:[#allocation11 + $0xb60] sm:$0xff]
    %v3997 = vld [vmem:[#allocation11 + $0xb68] sm:$0xff]
    %v3998 = vld [vmem:[#allocation11 + $0xb70] sm:$0xff]
    %v3999 = vld [vmem:[#allocation11 + $0xb78] sm:$0xff]
    %v4000 = vld [vmem:[#allocation11 + $0xb80] sm:$0xff]
    %v4001 = vld [vmem:[#allocation11 + $0xb88] sm:$0xff]
    %v4002 = vld [vmem:[#allocation11 + $0xb90] sm:$0xff]
    %v4003 = vld [vmem:[#allocation11 + $0xb98] sm:$0xff]
    %v4004 = vld [vmem:[#allocation11 + $0xba0] sm:$0xff]
    %v4005 = vld [vmem:[#allocation11 + $0xba8] sm:$0xff]
    %v4006 = vld [vmem:[#allocation11 + $0xbb0] sm:$0xff]
    %v4007 = vld [vmem:[#allocation11 + $0xbb8] sm:$0xff]
    %v4008 = vld [vmem:[#allocation11 + $0xbc0] sm:$0xff]
    %v4009 = vld [vmem:[#allocation11 + $0xbc8] sm:$0xff]
    %v4010 = vld [vmem:[#allocation11 + $0xbd0] sm:$0xff]
    %v4011 = vld [vmem:[#allocation11 + $0xbd8] sm:$0xff]
    %v4012 = vld [vmem:[#allocation11 + $0xbe0] sm:$0xff]
    %v4013 = vld [vmem:[#allocation11 + $0xbe8] sm:$0xff]
    %v4014 = vld [vmem:[#allocation11 + $0xbf0] sm:$0xff]
    %v4015 = vld [vmem:[#allocation11 + $0xbf8] sm:$0xff]
    %v4016 = vld [vmem:[#allocation11 + $0xc00] sm:$0xff]
    %v4017 = vld [vmem:[#allocation11 + $0xc08] sm:$0xff]
    %v4018 = vld [vmem:[#allocation11 + $0xc10] sm:$0xff]
    %v4019 = vld [vmem:[#allocation11 + $0xc18] sm:$0xff]
    %v4020 = vld [vmem:[#allocation11 + $0xc20] sm:$0xff]
    %v4021 = vld [vmem:[#allocation11 + $0xc28] sm:$0xff]
    %v4022 = vld [vmem:[#allocation11 + $0xc30] sm:$0xff]
    %v4023 = vld [vmem:[#allocation11 + $0xc38] sm:$0xff]
    %v4024 = vld [vmem:[#allocation11 + $0xc40] sm:$0xff]
    %v4025 = vld [vmem:[#allocation11 + $0xc48] sm:$0xff]
    %v4026 = vld [vmem:[#allocation11 + $0xc50] sm:$0xff]
    %v4027 = vld [vmem:[#allocation11 + $0xc58] sm:$0xff]
    %v4028 = vld [vmem:[#allocation11 + $0xc60] sm:$0xff]
    %v4029 = vld [vmem:[#allocation11 + $0xc68] sm:$0xff]
    %v4030 = vld [vmem:[#allocation11 + $0xc70] sm:$0xff]
    %v4031 = vld [vmem:[#allocation11 + $0xc78] sm:$0xff]
    %v4032 = vld [vmem:[#allocation11 + $0xc80] sm:$0xff]
    %v4033 = vld [vmem:[#allocation11 + $0xc88] sm:$0xff]
    %v4034 = vld [vmem:[#allocation11 + $0xc90] sm:$0xff]
    %v4035 = vld [vmem:[#allocation11 + $0xc98] sm:$0xff]
    %v4036 = vld [vmem:[#allocation11 + $0xca0] sm:$0xff]
    %v4037 = vld [vmem:[#allocation11 + $0xca8] sm:$0xff]
    %v4038 = vld [vmem:[#allocation11 + $0xcb0] sm:$0xff]
    %v4039 = vld [vmem:[#allocation11 + $0xcb8] sm:$0xff]
    %v4040 = vld [vmem:[#allocation11 + $0xcc0] sm:$0xff]
    %v4041 = vld [vmem:[#allocation11 + $0xcc8] sm:$0xff]
    %v4042 = vld [vmem:[#allocation11 + $0xcd0] sm:$0xff]
    %v4043 = vld [vmem:[#allocation11 + $0xcd8] sm:$0xff]
    %v4044 = vld [vmem:[#allocation11 + $0xce0] sm:$0xff]
    %v4045 = vld [vmem:[#allocation11 + $0xce8] sm:$0xff]
    %v4046 = vld [vmem:[#allocation11 + $0xcf0] sm:$0xff]
    %v4047 = vld [vmem:[#allocation11 + $0xcf8] sm:$0xff]
    %v4048 = vld [vmem:[#allocation11 + $0xd00] sm:$0xff]
    %v4049 = vld [vmem:[#allocation11 + $0xd08] sm:$0xff]
    %v4050 = vld [vmem:[#allocation11 + $0xd10] sm:$0xff]
    %v4051 = vld [vmem:[#allocation11 + $0xd18] sm:$0xff]
    %v4052 = vld [vmem:[#allocation11 + $0xd20] sm:$0xff]
    %v4053 = vld [vmem:[#allocation11 + $0xd28] sm:$0xff]
    %v4054 = vld [vmem:[#allocation11 + $0xd30] sm:$0xff]
    %v4055 = vld [vmem:[#allocation11 + $0xd38] sm:$0xff]
    %v4056 = vld [vmem:[#allocation11 + $0xd40] sm:$0xff]
    %v4057 = vld [vmem:[#allocation11 + $0xd48] sm:$0xff]
    %v4058 = vld [vmem:[#allocation11 + $0xd50] sm:$0xff]
    %v4059 = vld [vmem:[#allocation11 + $0xd58] sm:$0xff]
    %v4060 = vld [vmem:[#allocation11 + $0xd60] sm:$0xff]
    %v4061 = vld [vmem:[#allocation11 + $0xd68] sm:$0xff]
    %v4062 = vld [vmem:[#allocation11 + $0xd70] sm:$0xff]
    %v4063 = vld [vmem:[#allocation11 + $0xd78] sm:$0xff]
    %v4064 = vld [vmem:[#allocation11 + $0xd80] sm:$0xff]
    %v4065 = vld [vmem:[#allocation11 + $0xd88] sm:$0xff]
    %v4066 = vld [vmem:[#allocation11 + $0xd90] sm:$0xff]
    %v4067 = vld [vmem:[#allocation11 + $0xd98] sm:$0xff]
    %v4068 = vld [vmem:[#allocation11 + $0xda0] sm:$0xff]
    %v4069 = vld [vmem:[#allocation11 + $0xda8] sm:$0xff]
    %v4070 = vld [vmem:[#allocation11 + $0xdb0] sm:$0xff]
    %v4071 = vld [vmem:[#allocation11 + $0xdb8] sm:$0xff]
    %v4072 = vld [vmem:[#allocation11 + $0xdc0] sm:$0xff]
    %v4073 = vld [vmem:[#allocation11 + $0xdc8] sm:$0xff]
    %v4074 = vld [vmem:[#allocation11 + $0xdd0] sm:$0xff]
    %v4075 = vld [vmem:[#allocation11 + $0xdd8] sm:$0xff]
    %v4076 = vld [vmem:[#allocation11 + $0xde0] sm:$0xff]
    %v4077 = vld [vmem:[#allocation11 + $0xde8] sm:$0xff]
    %v4078 = vld [vmem:[#allocation11 + $0xdf0] sm:$0xff]
    %v4079 = vld [vmem:[#allocation11 + $0xdf8] sm:$0xff]
    %v4080 = vld [vmem:[#allocation11 + $0xe00] sm:$0xff]
    %v4081 = vld [vmem:[#allocation11 + $0xe08] sm:$0xff]
    %v4082 = vld [vmem:[#allocation11 + $0xe10] sm:$0xff]
    %v4083 = vld [vmem:[#allocation11 + $0xe18] sm:$0xff]
    %v4084 = vld [vmem:[#allocation11 + $0xe20] sm:$0xff]
    %v4085 = vld [vmem:[#allocation11 + $0xe28] sm:$0xff]
    %v4086 = vld [vmem:[#allocation11 + $0xe30] sm:$0xff]
    %v4087 = vld [vmem:[#allocation11 + $0xe38] sm:$0xff]
    %v4088 = vld [vmem:[#allocation11 + $0xe40] sm:$0xff]
    %v4089 = vld [vmem:[#allocation11 + $0xe48] sm:$0xff]
    %v4090 = vld [vmem:[#allocation11 + $0xe50] sm:$0xff]
    %v4091 = vld [vmem:[#allocation11 + $0xe58] sm:$0xff]
    %v4092 = vld [vmem:[#allocation11 + $0xe60] sm:$0xff]
    %v4093 = vld [vmem:[#allocation11 + $0xe68] sm:$0xff]
    %v4094 = vld [vmem:[#allocation11 + $0xe70] sm:$0xff]
    %v4095 = vld [vmem:[#allocation11 + $0xe78] sm:$0xff]
    %v4096 = vld [vmem:[#allocation11 + $0xe80] sm:$0xff]
    %v4097 = vld [vmem:[#allocation11 + $0xe88] sm:$0xff]
    %v4098 = vld [vmem:[#allocation11 + $0xe90] sm:$0xff]
    %v4099 = vld [vmem:[#allocation11 + $0xe98] sm:$0xff]
    %v4100 = vld [vmem:[#allocation11 + $0xea0] sm:$0xff]
    %v4101 = vld [vmem:[#allocation11 + $0xea8] sm:$0xff]
    %v4102 = vld [vmem:[#allocation11 + $0xeb0] sm:$0xff]
    %v4103 = vld [vmem:[#allocation11 + $0xeb8] sm:$0xff]
    %v4104 = vld [vmem:[#allocation11 + $0xec0] sm:$0xff]
    %v4105 = vld [vmem:[#allocation11 + $0xec8] sm:$0xff]
    %v4106 = vld [vmem:[#allocation11 + $0xed0] sm:$0xff]
    %v4107 = vld [vmem:[#allocation11 + $0xed8] sm:$0xff]
    %v4108 = vld [vmem:[#allocation11 + $0xee0] sm:$0xff]
    %v4109 = vld [vmem:[#allocation11 + $0xee8] sm:$0xff]
    %v4110 = vld [vmem:[#allocation11 + $0xef0] sm:$0xff]
    %v4111 = vld [vmem:[#allocation11 + $0xef8] sm:$0xff]
    %v4112 = vld [vmem:[#allocation11 + $0xf00] sm:$0xff]
    %v4113 = vld [vmem:[#allocation11 + $0xf08] sm:$0xff]
    %v4114 = vld [vmem:[#allocation11 + $0xf10] sm:$0xff]
    %v4115 = vld [vmem:[#allocation11 + $0xf18] sm:$0xff]
    %v4116 = vld [vmem:[#allocation11 + $0xf20] sm:$0xff]
    %v4117 = vld [vmem:[#allocation11 + $0xf28] sm:$0xff]
    %v4118 = vld [vmem:[#allocation11 + $0xf30] sm:$0xff]
    %v4119 = vld [vmem:[#allocation11 + $0xf38] sm:$0xff]
    %v4120 = vld [vmem:[#allocation11 + $0xf40] sm:$0xff]
    %v4121 = vld [vmem:[#allocation11 + $0xf48] sm:$0xff]
    %v4122 = vld [vmem:[#allocation11 + $0xf50] sm:$0xff]
    %v4123 = vld [vmem:[#allocation11 + $0xf58] sm:$0xff]
    %v4124 = vld [vmem:[#allocation11 + $0xf60] sm:$0xff]
    %v4125 = vld [vmem:[#allocation11 + $0xf68] sm:$0xff]
    %v4126 = vld [vmem:[#allocation11 + $0xf70] sm:$0xff]
    %v4127 = vld [vmem:[#allocation11 + $0xf78] sm:$0xff]
    %v4128 = vld [vmem:[#allocation11 + $0xf80] sm:$0xff]
    %v4129 = vld [vmem:[#allocation11 + $0xf88] sm:$0xff]
    %v4130 = vld [vmem:[#allocation11 + $0xf90] sm:$0xff]
    %v4131 = vld [vmem:[#allocation11 + $0xf98] sm:$0xff]
    %v4132 = vld [vmem:[#allocation11 + $0xfa0] sm:$0xff]
    %v4133 = vld [vmem:[#allocation11 + $0xfa8] sm:$0xff]
    %v4134 = vld [vmem:[#allocation11 + $0xfb0] sm:$0xff]
    %v4135 = vld [vmem:[#allocation11 + $0xfb8] sm:$0xff]
    %v4136 = vld [vmem:[#allocation11 + $0xfc0] sm:$0xff]
    %v4137 = vld [vmem:[#allocation11 + $0xfc8] sm:$0xff]
    %v4138 = vld [vmem:[#allocation11 + $0xfd0] sm:$0xff]
    %v4139 = vld [vmem:[#allocation11 + $0xfd8] sm:$0xff]
    %v4140 = vld [vmem:[#allocation11 + $0xfe0] sm:$0xff]
    %v4141 = vld [vmem:[#allocation11 + $0xfe8] sm:$0xff]
    %v4142 = vld [vmem:[#allocation11 + $0xff0] sm:$0xff]
    %v4143 = vld [vmem:[#allocation11 + $0xff8] sm:$0xff]
    %v4144 = vld [vmem:[#allocation11 + $0x1000] sm:$0xff]
    %v4145 = vld [vmem:[#allocation11 + $0x1008] sm:$0xff]
    %v4146 = vld [vmem:[#allocation11 + $0x1010] sm:$0xff]
    %v4147 = vld [vmem:[#allocation11 + $0x1018] sm:$0xff]
    %v4148 = vld [vmem:[#allocation11 + $0x1020] sm:$0xff]
    %v4149 = vld [vmem:[#allocation11 + $0x1028] sm:$0xff]
    %v4150 = vld [vmem:[#allocation11 + $0x1030] sm:$0xff]
    %v4151 = vld [vmem:[#allocation11 + $0x1038] sm:$0xff]
    %v4152 = vld [vmem:[#allocation11 + $0x1040] sm:$0xff]
    %v4153 = vld [vmem:[#allocation11 + $0x1048] sm:$0xff]
    %v4154 = vld [vmem:[#allocation11 + $0x1050] sm:$0xff]
    %v4155 = vld [vmem:[#allocation11 + $0x1058] sm:$0xff]
    %v4156 = vld [vmem:[#allocation11 + $0x1060] sm:$0xff]
    %v4157 = vld [vmem:[#allocation11 + $0x1068] sm:$0xff]
    %v4158 = vld [vmem:[#allocation11 + $0x1070] sm:$0xff]
    %v4159 = vld [vmem:[#allocation11 + $0x1078] sm:$0xff]
    %v4160 = vld [vmem:[#allocation11 + $0x1080] sm:$0xff]
    %v4161 = vld [vmem:[#allocation11 + $0x1088] sm:$0xff]
    %v4162 = vld [vmem:[#allocation11 + $0x1090] sm:$0xff]
    %v4163 = vld [vmem:[#allocation11 + $0x1098] sm:$0xff]
    %v4164 = vld [vmem:[#allocation11 + $0x10a0] sm:$0xff]
    %v4165 = vld [vmem:[#allocation11 + $0x10a8] sm:$0xff]
    %v4166 = vld [vmem:[#allocation11 + $0x10b0] sm:$0xff]
    %v4167 = vld [vmem:[#allocation11 + $0x10b8] sm:$0xff]
    %v4168 = vld [vmem:[#allocation11 + $0x10c0] sm:$0xff]
    %v4169 = vld [vmem:[#allocation11 + $0x10c8] sm:$0xff]
    %v4170 = vld [vmem:[#allocation11 + $0x10d0] sm:$0xff]
    %v4171 = vld [vmem:[#allocation11 + $0x10d8] sm:$0xff]
    %v4172 = vld [vmem:[#allocation11 + $0x10e0] sm:$0xff]
    %v4173 = vld [vmem:[#allocation11 + $0x10e8] sm:$0xff]
    %v4174 = vld [vmem:[#allocation11 + $0x10f0] sm:$0xff]
    %v4175 = vld [vmem:[#allocation11 + $0x10f8] sm:$0xff]
    %v4176 = vld [vmem:[#allocation11 + $0x1100] sm:$0xff]
    %v4177 = vld [vmem:[#allocation11 + $0x1108] sm:$0xff]
    %v4178 = vld [vmem:[#allocation11 + $0x1110] sm:$0xff]
    %v4179 = vld [vmem:[#allocation11 + $0x1118] sm:$0xff]
    %v4180 = vld [vmem:[#allocation11 + $0x1120] sm:$0xff]
    %v4181 = vld [vmem:[#allocation11 + $0x1128] sm:$0xff]
    %v4182 = vld [vmem:[#allocation11 + $0x1130] sm:$0xff]
    %v4183 = vld [vmem:[#allocation11 + $0x1138] sm:$0xff]
    %v4184 = vld [vmem:[#allocation11 + $0x1140] sm:$0xff]
    %v4185 = vld [vmem:[#allocation11 + $0x1148] sm:$0xff]
    %v4186 = vld [vmem:[#allocation11 + $0x1150] sm:$0xff]
    %v4187 = vld [vmem:[#allocation11 + $0x1158] sm:$0xff]
    %v4188 = vld [vmem:[#allocation11 + $0x1160] sm:$0xff]
    %v4189 = vld [vmem:[#allocation11 + $0x1168] sm:$0xff]
    %v4190 = vld [vmem:[#allocation11 + $0x1170] sm:$0xff]
    %v4191 = vld [vmem:[#allocation11 + $0x1178] sm:$0xff]
    %v4192 = vld [vmem:[#allocation11 + $0x1180] sm:$0xff]
    %v4193 = vld [vmem:[#allocation11 + $0x1188] sm:$0xff]
    %v4194 = vld [vmem:[#allocation11 + $0x1190] sm:$0xff]
    %v4195 = vld [vmem:[#allocation11 + $0x1198] sm:$0xff]
    %v4196 = vld [vmem:[#allocation11 + $0x11a0] sm:$0xff]
    %v4197 = vld [vmem:[#allocation11 + $0x11a8] sm:$0xff]
    %v4198 = vld [vmem:[#allocation11 + $0x11b0] sm:$0xff]
    %v4199 = vld [vmem:[#allocation11 + $0x11b8] sm:$0xff]
    %v4200 = vld [vmem:[#allocation11 + $0x11c0] sm:$0xff]
    %v4201 = vld [vmem:[#allocation11 + $0x11c8] sm:$0xff]
    %v4202 = vld [vmem:[#allocation11 + $0x11d0] sm:$0xff]
    %v4203 = vld [vmem:[#allocation11 + $0x11d8] sm:$0xff]
    %v4204 = vld [vmem:[#allocation11 + $0x11e0] sm:$0xff]
    %v4205 = vld [vmem:[#allocation11 + $0x11e8] sm:$0xff]
    %v4206 = vld [vmem:[#allocation11 + $0x11f0] sm:$0xff]
    %v4207 = vld [vmem:[#allocation11 + $0x11f8] sm:$0xff]
    %v4208 = vld [vmem:[#allocation11 + $0x1200] sm:$0xff]
    %v4209 = vld [vmem:[#allocation11 + $0x1208] sm:$0xff]
    %v4210 = vld [vmem:[#allocation11 + $0x1210] sm:$0xff]
    %v4211 = vld [vmem:[#allocation11 + $0x1218] sm:$0xff]
    %v4212 = vld [vmem:[#allocation11 + $0x1220] sm:$0xff]
    %v4213 = vld [vmem:[#allocation11 + $0x1228] sm:$0xff]
    %v4214 = vld [vmem:[#allocation11 + $0x1230] sm:$0xff]
    %v4215 = vld [vmem:[#allocation11 + $0x1238] sm:$0xff]
    %v4216 = vld [vmem:[#allocation11 + $0x1240] sm:$0xff]
    %v4217 = vld [vmem:[#allocation11 + $0x1248] sm:$0xff]
    %v4218 = vld [vmem:[#allocation11 + $0x1250] sm:$0xff]
    %v4219 = vld [vmem:[#allocation11 + $0x1258] sm:$0xff]
    %v4220 = vld [vmem:[#allocation11 + $0x1260] sm:$0xff]
    %v4221 = vld [vmem:[#allocation11 + $0x1268] sm:$0xff]
    %v4222 = vld [vmem:[#allocation11 + $0x1270] sm:$0xff]
    %v4223 = vld [vmem:[#allocation11 + $0x1278] sm:$0xff]
    %v4224 = vld [vmem:[#allocation11 + $0x1280] sm:$0xff]
    %v4225 = vld [vmem:[#allocation11 + $0x1288] sm:$0xff]
    %v4226 = vld [vmem:[#allocation11 + $0x1290] sm:$0xff]
    %v4227 = vld [vmem:[#allocation11 + $0x1298] sm:$0xff]
    %v4228 = vld [vmem:[#allocation11 + $0x12a0] sm:$0xff]
    %v4229 = vld [vmem:[#allocation11 + $0x12a8] sm:$0xff]
    %v4230 = vld [vmem:[#allocation11 + $0x12b0] sm:$0xff]
    %v4231 = vld [vmem:[#allocation11 + $0x12b8] sm:$0xff]
    %v4232 = vld [vmem:[#allocation11 + $0x12c0] sm:$0xff]
    %v4233 = vld [vmem:[#allocation11 + $0x12c8] sm:$0xff]
    %v4234 = vld [vmem:[#allocation11 + $0x12d0] sm:$0xff]
    %v4235 = vld [vmem:[#allocation11 + $0x12d8] sm:$0xff]
    %v4236 = vld [vmem:[#allocation11 + $0x12e0] sm:$0xff]
    %v4237 = vld [vmem:[#allocation11 + $0x12e8] sm:$0xff]
    %v4238 = vld [vmem:[#allocation11 + $0x12f0] sm:$0xff]
    %v4239 = vld [vmem:[#allocation11 + $0x12f8] sm:$0xff]
    %v4240 = vld [vmem:[#allocation11 + $0x1300] sm:$0xff]
    %v4241 = vld [vmem:[#allocation11 + $0x1308] sm:$0xff]
    %v4242 = vld [vmem:[#allocation11 + $0x1310] sm:$0xff]
    %v4243 = vld [vmem:[#allocation11 + $0x1318] sm:$0xff]
    %v4244 = vld [vmem:[#allocation11 + $0x1320] sm:$0xff]
    %v4245 = vld [vmem:[#allocation11 + $0x1328] sm:$0xff]
    %v4246 = vld [vmem:[#allocation11 + $0x1330] sm:$0xff]
    %v4247 = vld [vmem:[#allocation11 + $0x1338] sm:$0xff]
    %v4248 = vld [vmem:[#allocation11 + $0x1340] sm:$0xff]
    %v4249 = vld [vmem:[#allocation11 + $0x1348] sm:$0xff]
    %v4250 = vld [vmem:[#allocation11 + $0x1350] sm:$0xff]
    %v4251 = vld [vmem:[#allocation11 + $0x1358] sm:$0xff]
    %v4252 = vld [vmem:[#allocation11 + $0x1360] sm:$0xff]
    %v4253 = vld [vmem:[#allocation11 + $0x1368] sm:$0xff]
    %v4254 = vld [vmem:[#allocation11 + $0x1370] sm:$0xff]
    %v4255 = vld [vmem:[#allocation11 + $0x1378] sm:$0xff]
    %v4256 = vld [vmem:[%s11] sm:$0x7]
    %v4258 = vlaneseq
    %v4259 = vshrl.u32 %v4258, 7
    %v4260 = vsub.s32 0, %v4259
    %v4261 = vrot.slane %v4256, %v4260
    %v4262 = vlaneseq
    %v4263 = vshrl.u32 %v4262, 7
    %v4264 = vsub.s32 1, %v4263
    %v4265 = vrot.slane %v4256, %v4264
    %v4266 = vlaneseq
    %v4267 = vshrl.u32 %v4266, 7
    %v4268 = vsub.s32 2, %v4267
    %v4269 = vrot.slane %v4256, %v4268
    %4273 = vmatprep.subr.mxu0 %v3678
    %4274 = vmatpush1.msra.mxu0 %v3677
    %4275 = vmatprep.subr.mxu0 %v3675
    %4276 = vmatpush1.msra.mxu0 %v3674
    %4277 = vmatprep.subr.mxu0 %v3672
    %4278 = vmatpush1.msra.mxu0 %v3671
    %4279 = vmatprep.subr.mxu0 %v3669
    %4280 = vmatpush1.msra.mxu0 %v3668
    %4281 = vmatprep.subr.mxu0 %v3666
    %4282 = vmatpush1.msra.mxu0 %v3665
    %4283 = vmatprep.subr.mxu0 %v3663
    %4284 = vmatpush1.msra.mxu0 %v3662
    %4285 = vmatprep.subr.mxu0 %v3660
    %4286 = vmatpush1.msra.mxu0 %v3659
    %4287 = vmatprep.subr.mxu0 %v3657
    %4288 = vmatpush1.msra.mxu0 %v3656
    %4289 = vmatprep.subr.mxu0 %v3654
    %4290 = vmatpush1.msra.mxu0 %v3653
    %4291 = vmatprep.subr.mxu0 %v3651
    %4292 = vmatpush1.msra.mxu0 %v3650
    %4293 = vmatprep.subr.mxu0 %v3648
    %4294 = vmatpush1.msra.mxu0 %v3647
    %4295 = vmatprep.subr.mxu0 %v3645
    %4296 = vmatpush1.msra.mxu0 %v3644
    %4297 = vmatprep.subr.mxu0 %v3642
    %4298 = vmatpush1.msra.mxu0 %v3641
    %4299 = vmatprep.subr.mxu0 %v3639
    %4300 = vmatpush1.msra.mxu0 %v3638
    %4301 = vmatprep.subr.mxu0 %v3636
    %4302 = vmatpush1.msra.mxu0 %v3635
    %4303 = vmatprep.subr.mxu0 %v3633
    %4304 = vmatpush1.msra.mxu0 %v3632
    %4305 = vmatprep.subr.mxu0 %v3726
    %4306 = vmatpush2.msra.mxu0 %v3725
    %4307 = vmatprep.subr.mxu0 %v3723
    %4308 = vmatpush2.msra.mxu0 %v3722
    %4309 = vmatprep.subr.mxu0 %v3720
    %4310 = vmatpush2.msra.mxu0 %v3719
    %4311 = vmatprep.subr.mxu0 %v3717
    %4312 = vmatpush2.msra.mxu0 %v3716
    %4313 = vmatprep.subr.mxu0 %v3714
    %4314 = vmatpush2.msra.mxu0 %v3713
    %4315 = vmatprep.subr.mxu0 %v3711
    %4316 = vmatpush2.msra.mxu0 %v3710
    %4317 = vmatprep.subr.mxu0 %v3708
    %4318 = vmatpush2.msra.mxu0 %v3707
    %4319 = vmatprep.subr.mxu0 %v3705
    %4320 = vmatpush2.msra.mxu0 %v3704
    %4321 = vmatprep.subr.mxu0 %v3702
    %4322 = vmatpush2.msra.mxu0 %v3701
    %4323 = vmatprep.subr.mxu0 %v3699
    %4324 = vmatpush2.msra.mxu0 %v3698
    %4325 = vmatprep.subr.mxu0 %v3696
    %4326 = vmatpush2.msra.mxu0 %v3695
    %4327 = vmatprep.subr.mxu0 %v3693
    %4328 = vmatpush2.msra.mxu0 %v3692
    %4329 = vmatprep.subr.mxu0 %v3690
    %4330 = vmatpush2.msra.mxu0 %v3689
    %4331 = vmatprep.subr.mxu0 %v3687
    %4332 = vmatpush2.msra.mxu0 %v3686
    %4333 = vmatprep.subr.mxu0 %v3684
    %4334 = vmatpush2.msra.mxu0 %v3683
    %4335 = vmatprep.subr.mxu0 %v3681
    %4336 = vmatpush2.msra.mxu0 %v3680
    %4337 = vmatprep.mubr.f32.mxu0 %v3205
    %4338 = vmatmul.mubr.f32.gmra.mxu0 %v3203
    %v4339 = vpop.f32.mrf.mxu0
    %v4340 = vadd.f32 %v4261, %v4339
    %v4341 = vpop.f32.mrf.mxu0
    %v4342 = vadd.f32 %v4265, %v4341
    %4343 = vdwg.mxu0
    %4344 = vmatprep.subr.mxu0 %v3774
    %4345 = vmatpush1.msra.mxu0 %v3773
    %4346 = vmatprep.subr.mxu0 %v3771
    %4347 = vmatpush1.msra.mxu0 %v3770
    %4348 = vmatprep.subr.mxu0 %v3768
    %4349 = vmatpush1.msra.mxu0 %v3767
    %4350 = vmatprep.subr.mxu0 %v3765
    %4351 = vmatpush1.msra.mxu0 %v3764
    %4352 = vmatprep.subr.mxu0 %v3762
    %4353 = vmatpush1.msra.mxu0 %v3761
    %4354 = vmatprep.subr.mxu0 %v3759
    %4355 = vmatpush1.msra.mxu0 %v3758
    %4356 = vmatprep.subr.mxu0 %v3756
    %4357 = vmatpush1.msra.mxu0 %v3755
    %4358 = vmatprep.subr.mxu0 %v3753
    %4359 = vmatpush1.msra.mxu0 %v3752
    %4360 = vmatprep.subr.mxu0 %v3750
    %4361 = vmatpush1.msra.mxu0 %v3749
    %4362 = vmatprep.subr.mxu0 %v3747
    %4363 = vmatpush1.msra.mxu0 %v3746
    %4364 = vmatprep.subr.mxu0 %v3744
    %4365 = vmatpush1.msra.mxu0 %v3743
    %4366 = vmatprep.subr.mxu0 %v3741
    %4367 = vmatpush1.msra.mxu0 %v3740
    %4368 = vmatprep.subr.mxu0 %v3738
    %4369 = vmatpush1.msra.mxu0 %v3737
    %4370 = vmatprep.subr.mxu0 %v3735
    %4371 = vmatpush1.msra.mxu0 %v3734
    %4372 = vmatprep.subr.mxu0 %v3732
    %4373 = vmatpush1.msra.mxu0 %v3731
    %4374 = vmatprep.subr.mxu0 %v3729
    %4375 = vmatpush1.msra.mxu0 %v3728
    %4376 = vmatprep.subr.mxu0 %v3822
    %4377 = vmatpush2.msra.mxu0 %v3821
    %4378 = vmatprep.subr.mxu0 %v3819
    %4379 = vmatpush2.msra.mxu0 %v3818
    %4380 = vmatprep.subr.mxu0 %v3816
    %4381 = vmatpush2.msra.mxu0 %v3815
    %4382 = vmatprep.subr.mxu0 %v3813
    %4383 = vmatpush2.msra.mxu0 %v3812
    %4384 = vmatprep.subr.mxu0 %v3810
    %4385 = vmatpush2.msra.mxu0 %v3809
    %4386 = vmatprep.subr.mxu0 %v3807
    %4387 = vmatpush2.msra.mxu0 %v3806
    %4388 = vmatprep.subr.mxu0 %v3804
    %4389 = vmatpush2.msra.mxu0 %v3803
    %4390 = vmatprep.subr.mxu0 %v3801
    %4391 = vmatpush2.msra.mxu0 %v3800
    %4392 = vmatprep.subr.mxu0 %v3798
    %4393 = vmatpush2.msra.mxu0 %v3797
    %4394 = vmatprep.subr.mxu0 %v3795
    %4395 = vmatpush2.msra.mxu0 %v3794
    %4396 = vmatprep.subr.mxu0 %v3792
    %4397 = vmatpush2.msra.mxu0 %v3791
    %4398 = vmatprep.subr.mxu0 %v3789
    %4399 = vmatpush2.msra.mxu0 %v3788
    %4400 = vmatprep.subr.mxu0 %v3786
    %4401 = vmatpush2.msra.mxu0 %v3785
    %4402 = vmatprep.subr.mxu0 %v3783
    %4403 = vmatpush2.msra.mxu0 %v3782
    %4404 = vmatprep.subr.mxu0 %v3780
    %4405 = vmatpush2.msra.mxu0 %v3779
    %4406 = vmatprep.subr.mxu0 %v3777
    %4407 = vmatpush2.msra.mxu0 %v3776
    %4408 = vmatprep.mubr.f32.mxu0 %v3276
    %4409 = vmatmul.mubr.f32.gmra.mxu0 %v3274
    %v4410 = vpop.f32.mrf.mxu0
    %v4411 = vadd.f32 %v4340, %v4410
    %v4412 = vpop.f32.mrf.mxu0
    %v4413 = vadd.f32 %v4342, %v4412
    %4414 = vdwg.mxu0
    %4415 = vmatprep.subr.mxu0 %v3870
    %4416 = vmatpush1.msra.mxu0 %v3869
    %4417 = vmatprep.subr.mxu0 %v3867
    %4418 = vmatpush1.msra.mxu0 %v3866
    %4419 = vmatprep.subr.mxu0 %v3864
    %4420 = vmatpush1.msra.mxu0 %v3863
    %4421 = vmatprep.subr.mxu0 %v3861
    %4422 = vmatpush1.msra.mxu0 %v3860
    %4423 = vmatprep.subr.mxu0 %v3858
    %4424 = vmatpush1.msra.mxu0 %v3857
    %4425 = vmatprep.subr.mxu0 %v3855
    %4426 = vmatpush1.msra.mxu0 %v3854
    %4427 = vmatprep.subr.mxu0 %v3852
    %4428 = vmatpush1.msra.mxu0 %v3851
    %4429 = vmatprep.subr.mxu0 %v3849
    %4430 = vmatpush1.msra.mxu0 %v3848
    %4431 = vmatprep.subr.mxu0 %v3846
    %4432 = vmatpush1.msra.mxu0 %v3845
    %4433 = vmatprep.subr.mxu0 %v3843
    %4434 = vmatpush1.msra.mxu0 %v3842
    %4435 = vmatprep.subr.mxu0 %v3840
    %4436 = vmatpush1.msra.mxu0 %v3839
    %4437 = vmatprep.subr.mxu0 %v3837
    %4438 = vmatpush1.msra.mxu0 %v3836
    %4439 = vmatprep.subr.mxu0 %v3834
    %4440 = vmatpush1.msra.mxu0 %v3833
    %4441 = vmatprep.subr.mxu0 %v3831
    %4442 = vmatpush1.msra.mxu0 %v3830
    %4443 = vmatprep.subr.mxu0 %v3828
    %4444 = vmatpush1.msra.mxu0 %v3827
    %4445 = vmatprep.subr.mxu0 %v3825
    %4446 = vmatpush1.msra.mxu0 %v3824
    %4447 = vmatprep.subr.mxu0 %v3918
    %4448 = vmatpush2.msra.mxu0 %v3917
    %4449 = vmatprep.subr.mxu0 %v3915
    %4450 = vmatpush2.msra.mxu0 %v3914
    %4451 = vmatprep.subr.mxu0 %v3912
    %4452 = vmatpush2.msra.mxu0 %v3911
    %4453 = vmatprep.subr.mxu0 %v3909
    %4454 = vmatpush2.msra.mxu0 %v3908
    %4455 = vmatprep.subr.mxu0 %v3906
    %4456 = vmatpush2.msra.mxu0 %v3905
    %4457 = vmatprep.subr.mxu0 %v3903
    %4458 = vmatpush2.msra.mxu0 %v3902
    %4459 = vmatprep.subr.mxu0 %v3900
    %4460 = vmatpush2.msra.mxu0 %v3899
    %4461 = vmatprep.subr.mxu0 %v3897
    %4462 = vmatpush2.msra.mxu0 %v3896
    %4463 = vmatprep.subr.mxu0 %v3894
    %4464 = vmatpush2.msra.mxu0 %v3893
    %4465 = vmatprep.subr.mxu0 %v3891
    %4466 = vmatpush2.msra.mxu0 %v3890
    %4467 = vmatprep.subr.mxu0 %v3888
    %4468 = vmatpush2.msra.mxu0 %v3887
    %4469 = vmatprep.subr.mxu0 %v3885
    %4470 = vmatpush2.msra.mxu0 %v3884
    %4471 = vmatprep.subr.mxu0 %v3882
    %4472 = vmatpush2.msra.mxu0 %v3881
    %4473 = vmatprep.subr.mxu0 %v3879
    %4474 = vmatpush2.msra.mxu0 %v3878
    %4475 = vmatprep.subr.mxu0 %v3876
    %4476 = vmatpush2.msra.mxu0 %v3875
    %4477 = vmatprep.subr.mxu0 %v3873
    %4478 = vmatpush2.msra.mxu0 %v3872
    %4479 = vmatprep.mubr.f32.mxu0 %v3347
    %4480 = vmatmul.mubr.f32.gmra.mxu0 %v3345
    %v4481 = vpop.f32.mrf.mxu0
    %v4482 = vadd.f32 %v4411, %v4481
    %v4483 = vpop.f32.mrf.mxu0
    %v4484 = vadd.f32 %v4413, %v4483
    %4485 = vdwg.mxu0
    %4486 = vmatprep.subr.mxu0 %v3966
    %4487 = vmatpush1.msra.mxu0 %v3965
    %4488 = vmatprep.subr.mxu0 %v3963
    %4489 = vmatpush1.msra.mxu0 %v3962
    %4490 = vmatprep.subr.mxu0 %v3960
    %4491 = vmatpush1.msra.mxu0 %v3959
    %4492 = vmatprep.subr.mxu0 %v3957
    %4493 = vmatpush1.msra.mxu0 %v3956
    %4494 = vmatprep.subr.mxu0 %v3954
    %4495 = vmatpush1.msra.mxu0 %v3953
    %4496 = vmatprep.subr.mxu0 %v3951
    %4497 = vmatpush1.msra.mxu0 %v3950
    %4498 = vmatprep.subr.mxu0 %v3948
    %4499 = vmatpush1.msra.mxu0 %v3947
    %4500 = vmatprep.subr.mxu0 %v3945
    %4501 = vmatpush1.msra.mxu0 %v3944
    %4502 = vmatprep.subr.mxu0 %v3942
    %4503 = vmatpush1.msra.mxu0 %v3941
    %4504 = vmatprep.subr.mxu0 %v3939
    %4505 = vmatpush1.msra.mxu0 %v3938
    %4506 = vmatprep.subr.mxu0 %v3936
    %4507 = vmatpush1.msra.mxu0 %v3935
    %4508 = vmatprep.subr.mxu0 %v3933
    %4509 = vmatpush1.msra.mxu0 %v3932
    %4510 = vmatprep.subr.mxu0 %v3930
    %4511 = vmatpush1.msra.mxu0 %v3929
    %4512 = vmatprep.subr.mxu0 %v3927
    %4513 = vmatpush1.msra.mxu0 %v3926
    %4514 = vmatprep.subr.mxu0 %v3924
    %4515 = vmatpush1.msra.mxu0 %v3923
    %4516 = vmatprep.subr.mxu0 %v3921
    %4517 = vmatpush1.msra.mxu0 %v3920
    %4518 = vmatprep.subr.mxu0 %v4014
    %4519 = vmatpush2.msra.mxu0 %v4013
    %4520 = vmatprep.subr.mxu0 %v4011
    %4521 = vmatpush2.msra.mxu0 %v4010
    %4522 = vmatprep.subr.mxu0 %v4008
    %4523 = vmatpush2.msra.mxu0 %v4007
    %4524 = vmatprep.subr.mxu0 %v4005
    %4525 = vmatpush2.msra.mxu0 %v4004
    %4526 = vmatprep.subr.mxu0 %v4002
    %4527 = vmatpush2.msra.mxu0 %v4001
    %4528 = vmatprep.subr.mxu0 %v3999
    %4529 = vmatpush2.msra.mxu0 %v3998
    %4530 = vmatprep.subr.mxu0 %v3996
    %4531 = vmatpush2.msra.mxu0 %v3995
    %4532 = vmatprep.subr.mxu0 %v3993
    %4533 = vmatpush2.msra.mxu0 %v3992
    %4534 = vmatprep.subr.mxu0 %v3990
    %4535 = vmatpush2.msra.mxu0 %v3989
    %4536 = vmatprep.subr.mxu0 %v3987
    %4537 = vmatpush2.msra.mxu0 %v3986
    %4538 = vmatprep.subr.mxu0 %v3984
    %4539 = vmatpush2.msra.mxu0 %v3983
    %4540 = vmatprep.subr.mxu0 %v3981
    %4541 = vmatpush2.msra.mxu0 %v3980
    %4542 = vmatprep.subr.mxu0 %v3978
    %4543 = vmatpush2.msra.mxu0 %v3977
    %4544 = vmatprep.subr.mxu0 %v3975
    %4545 = vmatpush2.msra.mxu0 %v3974
    %4546 = vmatprep.subr.mxu0 %v3972
    %4547 = vmatpush2.msra.mxu0 %v3971
    %4548 = vmatprep.subr.mxu0 %v3969
    %4549 = vmatpush2.msra.mxu0 %v3968
    %4550 = vmatprep.mubr.f32.mxu0 %v3418
    %4551 = vmatmul.mubr.f32.gmra.mxu0 %v3416
    %v4552 = vpop.f32.mrf.mxu0
    %v4553 = vadd.f32 %v4482, %v4552
    %v4554 = vpop.f32.mrf.mxu0
    %v4555 = vadd.f32 %v4484, %v4554
    %4556 = vdwg.mxu0
    %4557 = vmatprep.subr.mxu0 %v4062
    %4558 = vmatpush1.msra.mxu0 %v4061
    %4559 = vmatprep.subr.mxu0 %v4059
    %4560 = vmatpush1.msra.mxu0 %v4058
    %4561 = vmatprep.subr.mxu0 %v4056
    %4562 = vmatpush1.msra.mxu0 %v4055
    %4563 = vmatprep.subr.mxu0 %v4053
    %4564 = vmatpush1.msra.mxu0 %v4052
    %4565 = vmatprep.subr.mxu0 %v4050
    %4566 = vmatpush1.msra.mxu0 %v4049
    %4567 = vmatprep.subr.mxu0 %v4047
    %4568 = vmatpush1.msra.mxu0 %v4046
    %4569 = vmatprep.subr.mxu0 %v4044
    %4570 = vmatpush1.msra.mxu0 %v4043
    %4571 = vmatprep.subr.mxu0 %v4041
    %4572 = vmatpush1.msra.mxu0 %v4040
    %4573 = vmatprep.subr.mxu0 %v4038
    %4574 = vmatpush1.msra.mxu0 %v4037
    %4575 = vmatprep.subr.mxu0 %v4035
    %4576 = vmatpush1.msra.mxu0 %v4034
    %4577 = vmatprep.subr.mxu0 %v4032
    %4578 = vmatpush1.msra.mxu0 %v4031
    %4579 = vmatprep.subr.mxu0 %v4029
    %4580 = vmatpush1.msra.mxu0 %v4028
    %4581 = vmatprep.subr.mxu0 %v4026
    %4582 = vmatpush1.msra.mxu0 %v4025
    %4583 = vmatprep.subr.mxu0 %v4023
    %4584 = vmatpush1.msra.mxu0 %v4022
    %4585 = vmatprep.subr.mxu0 %v4020
    %4586 = vmatpush1.msra.mxu0 %v4019
    %4587 = vmatprep.subr.mxu0 %v4017
    %4588 = vmatpush1.msra.mxu0 %v4016
    %4589 = vmatprep.subr.mxu0 %v4110
    %4590 = vmatpush2.msra.mxu0 %v4109
    %4591 = vmatprep.subr.mxu0 %v4107
    %4592 = vmatpush2.msra.mxu0 %v4106
    %4593 = vmatprep.subr.mxu0 %v4104
    %4594 = vmatpush2.msra.mxu0 %v4103
    %4595 = vmatprep.subr.mxu0 %v4101
    %4596 = vmatpush2.msra.mxu0 %v4100
    %4597 = vmatprep.subr.mxu0 %v4098
    %4598 = vmatpush2.msra.mxu0 %v4097
    %4599 = vmatprep.subr.mxu0 %v4095
    %4600 = vmatpush2.msra.mxu0 %v4094
    %4601 = vmatprep.subr.mxu0 %v4092
    %4602 = vmatpush2.msra.mxu0 %v4091
    %4603 = vmatprep.subr.mxu0 %v4089
    %4604 = vmatpush2.msra.mxu0 %v4088
    %4605 = vmatprep.subr.mxu0 %v4086
    %4606 = vmatpush2.msra.mxu0 %v4085
    %4607 = vmatprep.subr.mxu0 %v4083
    %4608 = vmatpush2.msra.mxu0 %v4082
    %4609 = vmatprep.subr.mxu0 %v4080
    %4610 = vmatpush2.msra.mxu0 %v4079
    %4611 = vmatprep.subr.mxu0 %v4077
    %4612 = vmatpush2.msra.mxu0 %v4076
    %4613 = vmatprep.subr.mxu0 %v4074
    %4614 = vmatpush2.msra.mxu0 %v4073
    %4615 = vmatprep.subr.mxu0 %v4071
    %4616 = vmatpush2.msra.mxu0 %v4070
    %4617 = vmatprep.subr.mxu0 %v4068
    %4618 = vmatpush2.msra.mxu0 %v4067
    %4619 = vmatprep.subr.mxu0 %v4065
    %4620 = vmatpush2.msra.mxu0 %v4064
    %4621 = vmatprep.mubr.f32.mxu0 %v3489
    %4622 = vmatmul.mubr.f32.gmra.mxu0 %v3487
    %v4623 = vpop.f32.mrf.mxu0
    %v4624 = vadd.f32 %v4553, %v4623
    %v4625 = vpop.f32.mrf.mxu0
    %v4626 = vadd.f32 %v4555, %v4625
    %4627 = vdwg.mxu0
    %4628 = vmatprep.subr.mxu0 %v4158
    %4629 = vmatpush1.msra.mxu0 %v4157
    %4630 = vmatprep.subr.mxu0 %v4155
    %4631 = vmatpush1.msra.mxu0 %v4154
    %4632 = vmatprep.subr.mxu0 %v4152
    %4633 = vmatpush1.msra.mxu0 %v4151
    %4634 = vmatprep.subr.mxu0 %v4149
    %4635 = vmatpush1.msra.mxu0 %v4148
    %4636 = vmatprep.subr.mxu0 %v4146
    %4637 = vmatpush1.msra.mxu0 %v4145
    %4638 = vmatprep.subr.mxu0 %v4143
    %4639 = vmatpush1.msra.mxu0 %v4142
    %4640 = vmatprep.subr.mxu0 %v4140
    %4641 = vmatpush1.msra.mxu0 %v4139
    %4642 = vmatprep.subr.mxu0 %v4137
    %4643 = vmatpush1.msra.mxu0 %v4136
    %4644 = vmatprep.subr.mxu0 %v4134
    %4645 = vmatpush1.msra.mxu0 %v4133
    %4646 = vmatprep.subr.mxu0 %v4131
    %4647 = vmatpush1.msra.mxu0 %v4130
    %4648 = vmatprep.subr.mxu0 %v4128
    %4649 = vmatpush1.msra.mxu0 %v4127
    %4650 = vmatprep.subr.mxu0 %v4125
    %4651 = vmatpush1.msra.mxu0 %v4124
    %4652 = vmatprep.subr.mxu0 %v4122
    %4653 = vmatpush1.msra.mxu0 %v4121
    %4654 = vmatprep.subr.mxu0 %v4119
    %4655 = vmatpush1.msra.mxu0 %v4118
    %4656 = vmatprep.subr.mxu0 %v4116
    %4657 = vmatpush1.msra.mxu0 %v4115
    %4658 = vmatprep.subr.mxu0 %v4113
    %4659 = vmatpush1.msra.mxu0 %v4112
    %4660 = vmatprep.subr.mxu0 %v4206
    %4661 = vmatpush2.msra.mxu0 %v4205
    %4662 = vmatprep.subr.mxu0 %v4203
    %4663 = vmatpush2.msra.mxu0 %v4202
    %4664 = vmatprep.subr.mxu0 %v4200
    %4665 = vmatpush2.msra.mxu0 %v4199
    %4666 = vmatprep.subr.mxu0 %v4197
    %4667 = vmatpush2.msra.mxu0 %v4196
    %4668 = vmatprep.subr.mxu0 %v4194
    %4669 = vmatpush2.msra.mxu0 %v4193
    %4670 = vmatprep.subr.mxu0 %v4191
    %4671 = vmatpush2.msra.mxu0 %v4190
    %4672 = vmatprep.subr.mxu0 %v4188
    %4673 = vmatpush2.msra.mxu0 %v4187
    %4674 = vmatprep.subr.mxu0 %v4185
    %4675 = vmatpush2.msra.mxu0 %v4184
    %4676 = vmatprep.subr.mxu0 %v4182
    %4677 = vmatpush2.msra.mxu0 %v4181
    %4678 = vmatprep.subr.mxu0 %v4179
    %4679 = vmatpush2.msra.mxu0 %v4178
    %4680 = vmatprep.subr.mxu0 %v4176
    %4681 = vmatpush2.msra.mxu0 %v4175
    %4682 = vmatprep.subr.mxu0 %v4173
    %4683 = vmatpush2.msra.mxu0 %v4172
    %4684 = vmatprep.subr.mxu0 %v4170
    %4685 = vmatpush2.msra.mxu0 %v4169
    %4686 = vmatprep.subr.mxu0 %v4167
    %4687 = vmatpush2.msra.mxu0 %v4166
    %4688 = vmatprep.subr.mxu0 %v4164
    %4689 = vmatpush2.msra.mxu0 %v4163
    %4690 = vmatprep.subr.mxu0 %v4161
    %4691 = vmatpush2.msra.mxu0 %v4160
    %4692 = vmatprep.mubr.f32.mxu0 %v3560
    %4693 = vmatmul.mubr.f32.gmra.mxu0 %v3558
    %v4694 = vpop.f32.mrf.mxu0
    %v4695 = vadd.f32 %v4624, %v4694
    %v4696 = vpop.f32.mrf.mxu0
    %v4697 = vadd.f32 %v4626, %v4696
    %4698 = vdwg.mxu0
    %4699 = vmatprep.subr.mxu0 %v4254
    %4700 = vmatpush1.msra.mxu0 %v4253
    %4701 = vmatprep.subr.mxu0 %v4251
    %4702 = vmatpush1.msra.mxu0 %v4250
    %4703 = vmatprep.subr.mxu0 %v4248
    %4704 = vmatpush1.msra.mxu0 %v4247
    %4705 = vmatprep.subr.mxu0 %v4245
    %4706 = vmatpush1.msra.mxu0 %v4244
    %4707 = vmatprep.subr.mxu0 %v4242
    %4708 = vmatpush1.msra.mxu0 %v4241
    %4709 = vmatprep.subr.mxu0 %v4239
    %4710 = vmatpush1.msra.mxu0 %v4238
    %4711 = vmatprep.subr.mxu0 %v4236
    %4712 = vmatpush1.msra.mxu0 %v4235
    %4713 = vmatprep.subr.mxu0 %v4233
    %4714 = vmatpush1.msra.mxu0 %v4232
    %4715 = vmatprep.subr.mxu0 %v4230
    %4716 = vmatpush1.msra.mxu0 %v4229
    %4717 = vmatprep.subr.mxu0 %v4227
    %4718 = vmatpush1.msra.mxu0 %v4226
    %4719 = vmatprep.subr.mxu0 %v4224
    %4720 = vmatpush1.msra.mxu0 %v4223
    %4721 = vmatprep.subr.mxu0 %v4221
    %4722 = vmatpush1.msra.mxu0 %v4220
    %4723 = vmatprep.subr.mxu0 %v4218
    %4724 = vmatpush1.msra.mxu0 %v4217
    %4725 = vmatprep.subr.mxu0 %v4215
    %4726 = vmatpush1.msra.mxu0 %v4214
    %4727 = vmatprep.subr.mxu0 %v4212
    %4728 = vmatpush1.msra.mxu0 %v4211
    %4729 = vmatprep.subr.mxu0 %v4209
    %4730 = vmatpush1.msra.mxu0 %v4208
    %4731 = vmatprep.subr.mxu0 0.0
    %4732 = vmatpush2.msra.mxu0 0.0
    %4733 = vmatprep.subr.mxu0 0.0
    %4734 = vmatpush2.msra.mxu0 0.0
    %4735 = vmatprep.subr.mxu0 0.0
    %4736 = vmatpush2.msra.mxu0 0.0
    %4737 = vmatprep.subr.mxu0 0.0
    %4738 = vmatpush2.msra.mxu0 0.0
    %4739 = vmatprep.subr.mxu0 0.0
    %4740 = vmatpush2.msra.mxu0 0.0
    %4741 = vmatprep.subr.mxu0 0.0
    %4742 = vmatpush2.msra.mxu0 0.0
    %4743 = vmatprep.subr.mxu0 0.0
    %4744 = vmatpush2.msra.mxu0 0.0
    %4745 = vmatprep.subr.mxu0 0.0
    %4746 = vmatpush2.msra.mxu0 0.0
    %4747 = vmatprep.subr.mxu0 0.0
    %4748 = vmatpush2.msra.mxu0 0.0
    %4749 = vmatprep.subr.mxu0 0.0
    %4750 = vmatpush2.msra.mxu0 0.0
    %4751 = vmatprep.subr.mxu0 0.0
    %4752 = vmatpush2.msra.mxu0 0.0
    %4753 = vmatprep.subr.mxu0 0.0
    %4754 = vmatpush2.msra.mxu0 0.0
    %4755 = vmatprep.subr.mxu0 0.0
    %4756 = vmatpush2.msra.mxu0 0.0
    %4757 = vmatprep.subr.mxu0 0.0
    %4758 = vmatpush2.msra.mxu0 0.0
    %4759 = vmatprep.subr.mxu0 0.0
    %4760 = vmatpush2.msra.mxu0 0.0
    %4761 = vmatprep.subr.mxu0 0.0
    %4762 = vmatpush2.msra.mxu0 0.0
    %4763 = vmatprep.mubr.f32.mxu0 0.0
    %4764 = vmatmul.mubr.f32.gmra.mxu0 %v3629
    %v4765 = vpop.f32.mrf.mxu0
    %v4766 = vadd.f32 %v4695, %v4765
    %v4767 = vpop.f32.mrf.mxu0
    %v4768 = vadd.f32 %v4697, %v4767
    %4769 = vdwg.mxu0
    %4770 = vmatprep.subr.mxu0 0.0
    %4771 = vmatpush1.msra.mxu0 %v3679
    %4772 = vmatprep.subr.mxu0 0.0
    %4773 = vmatpush1.msra.mxu0 %v3676
    %4774 = vmatprep.subr.mxu0 0.0
    %4775 = vmatpush1.msra.mxu0 %v3673
    %4776 = vmatprep.subr.mxu0 0.0
    %4777 = vmatpush1.msra.mxu0 %v3670
    %4778 = vmatprep.subr.mxu0 0.0
    %4779 = vmatpush1.msra.mxu0 %v3667
    %4780 = vmatprep.subr.mxu0 0.0
    %4781 = vmatpush1.msra.mxu0 %v3664
    %4782 = vmatprep.subr.mxu0 0.0
    %4783 = vmatpush1.msra.mxu0 %v3661
    %4784 = vmatprep.subr.mxu0 0.0
    %4785 = vmatpush1.msra.mxu0 %v3658
    %4786 = vmatprep.subr.mxu0 0.0
    %4787 = vmatpush1.msra.mxu0 %v3655
    %4788 = vmatprep.subr.mxu0 0.0
    %4789 = vmatpush1.msra.mxu0 %v3652
    %4790 = vmatprep.subr.mxu0 0.0
    %4791 = vmatpush1.msra.mxu0 %v3649
    %4792 = vmatprep.subr.mxu0 0.0
    %4793 = vmatpush1.msra.mxu0 %v3646
    %4794 = vmatprep.subr.mxu0 0.0
    %4795 = vmatpush1.msra.mxu0 %v3643
    %4796 = vmatprep.subr.mxu0 0.0
    %4797 = vmatpush1.msra.mxu0 %v3640
    %4798 = vmatprep.subr.mxu0 0.0
    %4799 = vmatpush1.msra.mxu0 %v3637
    %4800 = vmatprep.subr.mxu0 0.0
    %4801 = vmatpush1.msra.mxu0 %v3634
    %4802 = vmatprep.subr.mxu0 0.0
    %4803 = vmatpush2.msra.mxu0 %v3727
    %4804 = vmatprep.subr.mxu0 0.0
    %4805 = vmatpush2.msra.mxu0 %v3724
    %4806 = vmatprep.subr.mxu0 0.0
    %4807 = vmatpush2.msra.mxu0 %v3721
    %4808 = vmatprep.subr.mxu0 0.0
    %4809 = vmatpush2.msra.mxu0 %v3718
    %4810 = vmatprep.subr.mxu0 0.0
    %4811 = vmatpush2.msra.mxu0 %v3715
    %4812 = vmatprep.subr.mxu0 0.0
    %4813 = vmatpush2.msra.mxu0 %v3712
    %4814 = vmatprep.subr.mxu0 0.0
    %4815 = vmatpush2.msra.mxu0 %v3709
    %4816 = vmatprep.subr.mxu0 0.0
    %4817 = vmatpush2.msra.mxu0 %v3706
    %4818 = vmatprep.subr.mxu0 0.0
    %4819 = vmatpush2.msra.mxu0 %v3703
    %4820 = vmatprep.subr.mxu0 0.0
    %4821 = vmatpush2.msra.mxu0 %v3700
    %4822 = vmatprep.subr.mxu0 0.0
    %4823 = vmatpush2.msra.mxu0 %v3697
    %4824 = vmatprep.subr.mxu0 0.0
    %4825 = vmatpush2.msra.mxu0 %v3694
    %4826 = vmatprep.subr.mxu0 0.0
    %4827 = vmatpush2.msra.mxu0 %v3691
    %4828 = vmatprep.subr.mxu0 0.0
    %4829 = vmatpush2.msra.mxu0 %v3688
    %4830 = vmatprep.subr.mxu0 0.0
    %4831 = vmatpush2.msra.mxu0 %v3685
    %4832 = vmatprep.subr.mxu0 0.0
    %4833 = vmatpush2.msra.mxu0 %v3682
    %4834 = vmatprep.mubr.f32.mxu0 %v3205
    %4835 = vmatmul.mubr.f32.gmra.mxu0 %v3203
    %v4836 = vpop.f32.mrf.mxu0
    %v4837 = vadd.f32 %v4269, %v4836
    %v4838 = vpop.f32.mrf.mxu0
    %4839 = vdwg.mxu0
    %4840 = vmatprep.subr.mxu0 0.0
    %4841 = vmatpush1.msra.mxu0 %v3775
    %4842 = vmatprep.subr.mxu0 0.0
    %4843 = vmatpush1.msra.mxu0 %v3772
    %4844 = vmatprep.subr.mxu0 0.0
    %4845 = vmatpush1.msra.mxu0 %v3769
    %4846 = vmatprep.subr.mxu0 0.0
    %4847 = vmatpush1.msra.mxu0 %v3766
    %4848 = vmatprep.subr.mxu0 0.0
    %4849 = vmatpush1.msra.mxu0 %v3763
    %4850 = vmatprep.subr.mxu0 0.0
    %4851 = vmatpush1.msra.mxu0 %v3760
    %4852 = vmatprep.subr.mxu0 0.0
    %4853 = vmatpush1.msra.mxu0 %v3757
    %4854 = vmatprep.subr.mxu0 0.0
    %4855 = vmatpush1.msra.mxu0 %v3754
    %4856 = vmatprep.subr.mxu0 0.0
    %4857 = vmatpush1.msra.mxu0 %v3751
    %4858 = vmatprep.subr.mxu0 0.0
    %4859 = vmatpush1.msra.mxu0 %v3748
    %4860 = vmatprep.subr.mxu0 0.0
    %4861 = vmatpush1.msra.mxu0 %v3745
    %4862 = vmatprep.subr.mxu0 0.0
    %4863 = vmatpush1.msra.mxu0 %v3742
    %4864 = vmatprep.subr.mxu0 0.0
    %4865 = vmatpush1.msra.mxu0 %v3739
    %4866 = vmatprep.subr.mxu0 0.0
    %4867 = vmatpush1.msra.mxu0 %v3736
    %4868 = vmatprep.subr.mxu0 0.0
    %4869 = vmatpush1.msra.mxu0 %v3733
    %4870 = vmatprep.subr.mxu0 0.0
    %4871 = vmatpush1.msra.mxu0 %v3730
    %4872 = vmatprep.subr.mxu0 0.0
    %4873 = vmatpush2.msra.mxu0 %v3823
    %4874 = vmatprep.subr.mxu0 0.0
    %4875 = vmatpush2.msra.mxu0 %v3820
    %4876 = vmatprep.subr.mxu0 0.0
    %4877 = vmatpush2.msra.mxu0 %v3817
    %4878 = vmatprep.subr.mxu0 0.0
    %4879 = vmatpush2.msra.mxu0 %v3814
    %4880 = vmatprep.subr.mxu0 0.0
    %4881 = vmatpush2.msra.mxu0 %v3811
    %4882 = vmatprep.subr.mxu0 0.0
    %4883 = vmatpush2.msra.mxu0 %v3808
    %4884 = vmatprep.subr.mxu0 0.0
    %4885 = vmatpush2.msra.mxu0 %v3805
    %4886 = vmatprep.subr.mxu0 0.0
    %4887 = vmatpush2.msra.mxu0 %v3802
    %4888 = vmatprep.subr.mxu0 0.0
    %4889 = vmatpush2.msra.mxu0 %v3799
    %4890 = vmatprep.subr.mxu0 0.0
    %4891 = vmatpush2.msra.mxu0 %v3796
    %4892 = vmatprep.subr.mxu0 0.0
    %4893 = vmatpush2.msra.mxu0 %v3793
    %4894 = vmatprep.subr.mxu0 0.0
    %4895 = vmatpush2.msra.mxu0 %v3790
    %4896 = vmatprep.subr.mxu0 0.0
    %4897 = vmatpush2.msra.mxu0 %v3787
    %4898 = vmatprep.subr.mxu0 0.0
    %4899 = vmatpush2.msra.mxu0 %v3784
    %4900 = vmatprep.subr.mxu0 0.0
    %4901 = vmatpush2.msra.mxu0 %v3781
    %4902 = vmatprep.subr.mxu0 0.0
    %4903 = vmatpush2.msra.mxu0 %v3778
    %4904 = vmatprep.mubr.f32.mxu0 %v3276
    %4905 = vmatmul.mubr.f32.gmra.mxu0 %v3274
    %v4906 = vpop.f32.mrf.mxu0
    %v4907 = vadd.f32 %v4837, %v4906
    %v4908 = vpop.f32.mrf.mxu0
    %4909 = vdwg.mxu0
    %4910 = vmatprep.subr.mxu0 0.0
    %4911 = vmatpush1.msra.mxu0 %v3871
    %4912 = vmatprep.subr.mxu0 0.0
    %4913 = vmatpush1.msra.mxu0 %v3868
    %4914 = vmatprep.subr.mxu0 0.0
    %4915 = vmatpush1.msra.mxu0 %v3865
    %4916 = vmatprep.subr.mxu0 0.0
    %4917 = vmatpush1.msra.mxu0 %v3862
    %4918 = vmatprep.subr.mxu0 0.0
    %4919 = vmatpush1.msra.mxu0 %v3859
    %4920 = vmatprep.subr.mxu0 0.0
    %4921 = vmatpush1.msra.mxu0 %v3856
    %4922 = vmatprep.subr.mxu0 0.0
    %4923 = vmatpush1.msra.mxu0 %v3853
    %4924 = vmatprep.subr.mxu0 0.0
    %4925 = vmatpush1.msra.mxu0 %v3850
    %4926 = vmatprep.subr.mxu0 0.0
    %4927 = vmatpush1.msra.mxu0 %v3847
    %4928 = vmatprep.subr.mxu0 0.0
    %4929 = vmatpush1.msra.mxu0 %v3844
    %4930 = vmatprep.subr.mxu0 0.0
    %4931 = vmatpush1.msra.mxu0 %v3841
    %4932 = vmatprep.subr.mxu0 0.0
    %4933 = vmatpush1.msra.mxu0 %v3838
    %4934 = vmatprep.subr.mxu0 0.0
    %4935 = vmatpush1.msra.mxu0 %v3835
    %4936 = vmatprep.subr.mxu0 0.0
    %4937 = vmatpush1.msra.mxu0 %v3832
    %4938 = vmatprep.subr.mxu0 0.0
    %4939 = vmatpush1.msra.mxu0 %v3829
    %4940 = vmatprep.subr.mxu0 0.0
    %4941 = vmatpush1.msra.mxu0 %v3826
    %4942 = vmatprep.subr.mxu0 0.0
    %4943 = vmatpush2.msra.mxu0 %v3919
    %4944 = vmatprep.subr.mxu0 0.0
    %4945 = vmatpush2.msra.mxu0 %v3916
    %4946 = vmatprep.subr.mxu0 0.0
    %4947 = vmatpush2.msra.mxu0 %v3913
    %4948 = vmatprep.subr.mxu0 0.0
    %4949 = vmatpush2.msra.mxu0 %v3910
    %4950 = vmatprep.subr.mxu0 0.0
    %4951 = vmatpush2.msra.mxu0 %v3907
    %4952 = vmatprep.subr.mxu0 0.0
    %4953 = vmatpush2.msra.mxu0 %v3904
    %4954 = vmatprep.subr.mxu0 0.0
    %4955 = vmatpush2.msra.mxu0 %v3901
    %4956 = vmatprep.subr.mxu0 0.0
    %4957 = vmatpush2.msra.mxu0 %v3898
    %4958 = vmatprep.subr.mxu0 0.0
    %4959 = vmatpush2.msra.mxu0 %v3895
    %4960 = vmatprep.subr.mxu0 0.0
    %4961 = vmatpush2.msra.mxu0 %v3892
    %4962 = vmatprep.subr.mxu0 0.0
    %4963 = vmatpush2.msra.mxu0 %v3889
    %4964 = vmatprep.subr.mxu0 0.0
    %4965 = vmatpush2.msra.mxu0 %v3886
    %4966 = vmatprep.subr.mxu0 0.0
    %4967 = vmatpush2.msra.mxu0 %v3883
    %4968 = vmatprep.subr.mxu0 0.0
    %4969 = vmatpush2.msra.mxu0 %v3880
    %4970 = vmatprep.subr.mxu0 0.0
    %4971 = vmatpush2.msra.mxu0 %v3877
    %4972 = vmatprep.subr.mxu0 0.0
    %4973 = vmatpush2.msra.mxu0 %v3874
    %4974 = vmatprep.mubr.f32.mxu0 %v3347
    %4975 = vmatmul.mubr.f32.gmra.mxu0 %v3345
    %v4976 = vpop.f32.mrf.mxu0
    %v4977 = vadd.f32 %v4907, %v4976
    %v4978 = vpop.f32.mrf.mxu0
    %4979 = vdwg.mxu0
    %4980 = vmatprep.subr.mxu0 0.0
    %4981 = vmatpush1.msra.mxu0 %v3967
    %4982 = vmatprep.subr.mxu0 0.0
    %4983 = vmatpush1.msra.mxu0 %v3964
    %4984 = vmatprep.subr.mxu0 0.0
    %4985 = vmatpush1.msra.mxu0 %v3961
    %4986 = vmatprep.subr.mxu0 0.0
    %4987 = vmatpush1.msra.mxu0 %v3958
    %4988 = vmatprep.subr.mxu0 0.0
    %4989 = vmatpush1.msra.mxu0 %v3955
    %4990 = vmatprep.subr.mxu0 0.0
    %4991 = vmatpush1.msra.mxu0 %v3952
    %4992 = vmatprep.subr.mxu0 0.0
    %4993 = vmatpush1.msra.mxu0 %v3949
    %4994 = vmatprep.subr.mxu0 0.0
    %4995 = vmatpush1.msra.mxu0 %v3946
    %4996 = vmatprep.subr.mxu0 0.0
    %4997 = vmatpush1.msra.mxu0 %v3943
    %4998 = vmatprep.subr.mxu0 0.0
    %4999 = vmatpush1.msra.mxu0 %v3940
    %5000 = vmatprep.subr.mxu0 0.0
    %5001 = vmatpush1.msra.mxu0 %v3937
    %5002 = vmatprep.subr.mxu0 0.0
    %5003 = vmatpush1.msra.mxu0 %v3934
    %5004 = vmatprep.subr.mxu0 0.0
    %5005 = vmatpush1.msra.mxu0 %v3931
    %5006 = vmatprep.subr.mxu0 0.0
    %5007 = vmatpush1.msra.mxu0 %v3928
    %5008 = vmatprep.subr.mxu0 0.0
    %5009 = vmatpush1.msra.mxu0 %v3925
    %5010 = vmatprep.subr.mxu0 0.0
    %5011 = vmatpush1.msra.mxu0 %v3922
    %5012 = vmatprep.subr.mxu0 0.0
    %5013 = vmatpush2.msra.mxu0 %v4015
    %5014 = vmatprep.subr.mxu0 0.0
    %5015 = vmatpush2.msra.mxu0 %v4012
    %5016 = vmatprep.subr.mxu0 0.0
    %5017 = vmatpush2.msra.mxu0 %v4009
    %5018 = vmatprep.subr.mxu0 0.0
    %5019 = vmatpush2.msra.mxu0 %v4006
    %5020 = vmatprep.subr.mxu0 0.0
    %5021 = vmatpush2.msra.mxu0 %v4003
    %5022 = vmatprep.subr.mxu0 0.0
    %5023 = vmatpush2.msra.mxu0 %v4000
    %5024 = vmatprep.subr.mxu0 0.0
    %5025 = vmatpush2.msra.mxu0 %v3997
    %5026 = vmatprep.subr.mxu0 0.0
    %5027 = vmatpush2.msra.mxu0 %v3994
    %5028 = vmatprep.subr.mxu0 0.0
    %5029 = vmatpush2.msra.mxu0 %v3991
    %5030 = vmatprep.subr.mxu0 0.0
    %5031 = vmatpush2.msra.mxu0 %v3988
    %5032 = vmatprep.subr.mxu0 0.0
    %5033 = vmatpush2.msra.mxu0 %v3985
    %5034 = vmatprep.subr.mxu0 0.0
    %5035 = vmatpush2.msra.mxu0 %v3982
    %5036 = vmatprep.subr.mxu0 0.0
    %5037 = vmatpush2.msra.mxu0 %v3979
    %5038 = vmatprep.subr.mxu0 0.0
    %5039 = vmatpush2.msra.mxu0 %v3976
    %5040 = vmatprep.subr.mxu0 0.0
    %5041 = vmatpush2.msra.mxu0 %v3973
    %5042 = vmatprep.subr.mxu0 0.0
    %5043 = vmatpush2.msra.mxu0 %v3970
    %5044 = vmatprep.mubr.f32.mxu0 %v3418
    %5045 = vmatmul.mubr.f32.gmra.mxu0 %v3416
    %v5046 = vpop.f32.mrf.mxu0
    %v5047 = vadd.f32 %v4977, %v5046
    %v5048 = vpop.f32.mrf.mxu0
    %5049 = vdwg.mxu0
    %5050 = vmatprep.subr.mxu0 0.0
    %5051 = vmatpush1.msra.mxu0 %v4063
    %5052 = vmatprep.subr.mxu0 0.0
    %5053 = vmatpush1.msra.mxu0 %v4060
    %5054 = vmatprep.subr.mxu0 0.0
    %5055 = vmatpush1.msra.mxu0 %v4057
    %5056 = vmatprep.subr.mxu0 0.0
    %5057 = vmatpush1.msra.mxu0 %v4054
    %5058 = vmatprep.subr.mxu0 0.0
    %5059 = vmatpush1.msra.mxu0 %v4051
    %5060 = vmatprep.subr.mxu0 0.0
    %5061 = vmatpush1.msra.mxu0 %v4048
    %5062 = vmatprep.subr.mxu0 0.0
    %5063 = vmatpush1.msra.mxu0 %v4045
    %5064 = vmatprep.subr.mxu0 0.0
    %5065 = vmatpush1.msra.mxu0 %v4042
    %5066 = vmatprep.subr.mxu0 0.0
    %5067 = vmatpush1.msra.mxu0 %v4039
    %5068 = vmatprep.subr.mxu0 0.0
    %5069 = vmatpush1.msra.mxu0 %v4036
    %5070 = vmatprep.subr.mxu0 0.0
    %5071 = vmatpush1.msra.mxu0 %v4033
    %5072 = vmatprep.subr.mxu0 0.0
    %5073 = vmatpush1.msra.mxu0 %v4030
    %5074 = vmatprep.subr.mxu0 0.0
    %5075 = vmatpush1.msra.mxu0 %v4027
    %5076 = vmatprep.subr.mxu0 0.0
    %5077 = vmatpush1.msra.mxu0 %v4024
    %5078 = vmatprep.subr.mxu0 0.0
    %5079 = vmatpush1.msra.mxu0 %v4021
    %5080 = vmatprep.subr.mxu0 0.0
    %5081 = vmatpush1.msra.mxu0 %v4018
    %5082 = vmatprep.subr.mxu0 0.0
    %5083 = vmatpush2.msra.mxu0 %v4111
    %5084 = vmatprep.subr.mxu0 0.0
    %5085 = vmatpush2.msra.mxu0 %v4108
    %5086 = vmatprep.subr.mxu0 0.0
    %5087 = vmatpush2.msra.mxu0 %v4105
    %5088 = vmatprep.subr.mxu0 0.0
    %5089 = vmatpush2.msra.mxu0 %v4102
    %5090 = vmatprep.subr.mxu0 0.0
    %5091 = vmatpush2.msra.mxu0 %v4099
    %5092 = vmatprep.subr.mxu0 0.0
    %5093 = vmatpush2.msra.mxu0 %v4096
    %5094 = vmatprep.subr.mxu0 0.0
    %5095 = vmatpush2.msra.mxu0 %v4093
    %5096 = vmatprep.subr.mxu0 0.0
    %5097 = vmatpush2.msra.mxu0 %v4090
    %5098 = vmatprep.subr.mxu0 0.0
    %5099 = vmatpush2.msra.mxu0 %v4087
    %5100 = vmatprep.subr.mxu0 0.0
    %5101 = vmatpush2.msra.mxu0 %v4084
    %5102 = vmatprep.subr.mxu0 0.0
    %5103 = vmatpush2.msra.mxu0 %v4081
    %5104 = vmatprep.subr.mxu0 0.0
    %5105 = vmatpush2.msra.mxu0 %v4078
    %5106 = vmatprep.subr.mxu0 0.0
    %5107 = vmatpush2.msra.mxu0 %v4075
    %5108 = vmatprep.subr.mxu0 0.0
    %5109 = vmatpush2.msra.mxu0 %v4072
    %5110 = vmatprep.subr.mxu0 0.0
    %5111 = vmatpush2.msra.mxu0 %v4069
    %5112 = vmatprep.subr.mxu0 0.0
    %5113 = vmatpush2.msra.mxu0 %v4066
    %5114 = vmatprep.mubr.f32.mxu0 %v3489
    %5115 = vmatmul.mubr.f32.gmra.mxu0 %v3487
    %v5116 = vpop.f32.mrf.mxu0
    %v5117 = vadd.f32 %v5047, %v5116
    %v5118 = vpop.f32.mrf.mxu0
    %5119 = vdwg.mxu0
    %5120 = vmatprep.subr.mxu0 0.0
    %5121 = vmatpush1.msra.mxu0 %v4159
    %5122 = vmatprep.subr.mxu0 0.0
    %5123 = vmatpush1.msra.mxu0 %v4156
    %5124 = vmatprep.subr.mxu0 0.0
    %5125 = vmatpush1.msra.mxu0 %v4153
    %5126 = vmatprep.subr.mxu0 0.0
    %5127 = vmatpush1.msra.mxu0 %v4150
    %5128 = vmatprep.subr.mxu0 0.0
    %5129 = vmatpush1.msra.mxu0 %v4147
    %5130 = vmatprep.subr.mxu0 0.0
    %5131 = vmatpush1.msra.mxu0 %v4144
    %5132 = vmatprep.subr.mxu0 0.0
    %5133 = vmatpush1.msra.mxu0 %v4141
    %5134 = vmatprep.subr.mxu0 0.0
    %5135 = vmatpush1.msra.mxu0 %v4138
    %5136 = vmatprep.subr.mxu0 0.0
    %5137 = vmatpush1.msra.mxu0 %v4135
    %5138 = vmatprep.subr.mxu0 0.0
    %5139 = vmatpush1.msra.mxu0 %v4132
    %5140 = vmatprep.subr.mxu0 0.0
    %5141 = vmatpush1.msra.mxu0 %v4129
    %5142 = vmatprep.subr.mxu0 0.0
    %5143 = vmatpush1.msra.mxu0 %v4126
    %5144 = vmatprep.subr.mxu0 0.0
    %5145 = vmatpush1.msra.mxu0 %v4123
    %5146 = vmatprep.subr.mxu0 0.0
    %5147 = vmatpush1.msra.mxu0 %v4120
    %5148 = vmatprep.subr.mxu0 0.0
    %5149 = vmatpush1.msra.mxu0 %v4117
    %5150 = vmatprep.subr.mxu0 0.0
    %5151 = vmatpush1.msra.mxu0 %v4114
    %5152 = vmatprep.subr.mxu0 0.0
    %5153 = vmatpush2.msra.mxu0 %v4207
    %5154 = vmatprep.subr.mxu0 0.0
    %5155 = vmatpush2.msra.mxu0 %v4204
    %5156 = vmatprep.subr.mxu0 0.0
    %5157 = vmatpush2.msra.mxu0 %v4201
    %5158 = vmatprep.subr.mxu0 0.0
    %5159 = vmatpush2.msra.mxu0 %v4198
    %5160 = vmatprep.subr.mxu0 0.0
    %5161 = vmatpush2.msra.mxu0 %v4195
    %5162 = vmatprep.subr.mxu0 0.0
    %5163 = vmatpush2.msra.mxu0 %v4192
    %5164 = vmatprep.subr.mxu0 0.0
    %5165 = vmatpush2.msra.mxu0 %v4189
    %5166 = vmatprep.subr.mxu0 0.0
    %5167 = vmatpush2.msra.mxu0 %v4186
    %5168 = vmatprep.subr.mxu0 0.0
    %5169 = vmatpush2.msra.mxu0 %v4183
    %5170 = vmatprep.subr.mxu0 0.0
    %5171 = vmatpush2.msra.mxu0 %v4180
    %5172 = vmatprep.subr.mxu0 0.0
    %5173 = vmatpush2.msra.mxu0 %v4177
    %5174 = vmatprep.subr.mxu0 0.0
    %5175 = vmatpush2.msra.mxu0 %v4174
    %5176 = vmatprep.subr.mxu0 0.0
    %5177 = vmatpush2.msra.mxu0 %v4171
    %5178 = vmatprep.subr.mxu0 0.0
    %5179 = vmatpush2.msra.mxu0 %v4168
    %5180 = vmatprep.subr.mxu0 0.0
    %5181 = vmatpush2.msra.mxu0 %v4165
    %5182 = vmatprep.subr.mxu0 0.0
    %5183 = vmatpush2.msra.mxu0 %v4162
    %5184 = vmatprep.mubr.f32.mxu0 %v3560
    %5185 = vmatmul.mubr.f32.gmra.mxu0 %v3558
    %v5186 = vpop.f32.mrf.mxu0
    %v5187 = vadd.f32 %v5117, %v5186
    %v5188 = vpop.f32.mrf.mxu0
    %5189 = vdwg.mxu0
    %5190 = vmatprep.subr.mxu0 0.0
    %5191 = vmatpush1.msra.mxu0 %v4255
    %5192 = vmatprep.subr.mxu0 0.0
    %5193 = vmatpush1.msra.mxu0 %v4252
    %5194 = vmatprep.subr.mxu0 0.0
    %5195 = vmatpush1.msra.mxu0 %v4249
    %5196 = vmatprep.subr.mxu0 0.0
    %5197 = vmatpush1.msra.mxu0 %v4246
    %5198 = vmatprep.subr.mxu0 0.0
    %5199 = vmatpush1.msra.mxu0 %v4243
    %5200 = vmatprep.subr.mxu0 0.0
    %5201 = vmatpush1.msra.mxu0 %v4240
    %5202 = vmatprep.subr.mxu0 0.0
    %5203 = vmatpush1.msra.mxu0 %v4237
    %5204 = vmatprep.subr.mxu0 0.0
    %5205 = vmatpush1.msra.mxu0 %v4234
    %5206 = vmatprep.subr.mxu0 0.0
    %5207 = vmatpush1.msra.mxu0 %v4231
    %5208 = vmatprep.subr.mxu0 0.0
    %5209 = vmatpush1.msra.mxu0 %v4228
    %5210 = vmatprep.subr.mxu0 0.0
    %5211 = vmatpush1.msra.mxu0 %v4225
    %5212 = vmatprep.subr.mxu0 0.0
    %5213 = vmatpush1.msra.mxu0 %v4222
    %5214 = vmatprep.subr.mxu0 0.0
    %5215 = vmatpush1.msra.mxu0 %v4219
    %5216 = vmatprep.subr.mxu0 0.0
    %5217 = vmatpush1.msra.mxu0 %v4216
    %5218 = vmatprep.subr.mxu0 0.0
    %5219 = vmatpush1.msra.mxu0 %v4213
    %5220 = vmatprep.subr.mxu0 0.0
    %5221 = vmatpush1.msra.mxu0 %v4210
    %5222 = vmatprep.subr.mxu0 0.0
    %5223 = vmatpush2.msra.mxu0 0.0
    %5224 = vmatprep.subr.mxu0 0.0
    %5225 = vmatpush2.msra.mxu0 0.0
    %5226 = vmatprep.subr.mxu0 0.0
    %5227 = vmatpush2.msra.mxu0 0.0
    %5228 = vmatprep.subr.mxu0 0.0
    %5229 = vmatpush2.msra.mxu0 0.0
    %5230 = vmatprep.subr.mxu0 0.0
    %5231 = vmatpush2.msra.mxu0 0.0
    %5232 = vmatprep.subr.mxu0 0.0
    %5233 = vmatpush2.msra.mxu0 0.0
    %5234 = vmatprep.subr.mxu0 0.0
    %5235 = vmatpush2.msra.mxu0 0.0
    %5236 = vmatprep.subr.mxu0 0.0
    %5237 = vmatpush2.msra.mxu0 0.0
    %5238 = vmatprep.subr.mxu0 0.0
    %5239 = vmatpush2.msra.mxu0 0.0
    %5240 = vmatprep.subr.mxu0 0.0
    %5241 = vmatpush2.msra.mxu0 0.0
    %5242 = vmatprep.subr.mxu0 0.0
    %5243 = vmatpush2.msra.mxu0 0.0
    %5244 = vmatprep.subr.mxu0 0.0
    %5245 = vmatpush2.msra.mxu0 0.0
    %5246 = vmatprep.subr.mxu0 0.0
    %5247 = vmatpush2.msra.mxu0 0.0
    %5248 = vmatprep.subr.mxu0 0.0
    %5249 = vmatpush2.msra.mxu0 0.0
    %5250 = vmatprep.subr.mxu0 0.0
    %5251 = vmatpush2.msra.mxu0 0.0
    %5252 = vmatprep.subr.mxu0 0.0
    %5253 = vmatpush2.msra.mxu0 0.0
    %5254 = vmatprep.mubr.f32.mxu0 0.0
    %5255 = vmatmul.mubr.f32.gmra.mxu0 %v3629
    %v5256 = vpop.f32.mrf.mxu0
    %v5257 = vadd.f32 %v5187, %v5256
    %v5258 = vpop.f32.mrf.mxu0
    %5259 = vdwg.mxu0
    %5260 = vst [vmem:[%s12] sm:$0xff] %v4766
    %5261 = vst [vmem:[%s12 + $0x8] sm:$0xff] %v4768
    %5262 = vst [vmem:[%s12 + $0x10] sm:$0xff] %v5257
    // Predicated region
    $region74: #{_forward_impl.1} parent=1 // pred_check
      _
    $region75: #{_forward_impl.1} parent=1 // pred_check_branch
      %5264 = sbr.rel (0) target = $region77
    $region76: #{_forward_impl.1} parent=1 // pred_region
      _
    $region77: #{_forward_impl.1} parent=1 // pred_fallthru
      _
    // Predicated region
    $region78: #{_forward_impl.1} parent=1 // pred_check
      _
    $region79: #{_forward_impl.1} parent=1 // pred_check_branch
      %5266 = sbr.rel (0) target = $region81
    $region80: #{_forward_impl.1} parent=1 // pred_region
      _
    $region81: #{_forward_impl.1} parent=1 // pred_fallthru
      _
    %5267 = vsyncpa [#allocation4], 1
    %5268 = vsyncpa [#allocation6], 1
    %5269 = vsyncpa [#allocation9], 1
    %5270 = vsyncpa [#allocation12], 1

</llo_original>
